<compile_context>
chip_gen: v6e
topology: v6e:2x2x1
jax: 0.10.0
libtpu: 0.0.40
codegen_flags: <defaults>
</compile_context>

<pallas_src>
import functools

import jax
import jax.numpy as jnp
from jax.experimental import pallas as pl
from jax.experimental.pallas import tpu as pltpu


# ----------------------------------------------------------------------------
# Kernel 1: gridded fused router
#   switch Linear (bf16 MXU, f32 acc) + softmax (f32) + argmax (first-max
#   tie-break) + masked per-expert counts + route_prob.sum(0), accumulated
#   across row tiles in resident output blocks.
# ----------------------------------------------------------------------------
def _router_kernel(x_ref, w_ref, b_ref, rpm_ref, routes_ref, counts_ref,
                   psum_ref, *, n_valid):
    t = pl.program_id(0)

    @pl.when(t == 0)
    def _():
        counts_ref[...] = jnp.zeros_like(counts_ref)
        psum_ref[...] = jnp.zeros_like(psum_ref)

    x = x_ref[...]                                               # [rt, D] bf16
    logits = jnp.dot(x, w_ref[...],
                     preferred_element_type=jnp.float32) + b_ref[...]
    m = jnp.max(logits, axis=-1, keepdims=True)
    e = jnp.exp(logits - m)
    # Exact divide: route_prob values are returned and decide discrete routing.
    prob = e / jnp.sum(e, axis=-1, keepdims=True)                # [rt, E] f32
    rpm = jnp.max(prob, axis=-1, keepdims=True)                  # [rt, 1]
    n_experts = prob.shape[-1]
    lane = jax.lax.broadcasted_iota(jnp.int32, prob.shape, 1)
    # first-max tie-break == torch.max index semantics
    routes = jnp.min(jnp.where(prob >= rpm, lane, n_experts),
                     axis=-1, keepdims=True)                     # [rt, 1] i32

    rt = x.shape[0]
    row = t * rt + jax.lax.broadcasted_iota(jnp.int32, (rt, 1), 0)
    valid = (row < n_valid).astype(jnp.float32)                  # mask pad rows

    rpm_ref[...] = rpm
    routes_ref[...] = routes
    # counts in f32 (exact up to 2^24 tokens per call)
    counts_ref[...] += jnp.sum((lane == routes).astype(jnp.float32) * valid,
                               axis=0, keepdims=True)
    psum_ref[...] += jnp.sum(prob * valid, axis=0, keepdims=True)


def _router(x_pad, sw_w_bf16, sw_b, *, n_valid, block_rows):
    n_pad, d = x_pad.shape
    e = sw_w_bf16.shape[1]
    num_tiles = n_pad // block_rows
    kern = functools.partial(_router_kernel, n_valid=n_valid)
    return pl.pallas_call(
        kern,
        out_shape=(
            jax.ShapeDtypeStruct((n_pad, 1), jnp.float32),   # route_prob_max
            jax.ShapeDtypeStruct((n_pad, 1), jnp.int32),     # routes (argmax)
            jax.ShapeDtypeStruct((1, e), jnp.float32),       # per-expert counts
            jax.ShapeDtypeStruct((1, e), jnp.float32),       # route_prob.sum(0)
        ),
        grid=(num_tiles,),
        in_specs=[
            pl.BlockSpec((block_rows, d), lambda t: (t, 0)),     # x tile (bf16)
            pl.BlockSpec((d, e), lambda t: (0, 0)),              # switch W
            pl.BlockSpec((1, e), lambda t: (0, 0)),              # switch b
        ],
        out_specs=(
            pl.BlockSpec((block_rows, 1), lambda t: (t, 0)),
            pl.BlockSpec((block_rows, 1), lambda t: (t, 0)),
            pl.BlockSpec((1, e), lambda t: (0, 0)),              # accumulator
            pl.BlockSpec((1, e), lambda t: (0, 0)),              # accumulator
        ),
        compiler_params=pltpu.CompilerParams(
            dimension_semantics=("arbitrary",)),   # counts/psum reduce over tiles
    )(x_pad, sw_w_bf16, sw_b)


# ----------------------------------------------------------------------------
# Kernel 2: routed grouped expert FFN
#   grid = (token tiles, d_ff chunks); per-tile expert id via scalar prefetch
#   selects one expert's weight blocks; f32 accumulation in the resident
#   output block; bias + route_prob_max scale applied on the last d_ff chunk.
# ----------------------------------------------------------------------------
def _expert_ffn_kernel(gid_ref, x_ref, s_ref, w1_ref, b1_ref, w2_ref, b2_ref,
                       o_ref):
    del gid_ref                                  # only used by the index_maps
    k = pl.program_id(1)

    @pl.when(k == 0)
    def _():
        o_ref[...] = jnp.zeros_like(o_ref)

    # x (bf16) @ W1[:, k-chunk] (bf16) with f32 accumulation, +b1 chunk, ReLU.
    h = jnp.dot(x_ref[...], w1_ref[0],
                preferred_element_type=jnp.float32) + b1_ref[0]
    h = jnp.maximum(h, 0.0)                      # ReLU, f32 on the VPU
    o_ref[...] += jnp.dot(h.astype(jnp.bfloat16), w2_ref[0],
                          preferred_element_type=jnp.float32)

    @pl.when(k == pl.num_programs(1) - 1)
    def _():
        o_ref[...] = (o_ref[...] + b2_ref[0]) * s_ref[...]   # scale by rpm


def _grouped_expert_ffn(group_ids, x_sorted, s_sorted, w1, b1, w2, b2,
                        *, block_rows, tk, vmem_limit_bytes):
    npad, d = x_sorted.shape
    _, _, d_ff = w1.shape
    num_tiles = npad // block_rows
    num_k = d_ff // tk
    grid_spec = pltpu.PrefetchScalarGridSpec(
        num_scalar_prefetch=1,
        grid=(num_tiles, num_k),
        in_specs=[
            pl.BlockSpec((block_rows, d), lambda t, k, gid: (t, 0)),      # x bf16
            pl.BlockSpec((block_rows, 1), lambda t, k, gid: (t, 0)),      # scale
            pl.BlockSpec((1, d, tk), lambda t, k, gid: (gid[t], 0, k)),   # W1 chunk
            pl.BlockSpec((1, 1, tk), lambda t, k, gid: (gid[t], 0, k)),   # b1 chunk
            pl.BlockSpec((1, tk, d), lambda t, k, gid: (gid[t], k, 0)),   # W2 chunk
            pl.BlockSpec((1, 1, d), lambda t, k, gid: (gid[t], 0, 0)),    # b2
        ],
        out_specs=pl.BlockSpec((block_rows, d), lambda t, k, gid: (t, 0)),
    )
    return pl.pallas_call(
        _expert_ffn_kernel,
        out_shape=jax.ShapeDtypeStruct((npad, d), jnp.float32),
        grid_spec=grid_spec,
        compiler_params=pltpu.CompilerParams(
            # token tiles independent -> shard across TCs; d_ff axis is a
            # reduction into the resident output block -> arbitrary.
            dimension_semantics=("parallel", "arbitrary"),
            vmem_limit_bytes=vmem_limit_bytes,
        ),
    )(group_ids.astype(jnp.int32), x_sorted, s_sorted, w1, b1, w2, b2)


def _pick_tk(d_ff, max_tk=1024):
    """Largest multiple of 128 that divides d_ff and is <= max_tk (else d_ff)."""
    if d_ff <= max_tk:
        return d_ff
    for cand in range(max_tk, 127, -128):
        if d_ff % cand == 0:
            return cand
    return d_ff


# ----------------------------------------------------------------------------
# SwitchFeedForward forward pass
# ----------------------------------------------------------------------------
@functools.partial(
    jax.jit,
    static_argnames=("n_experts", "capacity_factor", "drop_tokens",
                     "is_scale_prob", "block_rows", "router_rows", "tk",
                     "vmem_limit_bytes"),
)
def switch_feed_forward(x, params, *, n_experts, capacity_factor=1.0,
                        drop_tokens=False, is_scale_prob=True,
                        block_rows=128, router_rows=256, tk=None,
                        vmem_limit_bytes=48 * 1024 * 1024):
    """Returns (final_output [S,B,D], counts [E], route_prob.sum(0) [E],
    n_dropped, route_prob_max [S*B]) — same tuple as the PyTorch module."""
    # bf16 sublane packing needs %16; 128 (v5e) / 256 (v6e, v7x) recommended.
    assert block_rows % 16 == 0
    assert router_rows % 8 == 0
    seq_len, batch_size, d_model = x.shape
    n = seq_len * batch_size
    d_ff = params["e_w1"].shape[-1]
    if tk is None:
        tk = _pick_tk(d_ff)
    assert d_ff % tk == 0 and (tk % 128 == 0 or tk == d_ff)

    x_flat = x.reshape(n, d_model)
    x_bf = x_flat.astype(jnp.bfloat16)            # bf16 activation stream

    # ---- kernel 1: gridded fused router ---------------------------------------
    n_router_pad = ((n + router_rows - 1) // router_rows) * router_rows
    x_router = jnp.pad(x_bf, ((0, n_router_pad - n), (0, 0)))
    rpm_p, routes_p, counts2d, psum2d = _router(
        x_router, params["sw_w"].astype(jnp.bfloat16), params["sw_b"],
        n_valid=n, block_rows=router_rows)
    rpm = rpm_p[:n]                               # [n, 1] f32
    routes = routes_p[:n, 0]                      # [n]    i32
    counts = counts2d[0]
    route_prob_sum = psum2d[0]
    counts_i = counts.astype(jnp.int32)           # exact up to ~2^24 tokens

    _capacity = int(capacity_factor * n / n_experts)   # only used when dropping
    # TODO(synk): drop_tokens=True path (random token dropping via torch.randperm
    # + capacity cut) not implemented; this is the drop_tokens=False forward.
    n_dropped = 0

    # is_scale_prob=False multiplies by rpm / rpm.detach() == 1 in the forward.
    scale = rpm if is_scale_prob else jnp.ones_like(rpm)

    # ---- group tokens by expert (data-dependent sort/gather: XLA glue) --------
    sort_idx = jnp.argsort(routes)                                     # [n]
    padded_counts = ((counts_i + block_rows - 1) // block_rows) * block_rows
    padded_starts = jnp.concatenate(
        [jnp.zeros((1,), jnp.int32), jnp.cumsum(padded_counts)[:-1]])
    starts = jnp.concatenate(
        [jnp.zeros((1,), jnp.int32), jnp.cumsum(counts_i)[:-1]])

    num_tiles = (n + block_rows - 1) // block_rows + n_experts          # static
    npad = num_tiles * block_rows
    slot = jnp.arange(npad, dtype=jnp.int32)
    g = jnp.clip(jnp.searchsorted(padded_starts, slot, side="right") - 1,
                 0, n_experts - 1).astype(jnp.int32)
    pos = slot - padded_starts[g]
    valid = pos < counts_i[g]
    src = jnp.clip(starts[g] + pos, 0, n - 1)
    gather_idx = jnp.where(valid, sort_idx[src].astype(jnp.int32), n)   # n==dummy
    group_ids = g[::block_rows]                                         # [tiles]

    x_src = jnp.concatenate([x_bf, jnp.zeros((1, d_model), jnp.bfloat16)], 0)
    s_src = jnp.concatenate([scale, jnp.zeros((1, 1), jnp.float32)], 0)
    x_sorted = x_src[gather_idx]                                        # bf16
    s_sorted = s_src[gather_idx]                                        # f32

    # ---- kernel 2: routed grouped expert FFN -----------------------------------
    y_sorted = _grouped_expert_ffn(
        group_ids, x_sorted, s_sorted,
        params["e_w1"], params["e_b1"], params["e_w2"], params["e_b2"],
        block_rows=block_rows, tk=tk, vmem_limit_bytes=vmem_limit_bytes)

    # ---- inverse-permutation gather back to original token order ---------------
    inv_pos = jnp.zeros((n,), jnp.int32).at[sort_idx].set(
        jnp.arange(n, dtype=jnp.int32))                 # sorted position of token
    dest = padded_starts[routes] + (inv_pos - starts[routes])
    final_flat = jnp.take(y_sorted, dest, axis=0)       # gather, no zero-fill
    final_output = final_flat.reshape(seq_len, batch_size, d_model)
    return final_output, counts, route_prob_sum, n_dropped, rpm[:, 0]


# ----------------------------------------------------------------------------
# Deterministic synthetic parameters
# ----------------------------------------------------------------------------
def init_params(key, *, d_model, d_ff, n_experts):
    k = jax.random.split(key, 6)
    s = 0.02
    return {
        # router Linear(d_model, n_experts); bias pre-reshaped once
        "sw_w": (s * jax.random.normal(k[0], (d_model, n_experts))).astype(jnp.float32),
        "sw_b": (s * jax.random.normal(k[1], (1, n_experts))).astype(jnp.float32),
        # stacked expert FeedForward weights; matmul operands bf16 (f32 acc)
        "e_w1": (s * jax.random.normal(k[2], (n_experts, d_model, d_ff))).astype(jnp.bfloat16),
        "e_b1": (s * jax.random.normal(k[3], (n_experts, 1, d_ff))).astype(jnp.float32),
        "e_w2": (s * jax.random.normal(k[4], (n_experts, d_ff, d_model))).astype(jnp.bfloat16),
        "e_b2": (s * jax.random.normal(k[5], (n_experts, 1, d_model))).astype(jnp.float32),
    }


# ----------------------------------------------------------------------------
# Pure-JAX reference (same bf16 operand / f32 accumulation precision path)
# ----------------------------------------------------------------------------
def reference(x, params, is_scale_prob=True):
    seq, bsz, d = x.shape
    xf = x.reshape(-1, d)
    xb = xf.astype(jnp.bfloat16).astype(jnp.float32)
    wsw = params["sw_w"].astype(jnp.bfloat16).astype(jnp.float32)
    logits = xb @ wsw + params["sw_b"]
    prob = jax.nn.softmax(logits, axis=-1)
    rpm = prob.max(-1)
    routes = jnp.argmax(prob, -1)
    e = prob.shape[-1]
    w1 = params["e_w1"].astype(jnp.float32)[routes]
    b1 = params["e_b1"][routes][:, 0]
    w2 = params["e_w2"].astype(jnp.float32)[routes]
    b2 = params["e_b2"][routes][:, 0]
    h = jnp.maximum(jnp.einsum("nd,ndf->nf", xb, w1) + b1, 0.0)
    hb = h.astype(jnp.bfloat16).astype(jnp.float32)
    y = jnp.einsum("nf,nfd->nd", hb, w2) + b2
    scale = rpm if is_scale_prob else jnp.ones_like(rpm)
    y = y * scale[:, None]
    counts = jnp.sum(jax.nn.one_hot(routes, e, dtype=jnp.float32), axis=0)
    return y.reshape(seq, bsz, d), counts, prob.sum(0), rpm


# ----------------------------------------------------------------------------
# Main
# ----------------------------------------------------------------------------
if __name__ == "__main__":
    key = jax.random.PRNGKey(0)
    kx, kp = jax.random.split(key)

    # Small but lane-dense shapes: seq=8, batch=2, d_model=128, d_ff=256, E=4.
    seq_len, batch, d_model, d_ff, n_experts = 8, 2, 128, 256, 4
    x = jax.random.normal(kx, (seq_len, batch, d_model), dtype=jnp.float32)
    params = init_params(kp, d_model=d_model, d_ff=d_ff, n_experts=n_experts)

    out, counts, route_prob_sum, n_dropped, route_prob_max = switch_feed_forward(
        x, params, n_experts=n_experts, capacity_factor=1.0,
        drop_tokens=False, is_scale_prob=True,
        block_rows=128, router_rows=256)
    out = jax.block_until_ready(out)

    assert out.shape == (seq_len, batch, d_model) and out.dtype == jnp.float32
    assert counts.shape == (n_experts,)
    assert route_prob_sum.shape == (n_experts,)
    assert route_prob_max.shape == (seq_len * batch,)
    assert int(jnp.sum(counts)) == seq_len * batch
    assert bool(jnp.all(jnp.isfinite(out)))

    ref_out, ref_counts, ref_psum, ref_rpm = reference(x, params)
    assert bool(jnp.array_equal(counts, ref_counts))
    assert float(jnp.max(jnp.abs(out - ref_out))) < 5e-3
    assert float(jnp.max(jnp.abs(route_prob_sum - ref_psum))) < 5e-3
    assert float(jnp.max(jnp.abs(route_prob_max - ref_rpm))) < 5e-3

    print("KERNEL_OK")
</pallas_src>

<mosaic_0001>
module attributes {stable_mosaic.version = 11 : i64} {
  func.func @_router_kernel(%arg0: i32, %arg1: memref<256x128xbf16, #tpu.memory_space<vmem>>, %arg2: memref<128x4xbf16, #tpu.memory_space<vmem>>, %arg3: memref<1x4xf32, #tpu.memory_space<vmem>>, %arg4: memref<256x1xf32, #tpu.memory_space<vmem>>, %arg5: memref<256x1xi32, #tpu.memory_space<vmem>>, %arg6: memref<1x4xf32, #tpu.memory_space<vmem>>, %arg7: memref<1x4xf32, #tpu.memory_space<vmem>>) attributes {dimension_semantics = [#tpu.dimension_semantics<arbitrary>], iteration_bounds = array<i64: 1>, scalar_prefetch = 0 : i64, scratch_operands = 0 : i64, tpu.core_type = #tpu.core_type<tc>, window_params = [{transform_indices = @transform_0, window_bounds = array<i64: 256, 128>}, {pipeline_mode = #tpu.pipeline_mode<synchronous>, transform_indices = @transform_1, window_bounds = array<i64: 128, 4>}, {pipeline_mode = #tpu.pipeline_mode<synchronous>, transform_indices = @transform_2, window_bounds = array<i64: 1, 4>}, {transform_indices = @transform_3, window_bounds = array<i64: 256, 1>}, {transform_indices = @transform_4, window_bounds = array<i64: 256, 1>}, {pipeline_mode = #tpu.pipeline_mode<synchronous>, transform_indices = @transform_5, window_bounds = array<i64: 1, 4>}, {pipeline_mode = #tpu.pipeline_mode<synchronous>, transform_indices = @transform_6, window_bounds = array<i64: 1, 4>}]} {
    %c0_i32 = arith.constant 0 : i32
    %0 = arith.cmpi eq, %arg0, %c0_i32 : i32
    %1 = arith.extui %0 : i1 to i32
    %c0_i32_0 = arith.constant 0 : i32
    %2 = arith.cmpi ne, %1, %c0_i32_0 : i32
    scf.if %2 {
      %cst_24 = arith.constant 0.000000e+00 : f32
      %55 = vector.broadcast %cst_24 : f32 to vector<1x4xf32>
      %c0_25 = arith.constant 0 : index
      %c0_26 = arith.constant 0 : index
      %56 = vector.load %arg6[%c0_25, %c0_26] : memref<1x4xf32, #tpu.memory_space<vmem>>, vector<1x4xf32>
      tpu.vector_store %arg6[%c0_25, %c0_26], %55 {strides = array<i32>} : memref<1x4xf32, #tpu.memory_space<vmem>>, vector<1x4xf32>,
      %cst_27 = arith.constant 0.000000e+00 : f32
      %57 = vector.broadcast %cst_27 : f32 to vector<1x4xf32>
      %c0_28 = arith.constant 0 : index
      %c0_29 = arith.constant 0 : index
      %58 = vector.load %arg7[%c0_28, %c0_29] : memref<1x4xf32, #tpu.memory_space<vmem>>, vector<1x4xf32>
      tpu.vector_store %arg7[%c0_28, %c0_29], %57 {strides = array<i32>} : memref<1x4xf32, #tpu.memory_space<vmem>>, vector<1x4xf32>,
    } else {
    }
    %c0 = arith.constant 0 : index
    %c0_1 = arith.constant 0 : index
    %3 = vector.load %arg1[%c0, %c0_1] : memref<256x128xbf16, #tpu.memory_space<vmem>>, vector<256x128xbf16>
    %c0_2 = arith.constant 0 : index
    %c0_3 = arith.constant 0 : index
    %4 = vector.load %arg2[%c0_2, %c0_3] : memref<128x4xbf16, #tpu.memory_space<vmem>>, vector<128x4xbf16>
    %cst = arith.constant dense<0.000000e+00> : vector<256x4xf32>
    %5 = tpu.matmul %3, %4, %cst {dimension_numbers = #tpu.dot_dimension_numbers<[1], [0], [0], [1], [0, 0, 1, 1], [], []>} : vector<256x128xbf16>, vector<128x4xbf16>, vector<256x4xf32> -> vector<256x4xf32>
    %c0_4 = arith.constant 0 : index
    %c0_5 = arith.constant 0 : index
    %6 = vector.load %arg3[%c0_4, %c0_5] : memref<1x4xf32, #tpu.memory_space<vmem>>, vector<1x4xf32>
    %7 = vector.broadcast %6 : vector<1x4xf32> to vector<256x4xf32>
    %8 = arith.addf %5, %7 : vector<256x4xf32>
    %cst_6 = arith.constant dense<0xFF800000> : vector<256xf32>
    %9 = vector.multi_reduction <maximumf>, %8, %cst_6 [1] : vector<256x4xf32> to vector<256xf32>
    %10 = vector.shape_cast %9 : vector<256xf32> to vector<256x1xf32>
    %11 = vector.broadcast %10 : vector<256x1xf32> to vector<256x4xf32>
    %12 = arith.subf %8, %11 : vector<256x4xf32>
    %13 = math.exp %12 : vector<256x4xf32>
    %cst_7 = arith.constant dense<0.000000e+00> : vector<256xf32>
    %14 = vector.multi_reduction <add>, %13, %cst_7 [1] : vector<256x4xf32> to vector<256xf32>
    %15 = vector.shape_cast %14 : vector<256xf32> to vector<256x1xf32>
    %16 = vector.broadcast %15 : vector<256x1xf32> to vector<256x4xf32>
    %17 = arith.divf %13, %16 : vector<256x4xf32>
    %cst_8 = arith.constant dense<0xFF800000> : vector<256xf32>
    %18 = vector.multi_reduction <maximumf>, %17, %cst_8 [1] : vector<256x4xf32> to vector<256xf32>
    %19 = vector.shape_cast %18 : vector<256xf32> to vector<256x1xf32>
    %20 = tpu.iota {dimensions = array<i32: 1>} : vector<256x4xi32>
    %21 = vector.broadcast %19 : vector<256x1xf32> to vector<256x4xf32>
    %22 = arith.cmpf oge, %17, %21 : vector<256x4xf32>
    %c4_i32 = arith.constant 4 : i32
    %23 = vector.broadcast %c4_i32 : i32 to vector<256x4xi32>
    %24 = arith.select %22, %20, %23 : vector<256x4xi1>, vector<256x4xi32>
    %cst_9 = arith.constant dense<2147483647> : vector<256xi32>
    %25 = vector.multi_reduction <minsi>, %24, %cst_9 [1] : vector<256x4xi32> to vector<256xi32>
    %26 = vector.shape_cast %25 : vector<256xi32> to vector<256x1xi32>
    %c256_i32 = arith.constant 256 : i32
    %27 = arith.muli %arg0, %c256_i32 : i32
    %28 = tpu.iota {dimensions = array<i32: 0>} : vector<256x1xi32>
    %29 = vector.broadcast %27 : i32 to vector<256x1xi32>
    %30 = arith.addi %29, %28 : vector<256x1xi32>
    %c16_i32 = arith.constant 16 : i32
    %31 = vector.broadcast %c16_i32 : i32 to vector<256x1xi32>
    %32 = arith.cmpi slt, %30, %31 : vector<256x1xi32>
    %33 = arith.extui %32 : vector<256x1xi1> to vector<256x1xi32>
    %34 = arith.sitofp %33 : vector<256x1xi32> to vector<256x1xf32>
    %c0_10 = arith.constant 0 : index
    %c0_11 = arith.constant 0 : index
    %35 = vector.load %arg4[%c0_10, %c0_11] : memref<256x1xf32, #tpu.memory_space<vmem>>, vector<256x1xf32>
    tpu.vector_store %arg4[%c0_10, %c0_11], %19 {strides = array<i32>} : memref<256x1xf32, #tpu.memory_space<vmem>>, vector<256x1xf32>,
    %c0_12 = arith.constant 0 : index
    %c0_13 = arith.constant 0 : index
    %36 = vector.load %arg5[%c0_12, %c0_13] : memref<256x1xi32, #tpu.memory_space<vmem>>, vector<256x1xi32>
    tpu.vector_store %arg5[%c0_12, %c0_13], %26 {strides = array<i32>} : memref<256x1xi32, #tpu.memory_space<vmem>>, vector<256x1xi32>,
    %c0_14 = arith.constant 0 : index
    %c0_15 = arith.constant 0 : index
    %37 = vector.load %arg6[%c0_14, %c0_15] : memref<1x4xf32, #tpu.memory_space<vmem>>, vector<1x4xf32>
    %38 = vector.broadcast %26 : vector<256x1xi32> to vector<256x4xi32>
    %39 = arith.cmpi eq, %20, %38 : vector<256x4xi32>
    %40 = arith.extui %39 : vector<256x4xi1> to vector<256x4xi32>
    %41 = arith.sitofp %40 : vector<256x4xi32> to vector<256x4xf32>
    %42 = vector.broadcast %34 : vector<256x1xf32> to vector<256x4xf32>
    %43 = arith.mulf %41, %42 : vector<256x4xf32>
    %cst_16 = arith.constant dense<0.000000e+00> : vector<4xf32>
    %44 = vector.multi_reduction <add>, %43, %cst_16 [0] : vector<256x4xf32> to vector<4xf32>
    %45 = vector.shape_cast %44 : vector<4xf32> to vector<1x4xf32>
    %46 = arith.addf %37, %45 : vector<1x4xf32>
    %c0_17 = arith.constant 0 : index
    %c0_18 = arith.constant 0 : index
    %47 = vector.load %arg6[%c0_17, %c0_18] : memref<1x4xf32, #tpu.memory_space<vmem>>, vector<1x4xf32>
    tpu.vector_store %arg6[%c0_17, %c0_18], %46 {strides = array<i32>} : memref<1x4xf32, #tpu.memory_space<vmem>>, vector<1x4xf32>,
    %c0_19 = arith.constant 0 : index
    %c0_20 = arith.constant 0 : index
    %48 = vector.load %arg7[%c0_19, %c0_20] : memref<1x4xf32, #tpu.memory_space<vmem>>, vector<1x4xf32>
    %49 = vector.broadcast %34 : vector<256x1xf32> to vector<256x4xf32>
    %50 = arith.mulf %17, %49 : vector<256x4xf32>
    %cst_21 = arith.constant dense<0.000000e+00> : vector<4xf32>
    %51 = vector.multi_reduction <add>, %50, %cst_21 [0] : vector<256x4xf32> to vector<4xf32>
    %52 = vector.shape_cast %51 : vector<4xf32> to vector<1x4xf32>
    %53 = arith.addf %48, %52 : vector<1x4xf32>
    %c0_22 = arith.constant 0 : index
    %c0_23 = arith.constant 0 : index
    %54 = vector.load %arg7[%c0_22, %c0_23] : memref<1x4xf32, #tpu.memory_space<vmem>>, vector<1x4xf32>
    tpu.vector_store %arg7[%c0_22, %c0_23], %53 {strides = array<i32>} : memref<1x4xf32, #tpu.memory_space<vmem>>, vector<1x4xf32>,
    return
  }
  func.func @transform_0(%arg0: i32) -> (i32, i32) {
    %c0_i32 = arith.constant 0 : i32
    %c0_i32_0 = arith.constant 0 : i32
    return %arg0, %c0_i32 : i32, i32
  }
  func.func @transform_1(%arg0: i32) -> (i32, i32) {
    %c0_i32 = arith.constant 0 : i32
    %c0_i32_0 = arith.constant 0 : i32
    %c0_i32_1 = arith.constant 0 : i32
    return %c0_i32, %c0_i32_0 : i32, i32
  }
  func.func @transform_2(%arg0: i32) -> (i32, i32) {
    %c0_i32 = arith.constant 0 : i32
    %c0_i32_0 = arith.constant 0 : i32
    %c0_i32_1 = arith.constant 0 : i32
    return %c0_i32, %c0_i32_0 : i32, i32
  }
  func.func @transform_3(%arg0: i32) -> (i32, i32) {
    %c0_i32 = arith.constant 0 : i32
    %c0_i32_0 = arith.constant 0 : i32
    return %arg0, %c0_i32 : i32, i32
  }
  func.func @transform_4(%arg0: i32) -> (i32, i32) {
    %c0_i32 = arith.constant 0 : i32
    %c0_i32_0 = arith.constant 0 : i32
    return %arg0, %c0_i32 : i32, i32
  }
  func.func @transform_5(%arg0: i32) -> (i32, i32) {
    %c0_i32 = arith.constant 0 : i32
    %c0_i32_0 = arith.constant 0 : i32
    %c0_i32_1 = arith.constant 0 : i32
    return %c0_i32, %c0_i32_0 : i32, i32
  }
  func.func @transform_6(%arg0: i32) -> (i32, i32) {
    %c0_i32 = arith.constant 0 : i32
    %c0_i32_0 = arith.constant 0 : i32
    %c0_i32_1 = arith.constant 0 : i32
    return %c0_i32, %c0_i32_0 : i32, i32
  }
}

module attributes {stable_mosaic.version = 11 : i64} {
  func.func @_expert_ffn_kernel(%arg0: i32, %arg1: i32, %arg2: memref<5xi32, #tpu.memory_space<smem>>, %arg3: memref<128x128xbf16, #tpu.memory_space<vmem>>, %arg4: memref<128x1xf32, #tpu.memory_space<vmem>>, %arg5: memref<1x128x256xbf16, #tpu.memory_space<vmem>>, %arg6: memref<1x1x256xf32, #tpu.memory_space<vmem>>, %arg7: memref<1x256x128xbf16, #tpu.memory_space<vmem>>, %arg8: memref<1x1x128xf32, #tpu.memory_space<vmem>>, %arg9: memref<128x128xf32, #tpu.memory_space<vmem>>) attributes {dimension_semantics = [#tpu.dimension_semantics<parallel>, #tpu.dimension_semantics<arbitrary>], iteration_bounds = array<i64: 5, 1>, scalar_prefetch = 1 : i64, scratch_operands = 0 : i64, tpu.core_type = #tpu.core_type<tc>, window_params = [{transform_indices = @transform_0, window_bounds = array<i64: 128, 128>}, {transform_indices = @transform_1, window_bounds = array<i64: 128, 1>}, {transform_indices = @transform_2, window_bounds = array<i64: 1, 128, 256>}, {transform_indices = @transform_3, window_bounds = array<i64: 1, 1, 256>}, {transform_indices = @transform_4, window_bounds = array<i64: 1, 256, 128>}, {transform_indices = @transform_5, window_bounds = array<i64: 1, 1, 128>}, {transform_indices = @transform_6, window_bounds = array<i64: 128, 128>}]} {
    %c0_i32 = arith.constant 0 : i32
    %0 = arith.cmpi eq, %arg1, %c0_i32 : i32
    %1 = arith.extui %0 : i1 to i32
    %c0_i32_0 = arith.constant 0 : i32
    %2 = arith.cmpi ne, %1, %c0_i32_0 : i32
    scf.if %2 {
      %cst_19 = arith.constant 0.000000e+00 : f32
      %23 = vector.broadcast %cst_19 : f32 to vector<128x128xf32>
      %c0_20 = arith.constant 0 : index
      %c0_21 = arith.constant 0 : index
      %24 = vector.load %arg9[%c0_20, %c0_21] : memref<128x128xf32, #tpu.memory_space<vmem>>, vector<128x128xf32>
      tpu.vector_store %arg9[%c0_20, %c0_21], %23 {strides = array<i32>} : memref<128x128xf32, #tpu.memory_space<vmem>>, vector<128x128xf32>,
    } else {
    }
    %c0 = arith.constant 0 : index
    %c0_1 = arith.constant 0 : index
    %3 = vector.load %arg3[%c0, %c0_1] : memref<128x128xbf16, #tpu.memory_space<vmem>>, vector<128x128xbf16>
    %c0_2 = arith.constant 0 : index
    %c0_3 = arith.constant 0 : index
    %c0_4 = arith.constant 0 : index
    %4 = vector.load %arg5[%c0_2, %c0_3, %c0_4] : memref<1x128x256xbf16, #tpu.memory_space<vmem>>, vector<1x128x256xbf16>
    %5 = vector.shape_cast %4 : vector<1x128x256xbf16> to vector<128x256xbf16>
    %cst = arith.constant dense<0.000000e+00> : vector<128x256xf32>
    %6 = tpu.matmul %3, %5, %cst {dimension_numbers = #tpu.dot_dimension_numbers<[1], [0], [0], [1], [0, 0, 1, 1], [], []>} : vector<128x128xbf16>, vector<128x256xbf16>, vector<128x256xf32> -> vector<128x256xf32>
    %c0_5 = arith.constant 0 : index
    %c0_6 = arith.constant 0 : index
    %c0_7 = arith.constant 0 : index
    %7 = vector.load %arg6[%c0_5, %c0_6, %c0_7] : memref<1x1x256xf32, #tpu.memory_space<vmem>>, vector<1x1x256xf32>
    %8 = vector.shape_cast %7 : vector<1x1x256xf32> to vector<1x256xf32>
    %9 = vector.broadcast %8 : vector<1x256xf32> to vector<128x256xf32>
    %10 = arith.addf %6, %9 : vector<128x256xf32>
    %cst_8 = arith.constant 0.000000e+00 : f32
    %11 = vector.broadcast %cst_8 : f32 to vector<128x256xf32>
    %12 = arith.maximumf %10, %11 : vector<128x256xf32>
    %c0_9 = arith.constant 0 : index
    %c0_10 = arith.constant 0 : index
    %13 = vector.load %arg9[%c0_9, %c0_10] : memref<128x128xf32, #tpu.memory_space<vmem>>, vector<128x128xf32>
    %14 = arith.truncf %12 : vector<128x256xf32> to vector<128x256xbf16>
    %c0_11 = arith.constant 0 : index
    %c0_12 = arith.constant 0 : index
    %c0_13 = arith.constant 0 : index
    %15 = vector.load %arg7[%c0_11, %c0_12, %c0_13] : memref<1x256x128xbf16, #tpu.memory_space<vmem>>, vector<1x256x128xbf16>
    %16 = vector.shape_cast %15 : vector<1x256x128xbf16> to vector<256x128xbf16>
    %cst_14 = arith.constant dense<0.000000e+00> : vector<128x128xf32>
    %17 = tpu.matmul %14, %16, %cst_14 {dimension_numbers = #tpu.dot_dimension_numbers<[1], [0], [0], [1], [0, 0, 1, 1], [], []>} : vector<128x256xbf16>, vector<256x128xbf16>, vector<128x128xf32> -> vector<128x128xf32>
    %18 = arith.addf %13, %17 : vector<128x128xf32>
    %c0_15 = arith.constant 0 : index
    %c0_16 = arith.constant 0 : index
    %19 = vector.load %arg9[%c0_15, %c0_16] : memref<128x128xf32, #tpu.memory_space<vmem>>, vector<128x128xf32>
    tpu.vector_store %arg9[%c0_15, %c0_16], %18 {strides = array<i32>} : memref<128x128xf32, #tpu.memory_space<vmem>>, vector<128x128xf32>,
    %c0_i32_17 = arith.constant 0 : i32
    %20 = arith.cmpi eq, %arg1, %c0_i32_17 : i32
    %21 = arith.extui %20 : i1 to i32
    %c0_i32_18 = arith.constant 0 : i32
    %22 = arith.cmpi ne, %21, %c0_i32_18 : i32
    scf.if %22 {
      %c0_19 = arith.constant 0 : index
      %c0_20 = arith.constant 0 : index
      %23 = vector.load %arg9[%c0_19, %c0_20] : memref<128x128xf32, #tpu.memory_space<vmem>>, vector<128x128xf32>
      %c0_21 = arith.constant 0 : index
      %c0_22 = arith.constant 0 : index
      %c0_23 = arith.constant 0 : index
      %24 = vector.load %arg8[%c0_21, %c0_22, %c0_23] : memref<1x1x128xf32, #tpu.memory_space<vmem>>, vector<1x1x128xf32>
      %25 = vector.shape_cast %24 : vector<1x1x128xf32> to vector<1x128xf32>
      %26 = vector.broadcast %25 : vector<1x128xf32> to vector<128x128xf32>
      %27 = arith.addf %23, %26 : vector<128x128xf32>
      %c0_24 = arith.constant 0 : index
      %c0_25 = arith.constant 0 : index
      %28 = vector.load %arg4[%c0_24, %c0_25] : memref<128x1xf32, #tpu.memory_space<vmem>>, vector<128x1xf32>
      %29 = vector.broadcast %28 : vector<128x1xf32> to vector<128x128xf32>
      %30 = arith.mulf %27, %29 : vector<128x128xf32>
      %c0_26 = arith.constant 0 : index
      %c0_27 = arith.constant 0 : index
      %31 = vector.load %arg9[%c0_26, %c0_27] : memref<128x128xf32, #tpu.memory_space<vmem>>, vector<128x128xf32>
      tpu.vector_store %arg9[%c0_26, %c0_27], %30 {strides = array<i32>} : memref<128x128xf32, #tpu.memory_space<vmem>>, vector<128x128xf32>,
    } else {
    }
    return
  }
  func.func @transform_0(%arg0: i32, %arg1: i32, %arg2: memref<5xi32, #tpu.memory_space<smem>>) -> (i32, i32) {
    %c0_i32 = arith.constant 0 : i32
    %c0_i32_0 = arith.constant 0 : i32
    return %arg0, %c0_i32 : i32, i32
  }
  func.func @transform_1(%arg0: i32, %arg1: i32, %arg2: memref<5xi32, #tpu.memory_space<smem>>) -> (i32, i32) {
    %c0_i32 = arith.constant 0 : i32
    %c0_i32_0 = arith.constant 0 : i32
    return %arg0, %c0_i32 : i32, i32
  }
  func.func @transform_2(%arg0: i32, %arg1: i32, %arg2: memref<5xi32, #tpu.memory_space<smem>>) -> (i32, i32, i32) {
    %0 = arith.index_cast %arg0 : i32 to index
    %1 = memref.load %arg2[%0] : memref<5xi32, #tpu.memory_space<smem>>
    %c0_i32 = arith.constant 0 : i32
    %c0_i32_0 = arith.constant 0 : i32
    return %1, %c0_i32, %arg1 : i32, i32, i32
  }
  func.func @transform_3(%arg0: i32, %arg1: i32, %arg2: memref<5xi32, #tpu.memory_space<smem>>) -> (i32, i32, i32) {
    %0 = arith.index_cast %arg0 : i32 to index
    %1 = memref.load %arg2[%0] : memref<5xi32, #tpu.memory_space<smem>>
    %c0_i32 = arith.constant 0 : i32
    %c0_i32_0 = arith.constant 0 : i32
    return %1, %c0_i32, %arg1 : i32, i32, i32
  }
  func.func @transform_4(%arg0: i32, %arg1: i32, %arg2: memref<5xi32, #tpu.memory_space<smem>>) -> (i32, i32, i32) {
    %0 = arith.index_cast %arg0 : i32 to index
    %1 = memref.load %arg2[%0] : memref<5xi32, #tpu.memory_space<smem>>
    %c0_i32 = arith.constant 0 : i32
    %c0_i32_0 = arith.constant 0 : i32
    return %1, %arg1, %c0_i32 : i32, i32, i32
  }
  func.func @transform_5(%arg0: i32, %arg1: i32, %arg2: memref<5xi32, #tpu.memory_space<smem>>) -> (i32, i32, i32) {
    %0 = arith.index_cast %arg0 : i32 to index
    %1 = memref.load %arg2[%0] : memref<5xi32, #tpu.memory_space<smem>>
    %c0_i32 = arith.constant 0 : i32
    %c0_i32_0 = arith.constant 0 : i32
    %c0_i32_1 = arith.constant 0 : i32
    return %1, %c0_i32, %c0_i32_0 : i32, i32, i32
  }
  func.func @transform_6(%arg0: i32, %arg1: i32, %arg2: memref<5xi32, #tpu.memory_space<smem>>) -> (i32, i32) {
    %c0_i32 = arith.constant 0 : i32
    %c0_i32_0 = arith.constant 0 : i32
    return %arg0, %c0_i32 : i32, i32
  }
}

</mosaic_0001>

<llo_original>
// kernel: custom-call
$region0: #{custom-call}
  %s0 = inlined_call_operand.vmem [shape: u32[640], index: 0, kind: output, shape index: {}]

// kernel: switch_feed_forward.2
$region0: #{switch_feed_forward.2}
  #allocation0 [shape = 'u32[]', space=smem, size = 0x4, offset = 0x4, fixed_abs, tag = 'smem constant byte address 0x4 - core index']
  #allocation1 [shape = 'u32[144,128]{1,0:T(1,128)}', space=vmem, size = 0x12000, scoped, tag = 'internal scratch']
  %s0 = inlined_call_operand.vmem [shape: bf16[256,128], index: 0, kind: input, shape index: {}]
  %s1 = inlined_call_operand.vmem [shape: bf16[128,4], index: 1, kind: input, shape index: {}]
  %s2 = inlined_call_operand.vmem [shape: f32[1,4], index: 2, kind: input, shape index: {}]
  %s3 = inlined_call_operand.vmem [shape: f32[256,1], index: 3, kind: output, shape index: {0}]
  %s4 = inlined_call_operand.vmem [shape: s32[256,1], index: 4, kind: output, shape index: {1}]
  %s5 = inlined_call_operand.vmem [shape: f32[1,4], index: 5, kind: output, shape index: {2}]
  %s6 = inlined_call_operand.hbm [shape: f32[1,4], index: 6, kind: output, shape index: {3}]
  %7 = xla_tuple %s3, %s4, %s5, %s6
  %s8 = sld [smem:[#allocation0]]
  $region50: #{switch_feed_forward.2} parent=0
    _
  %s10 = ssub.s32 1, %s8
  %s11 = scalar_select 0, %s10, %s8
  $region1: #{switch_feed_forward.2} parent=0
    #allocation2 [shape = 'u8[512]{0}', space=vmem, size = 0x400, scoped, tag = 'output window, operand 3, single buffered']
    #allocation3 [shape = 's32[1]{0}', space=sflag, size = 0x4, scoped, tag = 'scoped memory for switch_feed_forward.2']
    %12 = vsyncpa [#allocation3], 0
    // Predicated region
    $region2: #{switch_feed_forward.2} parent=1 // pred_check
      _
    $region3: #{switch_feed_forward.2} parent=1 // pred_check_branch
      %14 = sbr.rel (0) target = $region5
    $region4: #{switch_feed_forward.2} parent=1 // pred_region
      _
    $region5: #{switch_feed_forward.2} parent=1 // pred_fallthru
      _
    // Predicated region
    $region6: #{switch_feed_forward.2} parent=1 // pred_check
      _
    $region7: #{switch_feed_forward.2} parent=1 // pred_check_branch
      %16 = sbr.rel (0) target = $region9
    $region8: #{switch_feed_forward.2} parent=1 // pred_region
      _
    $region9: #{switch_feed_forward.2} parent=1 // pred_fallthru
      _
    // Predicated region
    $region10: #{switch_feed_forward.2} parent=1 // pred_check
      _
    $region11: #{switch_feed_forward.2} parent=1 // pred_check_branch
      %18 = sbr.rel (0) target = $region13
    $region12: #{switch_feed_forward.2} parent=1 // pred_region
      _
    $region13: #{switch_feed_forward.2} parent=1 // pred_fallthru
      _
    %p20 = scmp.eq.s32.totalorder 0, 0
    // Predicated region
    $region14: #{switch_feed_forward.2} parent=1 // pred_check
      %p21 = pneg %p20
    $region15: #{switch_feed_forward.2} parent=1 // pred_check_branch
      %23 = sbr.rel (%p21) target = $region17
    $region16: #{switch_feed_forward.2} parent=1 // pred_region
      %vm24 = vcmask 24576
      %25 = vst.msk [vmem:[%s5] sm:$0x1] %vm24, 0.0
      %26 = vst.msk [vmem:[#allocation2] sm:$0x1] %vm24, 0.0
    $region17: #{switch_feed_forward.2} parent=1 // pred_fallthru
      _
    %v27 = vld [vmem:[%s0] sm:$0xf]
    %v28 = vld [vmem:[%s0 + $0x4] sm:$0xf]
    %v29 = vld [vmem:[%s0 + $0x8] sm:$0xf]
    %v30 = vld [vmem:[%s0 + $0xc] sm:$0xf]
    %v31 = vld [vmem:[%s0 + $0x10] sm:$0xf]
    %v32 = vld [vmem:[%s0 + $0x14] sm:$0xf]
    %v33 = vld [vmem:[%s0 + $0x18] sm:$0xf]
    %v34 = vld [vmem:[%s0 + $0x1c] sm:$0xf]
    %v35 = vld [vmem:[%s0 + $0x20] sm:$0xf]
    %v36 = vld [vmem:[%s0 + $0x24] sm:$0xf]
    %v37 = vld [vmem:[%s0 + $0x28] sm:$0xf]
    %v38 = vld [vmem:[%s0 + $0x2c] sm:$0xf]
    %v39 = vld [vmem:[%s0 + $0x30] sm:$0xf]
    %v40 = vld [vmem:[%s0 + $0x34] sm:$0xf]
    %v41 = vld [vmem:[%s0 + $0x38] sm:$0xf]
    %v42 = vld [vmem:[%s0 + $0x3c] sm:$0xf]
    %v43 = vld [vmem:[%s0 + $0x40] sm:$0xf]
    %v44 = vld [vmem:[%s0 + $0x44] sm:$0xf]
    %v45 = vld [vmem:[%s0 + $0x48] sm:$0xf]
    %v46 = vld [vmem:[%s0 + $0x4c] sm:$0xf]
    %v47 = vld [vmem:[%s0 + $0x50] sm:$0xf]
    %v48 = vld [vmem:[%s0 + $0x54] sm:$0xf]
    %v49 = vld [vmem:[%s0 + $0x58] sm:$0xf]
    %v50 = vld [vmem:[%s0 + $0x5c] sm:$0xf]
    %v51 = vld [vmem:[%s0 + $0x60] sm:$0xf]
    %v52 = vld [vmem:[%s0 + $0x64] sm:$0xf]
    %v53 = vld [vmem:[%s0 + $0x68] sm:$0xf]
    %v54 = vld [vmem:[%s0 + $0x6c] sm:$0xf]
    %v55 = vld [vmem:[%s0 + $0x70] sm:$0xf]
    %v56 = vld [vmem:[%s0 + $0x74] sm:$0xf]
    %v57 = vld [vmem:[%s0 + $0x78] sm:$0xf]
    %v58 = vld [vmem:[%s0 + $0x7c] sm:$0xf]
    %v59 = vld [vmem:[%s1] sm:$0xf]
    %v60 = vld [vmem:[%s1 + $0x4] sm:$0xf]
    %v61 = vld [vmem:[%s1 + $0x8] sm:$0xf]
    %v62 = vld [vmem:[%s1 + $0xc] sm:$0xf]
    %v63 = vld [vmem:[%s1 + $0x10] sm:$0xf]
    %v64 = vld [vmem:[%s1 + $0x14] sm:$0xf]
    %v65 = vld [vmem:[%s1 + $0x18] sm:$0xf]
    %v66 = vld [vmem:[%s1 + $0x1c] sm:$0xf]
    %v67 = vld [vmem:[%s1 + $0x20] sm:$0xf]
    %v68 = vld [vmem:[%s1 + $0x24] sm:$0xf]
    %v69 = vld [vmem:[%s1 + $0x28] sm:$0xf]
    %v70 = vld [vmem:[%s1 + $0x2c] sm:$0xf]
    %v71 = vld [vmem:[%s1 + $0x30] sm:$0xf]
    %v72 = vld [vmem:[%s1 + $0x34] sm:$0xf]
    %v73 = vld [vmem:[%s1 + $0x38] sm:$0xf]
    %v74 = vld [vmem:[%s1 + $0x3c] sm:$0xf]
    %v75 = vld [vmem:[%s2] sm:$0x1]
    %v77 = vlaneseq
    %v78 = vshrl.u32 %v77, 7
    %v79 = vsub.s32 0, %v78
    %v80 = vrot.slane %v75, %v79
    %v114 = vunpack.c.l.b16 %v27
    %v115 = vunpack.c.l.b16 %v28
    %v116 = vunpack.c.l.b16 %v29
    %v117 = vunpack.c.l.b16 %v30
    %v118 = vunpack.c.l.b16 %v31
    %v119 = vunpack.c.l.b16 %v32
    %v120 = vunpack.c.l.b16 %v33
    %v121 = vunpack.c.l.b16 %v34
    %v122 = vunpack.c.l.b16 %v35
    %v123 = vunpack.c.l.b16 %v36
    %v124 = vunpack.c.l.b16 %v37
    %v125 = vunpack.c.l.b16 %v38
    %v126 = vunpack.c.l.b16 %v39
    %v127 = vunpack.c.l.b16 %v40
    %v128 = vunpack.c.l.b16 %v41
    %v129 = vunpack.c.l.b16 %v42
    %v130 = vunpack.c.l.b16 %v43
    %v131 = vunpack.c.l.b16 %v44
    %v132 = vunpack.c.l.b16 %v45
    %v133 = vunpack.c.l.b16 %v46
    %v134 = vunpack.c.l.b16 %v47
    %v135 = vunpack.c.l.b16 %v48
    %v136 = vunpack.c.l.b16 %v49
    %v137 = vunpack.c.l.b16 %v50
    %v138 = vunpack.c.l.b16 %v51
    %v139 = vunpack.c.l.b16 %v52
    %v140 = vunpack.c.l.b16 %v53
    %v141 = vunpack.c.l.b16 %v54
    %v142 = vunpack.c.l.b16 %v55
    %v143 = vunpack.c.l.b16 %v56
    %v144 = vunpack.c.l.b16 %v57
    %v145 = vunpack.c.l.b16 %v58
    %v146 = vpack.c.b16 %v115, %v114
    %v147 = vpack.c.b16 %v117, %v116
    %v148 = vpack.c.b16 %v119, %v118
    %v149 = vpack.c.b16 %v121, %v120
    %v150 = vpack.c.b16 %v123, %v122
    %v151 = vpack.c.b16 %v125, %v124
    %v152 = vpack.c.b16 %v127, %v126
    %v153 = vpack.c.b16 %v129, %v128
    %v154 = vpack.c.b16 %v131, %v130
    %v155 = vpack.c.b16 %v133, %v132
    %v156 = vpack.c.b16 %v135, %v134
    %v157 = vpack.c.b16 %v137, %v136
    %v158 = vpack.c.b16 %v139, %v138
    %v159 = vpack.c.b16 %v141, %v140
    %v160 = vpack.c.b16 %v143, %v142
    %v161 = vpack.c.b16 %v145, %v144
    %v194 = vunpack.c.l.b16 %v59
    %v195 = vunpack.c.l.b16 %v60
    %v196 = vunpack.c.l.b16 %v61
    %v197 = vunpack.c.l.b16 %v62
    %v198 = vunpack.c.l.b16 %v63
    %v199 = vunpack.c.l.b16 %v64
    %v200 = vunpack.c.l.b16 %v65
    %v201 = vunpack.c.l.b16 %v66
    %v202 = vunpack.c.l.b16 %v67
    %v203 = vunpack.c.l.b16 %v68
    %v204 = vunpack.c.l.b16 %v69
    %v205 = vunpack.c.l.b16 %v70
    %v206 = vunpack.c.l.b16 %v71
    %v207 = vunpack.c.l.b16 %v72
    %v208 = vunpack.c.l.b16 %v73
    %v209 = vunpack.c.l.b16 %v74
    %v210 = vpack.c.b16 %v195, %v194
    %v211 = vpack.c.b16 %v197, %v196
    %v212 = vpack.c.b16 %v199, %v198
    %v213 = vpack.c.b16 %v201, %v200
    %v214 = vpack.c.b16 %v203, %v202
    %v215 = vpack.c.b16 %v205, %v204
    %v216 = vpack.c.b16 %v207, %v206
    %v217 = vpack.c.b16 %v209, %v208
    %226 = vmatprep.subr.bf16.mxu0 0
    %227 = vmatpush1.bf16.msra.mxu0 %v217
    %228 = vmatprep.subr.bf16.mxu0 0
    %229 = vmatpush1.bf16.msra.mxu0 %v216
    %230 = vmatprep.subr.bf16.mxu0 0
    %231 = vmatpush1.bf16.msra.mxu0 %v215
    %232 = vmatprep.subr.bf16.mxu0 0
    %233 = vmatpush1.bf16.msra.mxu0 %v214
    %234 = vmatprep.subr.bf16.mxu0 0
    %235 = vmatpush1.bf16.msra.mxu0 %v213
    %236 = vmatprep.subr.bf16.mxu0 0
    %237 = vmatpush1.bf16.msra.mxu0 %v212
    %238 = vmatprep.subr.bf16.mxu0 0
    %239 = vmatpush1.bf16.msra.mxu0 %v211
    %240 = vmatprep.subr.bf16.mxu0 0
    %241 = vmatpush1.bf16.msra.mxu0 %v210
    %242 = vmatprep.subr.bf16.mxu0 0
    %243 = vmatpush2.bf16.msra.mxu0 0
    %244 = vmatprep.subr.bf16.mxu0 0
    %245 = vmatpush2.bf16.msra.mxu0 0
    %246 = vmatprep.subr.bf16.mxu0 0
    %247 = vmatpush2.bf16.msra.mxu0 0
    %248 = vmatprep.subr.bf16.mxu0 0
    %249 = vmatpush2.bf16.msra.mxu0 0
    %250 = vmatprep.subr.bf16.mxu0 0
    %251 = vmatpush2.bf16.msra.mxu0 0
    %252 = vmatprep.subr.bf16.mxu0 0
    %253 = vmatpush2.bf16.msra.mxu0 0
    %254 = vmatprep.subr.bf16.mxu0 0
    %255 = vmatpush2.bf16.msra.mxu0 0
    %256 = vmatprep.subr.bf16.mxu0 0
    %257 = vmatpush2.bf16.msra.mxu0 0
    %258 = vmatprep.mubr.bf16.mxu0 0
    %259 = vmatmul.mubr.bf16.gmra.mxu0 %v146
    %v260 = vpop.f32.mrf.mxu0
    %v261 = vadd.f32 %v80, %v260
    %v262 = vpop.f32.mrf.mxu0
    %v263 = vpop.f32.mrf.mxu0
    %v264 = vadd.f32 %v80, %v263
    %v265 = vpop.f32.mrf.mxu0
    %266 = vmatprep.mubr.bf16.mxu0 0
    %267 = vmatmul.mubr.bf16.gmra.mxu0 %v147
    %v268 = vpop.f32.mrf.mxu0
    %v269 = vadd.f32 %v80, %v268
    %v270 = vpop.f32.mrf.mxu0
    %v271 = vpop.f32.mrf.mxu0
    %v272 = vadd.f32 %v80, %v271
    %v273 = vpop.f32.mrf.mxu0
    %274 = vmatprep.mubr.bf16.mxu0 0
    %275 = vmatmul.mubr.bf16.gmra.mxu0 %v148
    %v276 = vpop.f32.mrf.mxu0
    %v277 = vadd.f32 %v80, %v276
    %v278 = vpop.f32.mrf.mxu0
    %v279 = vpop.f32.mrf.mxu0
    %v280 = vadd.f32 %v80, %v279
    %v281 = vpop.f32.mrf.mxu0
    %282 = vmatprep.mubr.bf16.mxu0 0
    %283 = vmatmul.mubr.bf16.gmra.mxu0 %v149
    %v284 = vpop.f32.mrf.mxu0
    %v285 = vadd.f32 %v80, %v284
    %v286 = vpop.f32.mrf.mxu0
    %v287 = vpop.f32.mrf.mxu0
    %v288 = vadd.f32 %v80, %v287
    %v289 = vpop.f32.mrf.mxu0
    %290 = vmatprep.mubr.bf16.mxu0 0
    %291 = vmatmul.mubr.bf16.gmra.mxu0 %v150
    %v292 = vpop.f32.mrf.mxu0
    %v293 = vadd.f32 %v80, %v292
    %v294 = vpop.f32.mrf.mxu0
    %v295 = vpop.f32.mrf.mxu0
    %v296 = vadd.f32 %v80, %v295
    %v297 = vpop.f32.mrf.mxu0
    %298 = vmatprep.mubr.bf16.mxu0 0
    %299 = vmatmul.mubr.bf16.gmra.mxu0 %v151
    %v300 = vpop.f32.mrf.mxu0
    %v301 = vadd.f32 %v80, %v300
    %v302 = vpop.f32.mrf.mxu0
    %v303 = vpop.f32.mrf.mxu0
    %v304 = vadd.f32 %v80, %v303
    %v305 = vpop.f32.mrf.mxu0
    %306 = vmatprep.mubr.bf16.mxu0 0
    %307 = vmatmul.mubr.bf16.gmra.mxu0 %v152
    %v308 = vpop.f32.mrf.mxu0
    %v309 = vadd.f32 %v80, %v308
    %v310 = vpop.f32.mrf.mxu0
    %v311 = vpop.f32.mrf.mxu0
    %v312 = vadd.f32 %v80, %v311
    %v313 = vpop.f32.mrf.mxu0
    %314 = vmatprep.mubr.bf16.mxu0 0
    %315 = vmatmul.mubr.bf16.gmra.mxu0 %v153
    %v316 = vpop.f32.mrf.mxu0
    %v317 = vadd.f32 %v80, %v316
    %v318 = vpop.f32.mrf.mxu0
    %v319 = vpop.f32.mrf.mxu0
    %v320 = vadd.f32 %v80, %v319
    %v321 = vpop.f32.mrf.mxu0
    %322 = vmatprep.mubr.bf16.mxu0 0
    %323 = vmatmul.mubr.bf16.gmra.mxu0 %v154
    %v324 = vpop.f32.mrf.mxu0
    %v325 = vadd.f32 %v80, %v324
    %v326 = vpop.f32.mrf.mxu0
    %v327 = vpop.f32.mrf.mxu0
    %v328 = vadd.f32 %v80, %v327
    %v329 = vpop.f32.mrf.mxu0
    %330 = vmatprep.mubr.bf16.mxu0 0
    %331 = vmatmul.mubr.bf16.gmra.mxu0 %v155
    %v332 = vpop.f32.mrf.mxu0
    %v333 = vadd.f32 %v80, %v332
    %v334 = vpop.f32.mrf.mxu0
    %v335 = vpop.f32.mrf.mxu0
    %v336 = vadd.f32 %v80, %v335
    %v337 = vpop.f32.mrf.mxu0
    %338 = vmatprep.mubr.bf16.mxu0 0
    %339 = vmatmul.mubr.bf16.gmra.mxu0 %v156
    %v340 = vpop.f32.mrf.mxu0
    %v341 = vadd.f32 %v80, %v340
    %v342 = vpop.f32.mrf.mxu0
    %v343 = vpop.f32.mrf.mxu0
    %v344 = vadd.f32 %v80, %v343
    %v345 = vpop.f32.mrf.mxu0
    %346 = vmatprep.mubr.bf16.mxu0 0
    %347 = vmatmul.mubr.bf16.gmra.mxu0 %v157
    %v348 = vpop.f32.mrf.mxu0
    %v349 = vadd.f32 %v80, %v348
    %v350 = vpop.f32.mrf.mxu0
    %v351 = vpop.f32.mrf.mxu0
    %v352 = vadd.f32 %v80, %v351
    %v353 = vpop.f32.mrf.mxu0
    %354 = vmatprep.mubr.bf16.mxu0 0
    %355 = vmatmul.mubr.bf16.gmra.mxu0 %v158
    %v356 = vpop.f32.mrf.mxu0
    %v357 = vadd.f32 %v80, %v356
    %v358 = vpop.f32.mrf.mxu0
    %v359 = vpop.f32.mrf.mxu0
    %v360 = vadd.f32 %v80, %v359
    %v361 = vpop.f32.mrf.mxu0
    %362 = vmatprep.mubr.bf16.mxu0 0
    %363 = vmatmul.mubr.bf16.gmra.mxu0 %v159
    %v364 = vpop.f32.mrf.mxu0
    %v365 = vadd.f32 %v80, %v364
    %v366 = vpop.f32.mrf.mxu0
    %v367 = vpop.f32.mrf.mxu0
    %v368 = vadd.f32 %v80, %v367
    %v369 = vpop.f32.mrf.mxu0
    %370 = vmatprep.mubr.bf16.mxu0 0
    %371 = vmatmul.mubr.bf16.gmra.mxu0 %v160
    %v372 = vpop.f32.mrf.mxu0
    %v373 = vadd.f32 %v80, %v372
    %v374 = vpop.f32.mrf.mxu0
    %v375 = vpop.f32.mrf.mxu0
    %v376 = vadd.f32 %v80, %v375
    %v377 = vpop.f32.mrf.mxu0
    %378 = vmatprep.mubr.bf16.mxu0 0
    %379 = vmatmul.mubr.bf16.gmra.mxu0 %v161
    %v380 = vpop.f32.mrf.mxu0
    %v381 = vadd.f32 %v80, %v380
    %v382 = vpop.f32.mrf.mxu0
    %v383 = vpop.f32.mrf.mxu0
    %v384 = vadd.f32 %v80, %v383
    %v385 = vpop.f32.mrf.mxu0
    %386 = vdwg.mxu0
    %vm387 = vcmask 31744
    %v388 = vsel %vm387, %v261, -inf
    %389 = vmax.xlane.f32.xlu0 %v388
    %v390 = vpop.xlane.xlu0 %389
    %v391 = vsel %vm387, %v264, -inf
    %392 = vmax.xlane.f32.xlu0 %v391
    %v393 = vpop.xlane.xlu0 %392
    %v394 = vsel %vm387, %v269, -inf
    %395 = vmax.xlane.f32.xlu0 %v394
    %v396 = vpop.xlane.xlu0 %395
    %v397 = vsel %vm387, %v272, -inf
    %398 = vmax.xlane.f32.xlu0 %v397
    %v399 = vpop.xlane.xlu0 %398
    %v400 = vsel %vm387, %v277, -inf
    %401 = vmax.xlane.f32.xlu0 %v400
    %v402 = vpop.xlane.xlu0 %401
    %v403 = vsel %vm387, %v280, -inf
    %404 = vmax.xlane.f32.xlu0 %v403
    %v405 = vpop.xlane.xlu0 %404
    %v406 = vsel %vm387, %v285, -inf
    %407 = vmax.xlane.f32.xlu0 %v406
    %v408 = vpop.xlane.xlu0 %407
    %v409 = vsel %vm387, %v288, -inf
    %410 = vmax.xlane.f32.xlu0 %v409
    %v411 = vpop.xlane.xlu0 %410
    %v412 = vsel %vm387, %v293, -inf
    %413 = vmax.xlane.f32.xlu0 %v412
    %v414 = vpop.xlane.xlu0 %413
    %v415 = vsel %vm387, %v296, -inf
    %416 = vmax.xlane.f32.xlu0 %v415
    %v417 = vpop.xlane.xlu0 %416
    %v418 = vsel %vm387, %v301, -inf
    %419 = vmax.xlane.f32.xlu0 %v418
    %v420 = vpop.xlane.xlu0 %419
    %v421 = vsel %vm387, %v304, -inf
    %422 = vmax.xlane.f32.xlu0 %v421
    %v423 = vpop.xlane.xlu0 %422
    %v424 = vsel %vm387, %v309, -inf
    %425 = vmax.xlane.f32.xlu0 %v424
    %v426 = vpop.xlane.xlu0 %425
    %v427 = vsel %vm387, %v312, -inf
    %428 = vmax.xlane.f32.xlu0 %v427
    %v429 = vpop.xlane.xlu0 %428
    %v430 = vsel %vm387, %v317, -inf
    %431 = vmax.xlane.f32.xlu0 %v430
    %v432 = vpop.xlane.xlu0 %431
    %v433 = vsel %vm387, %v320, -inf
    %434 = vmax.xlane.f32.xlu0 %v433
    %v435 = vpop.xlane.xlu0 %434
    %v436 = vsel %vm387, %v325, -inf
    %437 = vmax.xlane.f32.xlu0 %v436
    %v438 = vpop.xlane.xlu0 %437
    %v439 = vsel %vm387, %v328, -inf
    %440 = vmax.xlane.f32.xlu0 %v439
    %v441 = vpop.xlane.xlu0 %440
    %v442 = vsel %vm387, %v333, -inf
    %443 = vmax.xlane.f32.xlu0 %v442
    %v444 = vpop.xlane.xlu0 %443
    %v445 = vsel %vm387, %v336, -inf
    %446 = vmax.xlane.f32.xlu0 %v445
    %v447 = vpop.xlane.xlu0 %446
    %v448 = vsel %vm387, %v341, -inf
    %449 = vmax.xlane.f32.xlu0 %v448
    %v450 = vpop.xlane.xlu0 %449
    %v451 = vsel %vm387, %v344, -inf
    %452 = vmax.xlane.f32.xlu0 %v451
    %v453 = vpop.xlane.xlu0 %452
    %v454 = vsel %vm387, %v349, -inf
    %455 = vmax.xlane.f32.xlu0 %v454
    %v456 = vpop.xlane.xlu0 %455
    %v457 = vsel %vm387, %v352, -inf
    %458 = vmax.xlane.f32.xlu0 %v457
    %v459 = vpop.xlane.xlu0 %458
    %v460 = vsel %vm387, %v357, -inf
    %461 = vmax.xlane.f32.xlu0 %v460
    %v462 = vpop.xlane.xlu0 %461
    %v463 = vsel %vm387, %v360, -inf
    %464 = vmax.xlane.f32.xlu0 %v463
    %v465 = vpop.xlane.xlu0 %464
    %v466 = vsel %vm387, %v365, -inf
    %467 = vmax.xlane.f32.xlu0 %v466
    %v468 = vpop.xlane.xlu0 %467
    %v469 = vsel %vm387, %v368, -inf
    %470 = vmax.xlane.f32.xlu0 %v469
    %v471 = vpop.xlane.xlu0 %470
    %v472 = vsel %vm387, %v373, -inf
    %473 = vmax.xlane.f32.xlu0 %v472
    %v474 = vpop.xlane.xlu0 %473
    %v475 = vsel %vm387, %v376, -inf
    %476 = vmax.xlane.f32.xlu0 %v475
    %v477 = vpop.xlane.xlu0 %476
    %v478 = vsel %vm387, %v381, -inf
    %479 = vmax.xlane.f32.xlu0 %v478
    %v480 = vpop.xlane.xlu0 %479
    %v481 = vsel %vm387, %v384, -inf
    %482 = vmax.xlane.f32.xlu0 %v481
    %v483 = vpop.xlane.xlu0 %482
    %v484 = vsub.f32 %v261, %v390
    %v485 = vsub.f32 %v264, %v393
    %v486 = vsub.f32 %v269, %v396
    %v487 = vsub.f32 %v272, %v399
    %v488 = vsub.f32 %v277, %v402
    %v489 = vsub.f32 %v280, %v405
    %v490 = vsub.f32 %v285, %v408
    %v491 = vsub.f32 %v288, %v411
    %v492 = vsub.f32 %v293, %v414
    %v493 = vsub.f32 %v296, %v417
    %v494 = vsub.f32 %v301, %v420
    %v495 = vsub.f32 %v304, %v423
    %v496 = vsub.f32 %v309, %v426
    %v497 = vsub.f32 %v312, %v429
    %v498 = vsub.f32 %v317, %v432
    %v499 = vsub.f32 %v320, %v435
    %v500 = vsub.f32 %v325, %v438
    %v501 = vsub.f32 %v328, %v441
    %v502 = vsub.f32 %v333, %v444
    %v503 = vsub.f32 %v336, %v447
    %v504 = vsub.f32 %v341, %v450
    %v505 = vsub.f32 %v344, %v453
    %v506 = vsub.f32 %v349, %v456
    %v507 = vsub.f32 %v352, %v459
    %v508 = vsub.f32 %v357, %v462
    %v509 = vsub.f32 %v360, %v465
    %v510 = vsub.f32 %v365, %v468
    %v511 = vsub.f32 %v368, %v471
    %v512 = vsub.f32 %v373, %v474
    %v513 = vsub.f32 %v376, %v477
    %v514 = vsub.f32 %v381, %v480
    %v515 = vsub.f32 %v384, %v483
    %v516 = vmul.f32 %v484, 1.442695
    %v517 = vpow.pop %v516
    %v518 = vmul.f32 %v485, 1.442695
    %v519 = vpow.pop %v518
    %v520 = vmul.f32 %v486, 1.442695
    %v521 = vpow.pop %v520
    %v522 = vmul.f32 %v487, 1.442695
    %v523 = vpow.pop %v522
    %v524 = vmul.f32 %v488, 1.442695
    %v525 = vpow.pop %v524
    %v526 = vmul.f32 %v489, 1.442695
    %v527 = vpow.pop %v526
    %v528 = vmul.f32 %v490, 1.442695
    %v529 = vpow.pop %v528
    %v530 = vmul.f32 %v491, 1.442695
    %v531 = vpow.pop %v530
    %v532 = vmul.f32 %v492, 1.442695
    %v533 = vpow.pop %v532
    %v534 = vmul.f32 %v493, 1.442695
    %v535 = vpow.pop %v534
    %v536 = vmul.f32 %v494, 1.442695
    %v537 = vpow.pop %v536
    %v538 = vmul.f32 %v495, 1.442695
    %v539 = vpow.pop %v538
    %v540 = vmul.f32 %v496, 1.442695
    %v541 = vpow.pop %v540
    %v542 = vmul.f32 %v497, 1.442695
    %v543 = vpow.pop %v542
    %v544 = vmul.f32 %v498, 1.442695
    %v545 = vpow.pop %v544
    %v546 = vmul.f32 %v499, 1.442695
    %v547 = vpow.pop %v546
    %v548 = vmul.f32 %v500, 1.442695
    %v549 = vpow.pop %v548
    %v550 = vmul.f32 %v501, 1.442695
    %v551 = vpow.pop %v550
    %v552 = vmul.f32 %v502, 1.442695
    %v553 = vpow.pop %v552
    %v554 = vmul.f32 %v503, 1.442695
    %v555 = vpow.pop %v554
    %v556 = vmul.f32 %v504, 1.442695
    %v557 = vpow.pop %v556
    %v558 = vmul.f32 %v505, 1.442695
    %v559 = vpow.pop %v558
    %v560 = vmul.f32 %v506, 1.442695
    %v561 = vpow.pop %v560
    %v562 = vmul.f32 %v507, 1.442695
    %v563 = vpow.pop %v562
    %v564 = vmul.f32 %v508, 1.442695
    %v565 = vpow.pop %v564
    %v566 = vmul.f32 %v509, 1.442695
    %v567 = vpow.pop %v566
    %v568 = vmul.f32 %v510, 1.442695
    %v569 = vpow.pop %v568
    %v570 = vmul.f32 %v511, 1.442695
    %v571 = vpow.pop %v570
    %v572 = vmul.f32 %v512, 1.442695
    %v573 = vpow.pop %v572
    %v574 = vmul.f32 %v513, 1.442695
    %v575 = vpow.pop %v574
    %v576 = vmul.f32 %v514, 1.442695
    %v577 = vpow.pop %v576
    %v578 = vmul.f32 %v515, 1.442695
    %v579 = vpow.pop %v578
    %v580 = vsel %vm387, %v517, 0.0
    %581 = vadd.xlane.f32.xlu0 %v580
    %v582 = vpop.xlane.xlu0 %581
    %v583 = vsel %vm387, %v519, 0.0
    %584 = vadd.xlane.f32.xlu0 %v583
    %v585 = vpop.xlane.xlu0 %584
    %v586 = vsel %vm387, %v521, 0.0
    %587 = vadd.xlane.f32.xlu0 %v586
    %v588 = vpop.xlane.xlu0 %587
    %v589 = vsel %vm387, %v523, 0.0
    %590 = vadd.xlane.f32.xlu0 %v589
    %v591 = vpop.xlane.xlu0 %590
    %v592 = vsel %vm387, %v525, 0.0
    %593 = vadd.xlane.f32.xlu0 %v592
    %v594 = vpop.xlane.xlu0 %593
    %v595 = vsel %vm387, %v527, 0.0
    %596 = vadd.xlane.f32.xlu0 %v595
    %v597 = vpop.xlane.xlu0 %596
    %v598 = vsel %vm387, %v529, 0.0
    %599 = vadd.xlane.f32.xlu0 %v598
    %v600 = vpop.xlane.xlu0 %599
    %v601 = vsel %vm387, %v531, 0.0
    %602 = vadd.xlane.f32.xlu0 %v601
    %v603 = vpop.xlane.xlu0 %602
    %v604 = vsel %vm387, %v533, 0.0
    %605 = vadd.xlane.f32.xlu0 %v604
    %v606 = vpop.xlane.xlu0 %605
    %v607 = vsel %vm387, %v535, 0.0
    %608 = vadd.xlane.f32.xlu0 %v607
    %v609 = vpop.xlane.xlu0 %608
    %v610 = vsel %vm387, %v537, 0.0
    %611 = vadd.xlane.f32.xlu0 %v610
    %v612 = vpop.xlane.xlu0 %611
    %v613 = vsel %vm387, %v539, 0.0
    %614 = vadd.xlane.f32.xlu0 %v613
    %v615 = vpop.xlane.xlu0 %614
    %v616 = vsel %vm387, %v541, 0.0
    %617 = vadd.xlane.f32.xlu0 %v616
    %v618 = vpop.xlane.xlu0 %617
    %v619 = vsel %vm387, %v543, 0.0
    %620 = vadd.xlane.f32.xlu0 %v619
    %v621 = vpop.xlane.xlu0 %620
    %v622 = vsel %vm387, %v545, 0.0
    %623 = vadd.xlane.f32.xlu0 %v622
    %v624 = vpop.xlane.xlu0 %623
    %v625 = vsel %vm387, %v547, 0.0
    %626 = vadd.xlane.f32.xlu0 %v625
    %v627 = vpop.xlane.xlu0 %626
    %v628 = vsel %vm387, %v549, 0.0
    %629 = vadd.xlane.f32.xlu0 %v628
    %v630 = vpop.xlane.xlu0 %629
    %v631 = vsel %vm387, %v551, 0.0
    %632 = vadd.xlane.f32.xlu0 %v631
    %v633 = vpop.xlane.xlu0 %632
    %v634 = vsel %vm387, %v553, 0.0
    %635 = vadd.xlane.f32.xlu0 %v634
    %v636 = vpop.xlane.xlu0 %635
    %v637 = vsel %vm387, %v555, 0.0
    %638 = vadd.xlane.f32.xlu0 %v637
    %v639 = vpop.xlane.xlu0 %638
    %v640 = vsel %vm387, %v557, 0.0
    %641 = vadd.xlane.f32.xlu0 %v640
    %v642 = vpop.xlane.xlu0 %641
    %v643 = vsel %vm387, %v559, 0.0
    %644 = vadd.xlane.f32.xlu0 %v643
    %v645 = vpop.xlane.xlu0 %644
    %v646 = vsel %vm387, %v561, 0.0
    %647 = vadd.xlane.f32.xlu0 %v646
    %v648 = vpop.xlane.xlu0 %647
    %v649 = vsel %vm387, %v563, 0.0
    %650 = vadd.xlane.f32.xlu0 %v649
    %v651 = vpop.xlane.xlu0 %650
    %v652 = vsel %vm387, %v565, 0.0
    %653 = vadd.xlane.f32.xlu0 %v652
    %v654 = vpop.xlane.xlu0 %653
    %v655 = vsel %vm387, %v567, 0.0
    %656 = vadd.xlane.f32.xlu0 %v655
    %v657 = vpop.xlane.xlu0 %656
    %v658 = vsel %vm387, %v569, 0.0
    %659 = vadd.xlane.f32.xlu0 %v658
    %v660 = vpop.xlane.xlu0 %659
    %v661 = vsel %vm387, %v571, 0.0
    %662 = vadd.xlane.f32.xlu0 %v661
    %v663 = vpop.xlane.xlu0 %662
    %v664 = vsel %vm387, %v573, 0.0
    %665 = vadd.xlane.f32.xlu0 %v664
    %v666 = vpop.xlane.xlu0 %665
    %v667 = vsel %vm387, %v575, 0.0
    %668 = vadd.xlane.f32.xlu0 %v667
    %v669 = vpop.xlane.xlu0 %668
    %v670 = vsel %vm387, %v577, 0.0
    %671 = vadd.xlane.f32.xlu0 %v670
    %v672 = vpop.xlane.xlu0 %671
    %v673 = vsel %vm387, %v579, 0.0
    %674 = vadd.xlane.f32.xlu0 %v673
    %v675 = vpop.xlane.xlu0 %674
    %v676 = vrcp.pop %v582
    %v677 = vmul.f32 %v517, %v676
    %v678 = vrcp.pop %v585
    %v679 = vmul.f32 %v519, %v678
    %v680 = vrcp.pop %v588
    %v681 = vmul.f32 %v521, %v680
    %v682 = vrcp.pop %v591
    %v683 = vmul.f32 %v523, %v682
    %v684 = vrcp.pop %v594
    %v685 = vmul.f32 %v525, %v684
    %v686 = vrcp.pop %v597
    %v687 = vmul.f32 %v527, %v686
    %v688 = vrcp.pop %v600
    %v689 = vmul.f32 %v529, %v688
    %v690 = vrcp.pop %v603
    %v691 = vmul.f32 %v531, %v690
    %v692 = vrcp.pop %v606
    %v693 = vmul.f32 %v533, %v692
    %v694 = vrcp.pop %v609
    %v695 = vmul.f32 %v535, %v694
    %v696 = vrcp.pop %v612
    %v697 = vmul.f32 %v537, %v696
    %v698 = vrcp.pop %v615
    %v699 = vmul.f32 %v539, %v698
    %v700 = vrcp.pop %v618
    %v701 = vmul.f32 %v541, %v700
    %v702 = vrcp.pop %v621
    %v703 = vmul.f32 %v543, %v702
    %v704 = vrcp.pop %v624
    %v705 = vmul.f32 %v545, %v704
    %v706 = vrcp.pop %v627
    %v707 = vmul.f32 %v547, %v706
    %v708 = vrcp.pop %v630
    %v709 = vmul.f32 %v549, %v708
    %v710 = vrcp.pop %v633
    %v711 = vmul.f32 %v551, %v710
    %v712 = vrcp.pop %v636
    %v713 = vmul.f32 %v553, %v712
    %v714 = vrcp.pop %v639
    %v715 = vmul.f32 %v555, %v714
    %v716 = vrcp.pop %v642
    %v717 = vmul.f32 %v557, %v716
    %v718 = vrcp.pop %v645
    %v719 = vmul.f32 %v559, %v718
    %v720 = vrcp.pop %v648
    %v721 = vmul.f32 %v561, %v720
    %v722 = vrcp.pop %v651
    %v723 = vmul.f32 %v563, %v722
    %v724 = vrcp.pop %v654
    %v725 = vmul.f32 %v565, %v724
    %v726 = vrcp.pop %v657
    %v727 = vmul.f32 %v567, %v726
    %v728 = vrcp.pop %v660
    %v729 = vmul.f32 %v569, %v728
    %v730 = vrcp.pop %v663
    %v731 = vmul.f32 %v571, %v730
    %v732 = vrcp.pop %v666
    %v733 = vmul.f32 %v573, %v732
    %v734 = vrcp.pop %v669
    %v735 = vmul.f32 %v575, %v734
    %v736 = vrcp.pop %v672
    %v737 = vmul.f32 %v577, %v736
    %v738 = vrcp.pop %v675
    %v739 = vmul.f32 %v579, %v738
    %v740 = vsel %vm387, %v677, -inf
    %741 = vmax.xlane.f32.xlu0 %v740
    %v742 = vpop.xlane.xlu0 %741
    %v743 = vsel %vm387, %v679, -inf
    %744 = vmax.xlane.f32.xlu0 %v743
    %v745 = vpop.xlane.xlu0 %744
    %v746 = vsel %vm387, %v681, -inf
    %747 = vmax.xlane.f32.xlu0 %v746
    %v748 = vpop.xlane.xlu0 %747
    %v749 = vsel %vm387, %v683, -inf
    %750 = vmax.xlane.f32.xlu0 %v749
    %v751 = vpop.xlane.xlu0 %750
    %v752 = vsel %vm387, %v685, -inf
    %753 = vmax.xlane.f32.xlu0 %v752
    %v754 = vpop.xlane.xlu0 %753
    %v755 = vsel %vm387, %v687, -inf
    %756 = vmax.xlane.f32.xlu0 %v755
    %v757 = vpop.xlane.xlu0 %756
    %v758 = vsel %vm387, %v689, -inf
    %759 = vmax.xlane.f32.xlu0 %v758
    %v760 = vpop.xlane.xlu0 %759
    %v761 = vsel %vm387, %v691, -inf
    %762 = vmax.xlane.f32.xlu0 %v761
    %v763 = vpop.xlane.xlu0 %762
    %v764 = vsel %vm387, %v693, -inf
    %765 = vmax.xlane.f32.xlu0 %v764
    %v766 = vpop.xlane.xlu0 %765
    %v767 = vsel %vm387, %v695, -inf
    %768 = vmax.xlane.f32.xlu0 %v767
    %v769 = vpop.xlane.xlu0 %768
    %v770 = vsel %vm387, %v697, -inf
    %771 = vmax.xlane.f32.xlu0 %v770
    %v772 = vpop.xlane.xlu0 %771
    %v773 = vsel %vm387, %v699, -inf
    %774 = vmax.xlane.f32.xlu0 %v773
    %v775 = vpop.xlane.xlu0 %774
    %v776 = vsel %vm387, %v701, -inf
    %777 = vmax.xlane.f32.xlu0 %v776
    %v778 = vpop.xlane.xlu0 %777
    %v779 = vsel %vm387, %v703, -inf
    %780 = vmax.xlane.f32.xlu0 %v779
    %v781 = vpop.xlane.xlu0 %780
    %v782 = vsel %vm387, %v705, -inf
    %783 = vmax.xlane.f32.xlu0 %v782
    %v784 = vpop.xlane.xlu0 %783
    %v785 = vsel %vm387, %v707, -inf
    %786 = vmax.xlane.f32.xlu0 %v785
    %v787 = vpop.xlane.xlu0 %786
    %v788 = vsel %vm387, %v709, -inf
    %789 = vmax.xlane.f32.xlu0 %v788
    %v790 = vpop.xlane.xlu0 %789
    %v791 = vsel %vm387, %v711, -inf
    %792 = vmax.xlane.f32.xlu0 %v791
    %v793 = vpop.xlane.xlu0 %792
    %v794 = vsel %vm387, %v713, -inf
    %795 = vmax.xlane.f32.xlu0 %v794
    %v796 = vpop.xlane.xlu0 %795
    %v797 = vsel %vm387, %v715, -inf
    %798 = vmax.xlane.f32.xlu0 %v797
    %v799 = vpop.xlane.xlu0 %798
    %v800 = vsel %vm387, %v717, -inf
    %801 = vmax.xlane.f32.xlu0 %v800
    %v802 = vpop.xlane.xlu0 %801
    %v803 = vsel %vm387, %v719, -inf
    %804 = vmax.xlane.f32.xlu0 %v803
    %v805 = vpop.xlane.xlu0 %804
    %v806 = vsel %vm387, %v721, -inf
    %807 = vmax.xlane.f32.xlu0 %v806
    %v808 = vpop.xlane.xlu0 %807
    %v809 = vsel %vm387, %v723, -inf
    %810 = vmax.xlane.f32.xlu0 %v809
    %v811 = vpop.xlane.xlu0 %810
    %v812 = vsel %vm387, %v725, -inf
    %813 = vmax.xlane.f32.xlu0 %v812
    %v814 = vpop.xlane.xlu0 %813
    %v815 = vsel %vm387, %v727, -inf
    %816 = vmax.xlane.f32.xlu0 %v815
    %v817 = vpop.xlane.xlu0 %816
    %v818 = vsel %vm387, %v729, -inf
    %819 = vmax.xlane.f32.xlu0 %v818
    %v820 = vpop.xlane.xlu0 %819
    %v821 = vsel %vm387, %v731, -inf
    %822 = vmax.xlane.f32.xlu0 %v821
    %v823 = vpop.xlane.xlu0 %822
    %v824 = vsel %vm387, %v733, -inf
    %825 = vmax.xlane.f32.xlu0 %v824
    %v826 = vpop.xlane.xlu0 %825
    %v827 = vsel %vm387, %v735, -inf
    %828 = vmax.xlane.f32.xlu0 %v827
    %v829 = vpop.xlane.xlu0 %828
    %v830 = vsel %vm387, %v737, -inf
    %831 = vmax.xlane.f32.xlu0 %v830
    %v832 = vpop.xlane.xlu0 %831
    %v833 = vsel %vm387, %v739, -inf
    %834 = vmax.xlane.f32.xlu0 %v833
    %v835 = vpop.xlane.xlu0 %834
    %v836 = vlaneseq
    %v837 = vand.u32 %v836, 127
    %vm838 = vcmp.ge.f32.partialorder %v677, %v742
    %vm839 = vcmp.ge.f32.partialorder %v679, %v745
    %vm840 = vcmp.ge.f32.partialorder %v681, %v748
    %vm841 = vcmp.ge.f32.partialorder %v683, %v751
    %vm842 = vcmp.ge.f32.partialorder %v685, %v754
    %vm843 = vcmp.ge.f32.partialorder %v687, %v757
    %vm844 = vcmp.ge.f32.partialorder %v689, %v760
    %vm845 = vcmp.ge.f32.partialorder %v691, %v763
    %vm846 = vcmp.ge.f32.partialorder %v693, %v766
    %vm847 = vcmp.ge.f32.partialorder %v695, %v769
    %vm848 = vcmp.ge.f32.partialorder %v697, %v772
    %vm849 = vcmp.ge.f32.partialorder %v699, %v775
    %vm850 = vcmp.ge.f32.partialorder %v701, %v778
    %vm851 = vcmp.ge.f32.partialorder %v703, %v781
    %vm852 = vcmp.ge.f32.partialorder %v705, %v784
    %vm853 = vcmp.ge.f32.partialorder %v707, %v787
    %vm854 = vcmp.ge.f32.partialorder %v709, %v790
    %vm855 = vcmp.ge.f32.partialorder %v711, %v793
    %vm856 = vcmp.ge.f32.partialorder %v713, %v796
    %vm857 = vcmp.ge.f32.partialorder %v715, %v799
    %vm858 = vcmp.ge.f32.partialorder %v717, %v802
    %vm859 = vcmp.ge.f32.partialorder %v719, %v805
    %vm860 = vcmp.ge.f32.partialorder %v721, %v808
    %vm861 = vcmp.ge.f32.partialorder %v723, %v811
    %vm862 = vcmp.ge.f32.partialorder %v725, %v814
    %vm863 = vcmp.ge.f32.partialorder %v727, %v817
    %vm864 = vcmp.ge.f32.partialorder %v729, %v820
    %vm865 = vcmp.ge.f32.partialorder %v731, %v823
    %vm866 = vcmp.ge.f32.partialorder %v733, %v826
    %vm867 = vcmp.ge.f32.partialorder %v735, %v829
    %vm868 = vcmp.ge.f32.partialorder %v737, %v832
    %vm869 = vcmp.ge.f32.partialorder %v739, %v835
    %v870 = vsel %vm838, %v837, 4
    %v871 = vsel %vm839, %v837, 4
    %v872 = vsel %vm840, %v837, 4
    %v873 = vsel %vm841, %v837, 4
    %v874 = vsel %vm842, %v837, 4
    %v875 = vsel %vm843, %v837, 4
    %v876 = vsel %vm844, %v837, 4
    %v877 = vsel %vm845, %v837, 4
    %v878 = vsel %vm846, %v837, 4
    %v879 = vsel %vm847, %v837, 4
    %v880 = vsel %vm848, %v837, 4
    %v881 = vsel %vm849, %v837, 4
    %v882 = vsel %vm850, %v837, 4
    %v883 = vsel %vm851, %v837, 4
    %v884 = vsel %vm852, %v837, 4
    %v885 = vsel %vm853, %v837, 4
    %v886 = vsel %vm854, %v837, 4
    %v887 = vsel %vm855, %v837, 4
    %v888 = vsel %vm856, %v837, 4
    %v889 = vsel %vm857, %v837, 4
    %v890 = vsel %vm858, %v837, 4
    %v891 = vsel %vm859, %v837, 4
    %v892 = vsel %vm860, %v837, 4
    %v893 = vsel %vm861, %v837, 4
    %v894 = vsel %vm862, %v837, 4
    %v895 = vsel %vm863, %v837, 4
    %v896 = vsel %vm864, %v837, 4
    %v897 = vsel %vm865, %v837, 4
    %v898 = vsel %vm866, %v837, 4
    %v899 = vsel %vm867, %v837, 4
    %v900 = vsel %vm868, %v837, 4
    %v901 = vsel %vm869, %v837, 4
    %v902 = vsel %vm387, %v870, 2147483647
    %v903 = vand.u32 %v902, 65535
    %v904 = vshra.s32 %v902, 16
    %v905 = vcvt.s32.f32 %v903
    %v906 = vcvt.s32.f32 %v904
    %907 = vmin.xlane.f32.xlu0 %v906
    %v908 = vpop.xlane.xlu0 %907
    %vm909 = vcmp.eq.f32.partialorder %v906, %v908
    %v910 = vsel %vm909, %v905, inf
    %911 = vmin.xlane.f32.xlu0 %v910
    %v912 = vpop.xlane.xlu0 %911
    %v913 = vcvt.f32.s32 %v912
    %v914 = vcvt.f32.s32 %v908
    %v915 = vshll.u32 %v914, 16
    %v916 = vadd.s32 %v915, %v913
    %v917 = vsel %vm387, %v871, 2147483647
    %v918 = vand.u32 %v917, 65535
    %v919 = vshra.s32 %v917, 16
    %v920 = vcvt.s32.f32 %v918
    %v921 = vcvt.s32.f32 %v919
    %922 = vmin.xlane.f32.xlu0 %v921
    %v923 = vpop.xlane.xlu0 %922
    %vm924 = vcmp.eq.f32.partialorder %v921, %v923
    %v925 = vsel %vm924, %v920, inf
    %926 = vmin.xlane.f32.xlu0 %v925
    %v927 = vpop.xlane.xlu0 %926
    %v928 = vcvt.f32.s32 %v927
    %v929 = vcvt.f32.s32 %v923
    %v930 = vshll.u32 %v929, 16
    %v931 = vadd.s32 %v930, %v928
    %v932 = vsel %vm387, %v872, 2147483647
    %v933 = vand.u32 %v932, 65535
    %v934 = vshra.s32 %v932, 16
    %v935 = vcvt.s32.f32 %v933
    %v936 = vcvt.s32.f32 %v934
    %937 = vmin.xlane.f32.xlu0 %v936
    %v938 = vpop.xlane.xlu0 %937
    %vm939 = vcmp.eq.f32.partialorder %v936, %v938
    %v940 = vsel %vm939, %v935, inf
    %941 = vmin.xlane.f32.xlu0 %v940
    %v942 = vpop.xlane.xlu0 %941
    %v943 = vcvt.f32.s32 %v942
    %v944 = vcvt.f32.s32 %v938
    %v945 = vshll.u32 %v944, 16
    %v946 = vadd.s32 %v945, %v943
    %v947 = vsel %vm387, %v873, 2147483647
    %v948 = vand.u32 %v947, 65535
    %v949 = vshra.s32 %v947, 16
    %v950 = vcvt.s32.f32 %v948
    %v951 = vcvt.s32.f32 %v949
    %952 = vmin.xlane.f32.xlu0 %v951
    %v953 = vpop.xlane.xlu0 %952
    %vm954 = vcmp.eq.f32.partialorder %v951, %v953
    %v955 = vsel %vm954, %v950, inf
    %956 = vmin.xlane.f32.xlu0 %v955
    %v957 = vpop.xlane.xlu0 %956
    %v958 = vcvt.f32.s32 %v957
    %v959 = vcvt.f32.s32 %v953
    %v960 = vshll.u32 %v959, 16
    %v961 = vadd.s32 %v960, %v958
    %v962 = vsel %vm387, %v874, 2147483647
    %v963 = vand.u32 %v962, 65535
    %v964 = vshra.s32 %v962, 16
    %v965 = vcvt.s32.f32 %v963
    %v966 = vcvt.s32.f32 %v964
    %967 = vmin.xlane.f32.xlu0 %v966
    %v968 = vpop.xlane.xlu0 %967
    %vm969 = vcmp.eq.f32.partialorder %v966, %v968
    %v970 = vsel %vm969, %v965, inf
    %971 = vmin.xlane.f32.xlu0 %v970
    %v972 = vpop.xlane.xlu0 %971
    %v973 = vcvt.f32.s32 %v972
    %v974 = vcvt.f32.s32 %v968
    %v975 = vshll.u32 %v974, 16
    %v976 = vadd.s32 %v975, %v973
    %v977 = vsel %vm387, %v875, 2147483647
    %v978 = vand.u32 %v977, 65535
    %v979 = vshra.s32 %v977, 16
    %v980 = vcvt.s32.f32 %v978
    %v981 = vcvt.s32.f32 %v979
    %982 = vmin.xlane.f32.xlu0 %v981
    %v983 = vpop.xlane.xlu0 %982
    %vm984 = vcmp.eq.f32.partialorder %v981, %v983
    %v985 = vsel %vm984, %v980, inf
    %986 = vmin.xlane.f32.xlu0 %v985
    %v987 = vpop.xlane.xlu0 %986
    %v988 = vcvt.f32.s32 %v987
    %v989 = vcvt.f32.s32 %v983
    %v990 = vshll.u32 %v989, 16
    %v991 = vadd.s32 %v990, %v988
    %v992 = vsel %vm387, %v876, 2147483647
    %v993 = vand.u32 %v992, 65535
    %v994 = vshra.s32 %v992, 16
    %v995 = vcvt.s32.f32 %v993
    %v996 = vcvt.s32.f32 %v994
    %997 = vmin.xlane.f32.xlu0 %v996
    %v998 = vpop.xlane.xlu0 %997
    %vm999 = vcmp.eq.f32.partialorder %v996, %v998
    %v1000 = vsel %vm999, %v995, inf
    %1001 = vmin.xlane.f32.xlu0 %v1000
    %v1002 = vpop.xlane.xlu0 %1001
    %v1003 = vcvt.f32.s32 %v1002
    %v1004 = vcvt.f32.s32 %v998
    %v1005 = vshll.u32 %v1004, 16
    %v1006 = vadd.s32 %v1005, %v1003
    %v1007 = vsel %vm387, %v877, 2147483647
    %v1008 = vand.u32 %v1007, 65535
    %v1009 = vshra.s32 %v1007, 16
    %v1010 = vcvt.s32.f32 %v1008
    %v1011 = vcvt.s32.f32 %v1009
    %1012 = vmin.xlane.f32.xlu0 %v1011
    %v1013 = vpop.xlane.xlu0 %1012
    %vm1014 = vcmp.eq.f32.partialorder %v1011, %v1013
    %v1015 = vsel %vm1014, %v1010, inf
    %1016 = vmin.xlane.f32.xlu0 %v1015
    %v1017 = vpop.xlane.xlu0 %1016
    %v1018 = vcvt.f32.s32 %v1017
    %v1019 = vcvt.f32.s32 %v1013
    %v1020 = vshll.u32 %v1019, 16
    %v1021 = vadd.s32 %v1020, %v1018
    %v1022 = vsel %vm387, %v878, 2147483647
    %v1023 = vand.u32 %v1022, 65535
    %v1024 = vshra.s32 %v1022, 16
    %v1025 = vcvt.s32.f32 %v1023
    %v1026 = vcvt.s32.f32 %v1024
    %1027 = vmin.xlane.f32.xlu0 %v1026
    %v1028 = vpop.xlane.xlu0 %1027
    %vm1029 = vcmp.eq.f32.partialorder %v1026, %v1028
    %v1030 = vsel %vm1029, %v1025, inf
    %1031 = vmin.xlane.f32.xlu0 %v1030
    %v1032 = vpop.xlane.xlu0 %1031
    %v1033 = vcvt.f32.s32 %v1032
    %v1034 = vcvt.f32.s32 %v1028
    %v1035 = vshll.u32 %v1034, 16
    %v1036 = vadd.s32 %v1035, %v1033
    %v1037 = vsel %vm387, %v879, 2147483647
    %v1038 = vand.u32 %v1037, 65535
    %v1039 = vshra.s32 %v1037, 16
    %v1040 = vcvt.s32.f32 %v1038
    %v1041 = vcvt.s32.f32 %v1039
    %1042 = vmin.xlane.f32.xlu0 %v1041
    %v1043 = vpop.xlane.xlu0 %1042
    %vm1044 = vcmp.eq.f32.partialorder %v1041, %v1043
    %v1045 = vsel %vm1044, %v1040, inf
    %1046 = vmin.xlane.f32.xlu0 %v1045
    %v1047 = vpop.xlane.xlu0 %1046
    %v1048 = vcvt.f32.s32 %v1047
    %v1049 = vcvt.f32.s32 %v1043
    %v1050 = vshll.u32 %v1049, 16
    %v1051 = vadd.s32 %v1050, %v1048
    %v1052 = vsel %vm387, %v880, 2147483647
    %v1053 = vand.u32 %v1052, 65535
    %v1054 = vshra.s32 %v1052, 16
    %v1055 = vcvt.s32.f32 %v1053
    %v1056 = vcvt.s32.f32 %v1054
    %1057 = vmin.xlane.f32.xlu0 %v1056
    %v1058 = vpop.xlane.xlu0 %1057
    %vm1059 = vcmp.eq.f32.partialorder %v1056, %v1058
    %v1060 = vsel %vm1059, %v1055, inf
    %1061 = vmin.xlane.f32.xlu0 %v1060
    %v1062 = vpop.xlane.xlu0 %1061
    %v1063 = vcvt.f32.s32 %v1062
    %v1064 = vcvt.f32.s32 %v1058
    %v1065 = vshll.u32 %v1064, 16
    %v1066 = vadd.s32 %v1065, %v1063
    %v1067 = vsel %vm387, %v881, 2147483647
    %v1068 = vand.u32 %v1067, 65535
    %v1069 = vshra.s32 %v1067, 16
    %v1070 = vcvt.s32.f32 %v1068
    %v1071 = vcvt.s32.f32 %v1069
    %1072 = vmin.xlane.f32.xlu0 %v1071
    %v1073 = vpop.xlane.xlu0 %1072
    %vm1074 = vcmp.eq.f32.partialorder %v1071, %v1073
    %v1075 = vsel %vm1074, %v1070, inf
    %1076 = vmin.xlane.f32.xlu0 %v1075
    %v1077 = vpop.xlane.xlu0 %1076
    %v1078 = vcvt.f32.s32 %v1077
    %v1079 = vcvt.f32.s32 %v1073
    %v1080 = vshll.u32 %v1079, 16
    %v1081 = vadd.s32 %v1080, %v1078
    %v1082 = vsel %vm387, %v882, 2147483647
    %v1083 = vand.u32 %v1082, 65535
    %v1084 = vshra.s32 %v1082, 16
    %v1085 = vcvt.s32.f32 %v1083
    %v1086 = vcvt.s32.f32 %v1084
    %1087 = vmin.xlane.f32.xlu0 %v1086
    %v1088 = vpop.xlane.xlu0 %1087
    %vm1089 = vcmp.eq.f32.partialorder %v1086, %v1088
    %v1090 = vsel %vm1089, %v1085, inf
    %1091 = vmin.xlane.f32.xlu0 %v1090
    %v1092 = vpop.xlane.xlu0 %1091
    %v1093 = vcvt.f32.s32 %v1092
    %v1094 = vcvt.f32.s32 %v1088
    %v1095 = vshll.u32 %v1094, 16
    %v1096 = vadd.s32 %v1095, %v1093
    %v1097 = vsel %vm387, %v883, 2147483647
    %v1098 = vand.u32 %v1097, 65535
    %v1099 = vshra.s32 %v1097, 16
    %v1100 = vcvt.s32.f32 %v1098
    %v1101 = vcvt.s32.f32 %v1099
    %1102 = vmin.xlane.f32.xlu0 %v1101
    %v1103 = vpop.xlane.xlu0 %1102
    %vm1104 = vcmp.eq.f32.partialorder %v1101, %v1103
    %v1105 = vsel %vm1104, %v1100, inf
    %1106 = vmin.xlane.f32.xlu0 %v1105
    %v1107 = vpop.xlane.xlu0 %1106
    %v1108 = vcvt.f32.s32 %v1107
    %v1109 = vcvt.f32.s32 %v1103
    %v1110 = vshll.u32 %v1109, 16
    %v1111 = vadd.s32 %v1110, %v1108
    %v1112 = vsel %vm387, %v884, 2147483647
    %v1113 = vand.u32 %v1112, 65535
    %v1114 = vshra.s32 %v1112, 16
    %v1115 = vcvt.s32.f32 %v1113
    %v1116 = vcvt.s32.f32 %v1114
    %1117 = vmin.xlane.f32.xlu0 %v1116
    %v1118 = vpop.xlane.xlu0 %1117
    %vm1119 = vcmp.eq.f32.partialorder %v1116, %v1118
    %v1120 = vsel %vm1119, %v1115, inf
    %1121 = vmin.xlane.f32.xlu0 %v1120
    %v1122 = vpop.xlane.xlu0 %1121
    %v1123 = vcvt.f32.s32 %v1122
    %v1124 = vcvt.f32.s32 %v1118
    %v1125 = vshll.u32 %v1124, 16
    %v1126 = vadd.s32 %v1125, %v1123
    %v1127 = vsel %vm387, %v885, 2147483647
    %v1128 = vand.u32 %v1127, 65535
    %v1129 = vshra.s32 %v1127, 16
    %v1130 = vcvt.s32.f32 %v1128
    %v1131 = vcvt.s32.f32 %v1129
    %1132 = vmin.xlane.f32.xlu0 %v1131
    %v1133 = vpop.xlane.xlu0 %1132
    %vm1134 = vcmp.eq.f32.partialorder %v1131, %v1133
    %v1135 = vsel %vm1134, %v1130, inf
    %1136 = vmin.xlane.f32.xlu0 %v1135
    %v1137 = vpop.xlane.xlu0 %1136
    %v1138 = vcvt.f32.s32 %v1137
    %v1139 = vcvt.f32.s32 %v1133
    %v1140 = vshll.u32 %v1139, 16
    %v1141 = vadd.s32 %v1140, %v1138
    %v1142 = vsel %vm387, %v886, 2147483647
    %v1143 = vand.u32 %v1142, 65535
    %v1144 = vshra.s32 %v1142, 16
    %v1145 = vcvt.s32.f32 %v1143
    %v1146 = vcvt.s32.f32 %v1144
    %1147 = vmin.xlane.f32.xlu0 %v1146
    %v1148 = vpop.xlane.xlu0 %1147
    %vm1149 = vcmp.eq.f32.partialorder %v1146, %v1148
    %v1150 = vsel %vm1149, %v1145, inf
    %1151 = vmin.xlane.f32.xlu0 %v1150
    %v1152 = vpop.xlane.xlu0 %1151
    %v1153 = vcvt.f32.s32 %v1152
    %v1154 = vcvt.f32.s32 %v1148
    %v1155 = vshll.u32 %v1154, 16
    %v1156 = vadd.s32 %v1155, %v1153
    %v1157 = vsel %vm387, %v887, 2147483647
    %v1158 = vand.u32 %v1157, 65535
    %v1159 = vshra.s32 %v1157, 16
    %v1160 = vcvt.s32.f32 %v1158
    %v1161 = vcvt.s32.f32 %v1159
    %1162 = vmin.xlane.f32.xlu0 %v1161
    %v1163 = vpop.xlane.xlu0 %1162
    %vm1164 = vcmp.eq.f32.partialorder %v1161, %v1163
    %v1165 = vsel %vm1164, %v1160, inf
    %1166 = vmin.xlane.f32.xlu0 %v1165
    %v1167 = vpop.xlane.xlu0 %1166
    %v1168 = vcvt.f32.s32 %v1167
    %v1169 = vcvt.f32.s32 %v1163
    %v1170 = vshll.u32 %v1169, 16
    %v1171 = vadd.s32 %v1170, %v1168
    %v1172 = vsel %vm387, %v888, 2147483647
    %v1173 = vand.u32 %v1172, 65535
    %v1174 = vshra.s32 %v1172, 16
    %v1175 = vcvt.s32.f32 %v1173
    %v1176 = vcvt.s32.f32 %v1174
    %1177 = vmin.xlane.f32.xlu0 %v1176
    %v1178 = vpop.xlane.xlu0 %1177
    %vm1179 = vcmp.eq.f32.partialorder %v1176, %v1178
    %v1180 = vsel %vm1179, %v1175, inf
    %1181 = vmin.xlane.f32.xlu0 %v1180
    %v1182 = vpop.xlane.xlu0 %1181
    %v1183 = vcvt.f32.s32 %v1182
    %v1184 = vcvt.f32.s32 %v1178
    %v1185 = vshll.u32 %v1184, 16
    %v1186 = vadd.s32 %v1185, %v1183
    %v1187 = vsel %vm387, %v889, 2147483647
    %v1188 = vand.u32 %v1187, 65535
    %v1189 = vshra.s32 %v1187, 16
    %v1190 = vcvt.s32.f32 %v1188
    %v1191 = vcvt.s32.f32 %v1189
    %1192 = vmin.xlane.f32.xlu0 %v1191
    %v1193 = vpop.xlane.xlu0 %1192
    %vm1194 = vcmp.eq.f32.partialorder %v1191, %v1193
    %v1195 = vsel %vm1194, %v1190, inf
    %1196 = vmin.xlane.f32.xlu0 %v1195
    %v1197 = vpop.xlane.xlu0 %1196
    %v1198 = vcvt.f32.s32 %v1197
    %v1199 = vcvt.f32.s32 %v1193
    %v1200 = vshll.u32 %v1199, 16
    %v1201 = vadd.s32 %v1200, %v1198
    %v1202 = vsel %vm387, %v890, 2147483647
    %v1203 = vand.u32 %v1202, 65535
    %v1204 = vshra.s32 %v1202, 16
    %v1205 = vcvt.s32.f32 %v1203
    %v1206 = vcvt.s32.f32 %v1204
    %1207 = vmin.xlane.f32.xlu0 %v1206
    %v1208 = vpop.xlane.xlu0 %1207
    %vm1209 = vcmp.eq.f32.partialorder %v1206, %v1208
    %v1210 = vsel %vm1209, %v1205, inf
    %1211 = vmin.xlane.f32.xlu0 %v1210
    %v1212 = vpop.xlane.xlu0 %1211
    %v1213 = vcvt.f32.s32 %v1212
    %v1214 = vcvt.f32.s32 %v1208
    %v1215 = vshll.u32 %v1214, 16
    %v1216 = vadd.s32 %v1215, %v1213
    %v1217 = vsel %vm387, %v891, 2147483647
    %v1218 = vand.u32 %v1217, 65535
    %v1219 = vshra.s32 %v1217, 16
    %v1220 = vcvt.s32.f32 %v1218
    %v1221 = vcvt.s32.f32 %v1219
    %1222 = vmin.xlane.f32.xlu0 %v1221
    %v1223 = vpop.xlane.xlu0 %1222
    %vm1224 = vcmp.eq.f32.partialorder %v1221, %v1223
    %v1225 = vsel %vm1224, %v1220, inf
    %1226 = vmin.xlane.f32.xlu0 %v1225
    %v1227 = vpop.xlane.xlu0 %1226
    %v1228 = vcvt.f32.s32 %v1227
    %v1229 = vcvt.f32.s32 %v1223
    %v1230 = vshll.u32 %v1229, 16
    %v1231 = vadd.s32 %v1230, %v1228
    %v1232 = vsel %vm387, %v892, 2147483647
    %v1233 = vand.u32 %v1232, 65535
    %v1234 = vshra.s32 %v1232, 16
    %v1235 = vcvt.s32.f32 %v1233
    %v1236 = vcvt.s32.f32 %v1234
    %1237 = vmin.xlane.f32.xlu0 %v1236
    %v1238 = vpop.xlane.xlu0 %1237
    %vm1239 = vcmp.eq.f32.partialorder %v1236, %v1238
    %v1240 = vsel %vm1239, %v1235, inf
    %1241 = vmin.xlane.f32.xlu0 %v1240
    %v1242 = vpop.xlane.xlu0 %1241
    %v1243 = vcvt.f32.s32 %v1242
    %v1244 = vcvt.f32.s32 %v1238
    %v1245 = vshll.u32 %v1244, 16
    %v1246 = vadd.s32 %v1245, %v1243
    %v1247 = vsel %vm387, %v893, 2147483647
    %v1248 = vand.u32 %v1247, 65535
    %v1249 = vshra.s32 %v1247, 16
    %v1250 = vcvt.s32.f32 %v1248
    %v1251 = vcvt.s32.f32 %v1249
    %1252 = vmin.xlane.f32.xlu0 %v1251
    %v1253 = vpop.xlane.xlu0 %1252
    %vm1254 = vcmp.eq.f32.partialorder %v1251, %v1253
    %v1255 = vsel %vm1254, %v1250, inf
    %1256 = vmin.xlane.f32.xlu0 %v1255
    %v1257 = vpop.xlane.xlu0 %1256
    %v1258 = vcvt.f32.s32 %v1257
    %v1259 = vcvt.f32.s32 %v1253
    %v1260 = vshll.u32 %v1259, 16
    %v1261 = vadd.s32 %v1260, %v1258
    %v1262 = vsel %vm387, %v894, 2147483647
    %v1263 = vand.u32 %v1262, 65535
    %v1264 = vshra.s32 %v1262, 16
    %v1265 = vcvt.s32.f32 %v1263
    %v1266 = vcvt.s32.f32 %v1264
    %1267 = vmin.xlane.f32.xlu0 %v1266
    %v1268 = vpop.xlane.xlu0 %1267
    %vm1269 = vcmp.eq.f32.partialorder %v1266, %v1268
    %v1270 = vsel %vm1269, %v1265, inf
    %1271 = vmin.xlane.f32.xlu0 %v1270
    %v1272 = vpop.xlane.xlu0 %1271
    %v1273 = vcvt.f32.s32 %v1272
    %v1274 = vcvt.f32.s32 %v1268
    %v1275 = vshll.u32 %v1274, 16
    %v1276 = vadd.s32 %v1275, %v1273
    %v1277 = vsel %vm387, %v895, 2147483647
    %v1278 = vand.u32 %v1277, 65535
    %v1279 = vshra.s32 %v1277, 16
    %v1280 = vcvt.s32.f32 %v1278
    %v1281 = vcvt.s32.f32 %v1279
    %1282 = vmin.xlane.f32.xlu0 %v1281
    %v1283 = vpop.xlane.xlu0 %1282
    %vm1284 = vcmp.eq.f32.partialorder %v1281, %v1283
    %v1285 = vsel %vm1284, %v1280, inf
    %1286 = vmin.xlane.f32.xlu0 %v1285
    %v1287 = vpop.xlane.xlu0 %1286
    %v1288 = vcvt.f32.s32 %v1287
    %v1289 = vcvt.f32.s32 %v1283
    %v1290 = vshll.u32 %v1289, 16
    %v1291 = vadd.s32 %v1290, %v1288
    %v1292 = vsel %vm387, %v896, 2147483647
    %v1293 = vand.u32 %v1292, 65535
    %v1294 = vshra.s32 %v1292, 16
    %v1295 = vcvt.s32.f32 %v1293
    %v1296 = vcvt.s32.f32 %v1294
    %1297 = vmin.xlane.f32.xlu0 %v1296
    %v1298 = vpop.xlane.xlu0 %1297
    %vm1299 = vcmp.eq.f32.partialorder %v1296, %v1298
    %v1300 = vsel %vm1299, %v1295, inf
    %1301 = vmin.xlane.f32.xlu0 %v1300
    %v1302 = vpop.xlane.xlu0 %1301
    %v1303 = vcvt.f32.s32 %v1302
    %v1304 = vcvt.f32.s32 %v1298
    %v1305 = vshll.u32 %v1304, 16
    %v1306 = vadd.s32 %v1305, %v1303
    %v1307 = vsel %vm387, %v897, 2147483647
    %v1308 = vand.u32 %v1307, 65535
    %v1309 = vshra.s32 %v1307, 16
    %v1310 = vcvt.s32.f32 %v1308
    %v1311 = vcvt.s32.f32 %v1309
    %1312 = vmin.xlane.f32.xlu0 %v1311
    %v1313 = vpop.xlane.xlu0 %1312
    %vm1314 = vcmp.eq.f32.partialorder %v1311, %v1313
    %v1315 = vsel %vm1314, %v1310, inf
    %1316 = vmin.xlane.f32.xlu0 %v1315
    %v1317 = vpop.xlane.xlu0 %1316
    %v1318 = vcvt.f32.s32 %v1317
    %v1319 = vcvt.f32.s32 %v1313
    %v1320 = vshll.u32 %v1319, 16
    %v1321 = vadd.s32 %v1320, %v1318
    %v1322 = vsel %vm387, %v898, 2147483647
    %v1323 = vand.u32 %v1322, 65535
    %v1324 = vshra.s32 %v1322, 16
    %v1325 = vcvt.s32.f32 %v1323
    %v1326 = vcvt.s32.f32 %v1324
    %1327 = vmin.xlane.f32.xlu0 %v1326
    %v1328 = vpop.xlane.xlu0 %1327
    %vm1329 = vcmp.eq.f32.partialorder %v1326, %v1328
    %v1330 = vsel %vm1329, %v1325, inf
    %1331 = vmin.xlane.f32.xlu0 %v1330
    %v1332 = vpop.xlane.xlu0 %1331
    %v1333 = vcvt.f32.s32 %v1332
    %v1334 = vcvt.f32.s32 %v1328
    %v1335 = vshll.u32 %v1334, 16
    %v1336 = vadd.s32 %v1335, %v1333
    %v1337 = vsel %vm387, %v899, 2147483647
    %v1338 = vand.u32 %v1337, 65535
    %v1339 = vshra.s32 %v1337, 16
    %v1340 = vcvt.s32.f32 %v1338
    %v1341 = vcvt.s32.f32 %v1339
    %1342 = vmin.xlane.f32.xlu0 %v1341
    %v1343 = vpop.xlane.xlu0 %1342
    %vm1344 = vcmp.eq.f32.partialorder %v1341, %v1343
    %v1345 = vsel %vm1344, %v1340, inf
    %1346 = vmin.xlane.f32.xlu0 %v1345
    %v1347 = vpop.xlane.xlu0 %1346
    %v1348 = vcvt.f32.s32 %v1347
    %v1349 = vcvt.f32.s32 %v1343
    %v1350 = vshll.u32 %v1349, 16
    %v1351 = vadd.s32 %v1350, %v1348
    %v1352 = vsel %vm387, %v900, 2147483647
    %v1353 = vand.u32 %v1352, 65535
    %v1354 = vshra.s32 %v1352, 16
    %v1355 = vcvt.s32.f32 %v1353
    %v1356 = vcvt.s32.f32 %v1354
    %1357 = vmin.xlane.f32.xlu0 %v1356
    %v1358 = vpop.xlane.xlu0 %1357
    %vm1359 = vcmp.eq.f32.partialorder %v1356, %v1358
    %v1360 = vsel %vm1359, %v1355, inf
    %1361 = vmin.xlane.f32.xlu0 %v1360
    %v1362 = vpop.xlane.xlu0 %1361
    %v1363 = vcvt.f32.s32 %v1362
    %v1364 = vcvt.f32.s32 %v1358
    %v1365 = vshll.u32 %v1364, 16
    %v1366 = vadd.s32 %v1365, %v1363
    %v1367 = vsel %vm387, %v901, 2147483647
    %v1368 = vand.u32 %v1367, 65535
    %v1369 = vshra.s32 %v1367, 16
    %v1370 = vcvt.s32.f32 %v1368
    %v1371 = vcvt.s32.f32 %v1369
    %1372 = vmin.xlane.f32.xlu0 %v1371
    %v1373 = vpop.xlane.xlu0 %1372
    %vm1374 = vcmp.eq.f32.partialorder %v1371, %v1373
    %v1375 = vsel %vm1374, %v1370, inf
    %1376 = vmin.xlane.f32.xlu0 %v1375
    %v1377 = vpop.xlane.xlu0 %1376
    %v1378 = vcvt.f32.s32 %v1377
    %v1379 = vcvt.f32.s32 %v1373
    %v1380 = vshll.u32 %v1379, 16
    %v1381 = vadd.s32 %v1380, %v1378
    %s1382 = smul.u32 0, 256
    %v1383 = vlaneseq
    %v1384 = vshrl.u32 %v1383, 7
    %v1385 = vadd.s32 %v1384, 8
    %v1386 = vadd.s32 %v1384, 16
    %v1387 = vadd.s32 %v1384, 24
    %v1388 = vadd.s32 %v1384, 32
    %v1389 = vadd.s32 %v1384, 40
    %v1390 = vadd.s32 %v1384, 48
    %v1391 = vadd.s32 %v1384, 56
    %v1392 = vadd.s32 %v1384, 64
    %v1393 = vadd.s32 %v1384, 72
    %v1394 = vadd.s32 %v1384, 80
    %v1395 = vadd.s32 %v1384, 88
    %v1396 = vadd.s32 %v1384, 96
    %v1397 = vadd.s32 %v1384, 104
    %v1398 = vadd.s32 %v1384, 112
    %v1399 = vadd.s32 %v1384, 120
    %v1400 = vadd.s32 %v1384, 128
    %v1401 = vadd.s32 %v1384, 136
    %v1402 = vadd.s32 %v1384, 144
    %v1403 = vadd.s32 %v1384, 152
    %v1404 = vadd.s32 %v1384, 160
    %v1405 = vadd.s32 %v1384, 168
    %v1406 = vadd.s32 %v1384, 176
    %v1407 = vadd.s32 %v1384, 184
    %v1408 = vadd.s32 %v1384, 192
    %v1409 = vadd.s32 %v1384, 200
    %v1410 = vadd.s32 %v1384, 208
    %v1411 = vadd.s32 %v1384, 216
    %v1412 = vadd.s32 %v1384, 224
    %v1413 = vadd.s32 %v1384, 232
    %v1414 = vadd.s32 %v1384, 240
    %v1415 = vadd.s32 %v1384, 248
    %v1416 = vstv %s1382
    %v1417 = vadd.s32 %v1416, %v1384
    %v1418 = vadd.s32 %v1416, %v1385
    %v1419 = vadd.s32 %v1416, %v1386
    %v1420 = vadd.s32 %v1416, %v1387
    %v1421 = vadd.s32 %v1416, %v1388
    %v1422 = vadd.s32 %v1416, %v1389
    %v1423 = vadd.s32 %v1416, %v1390
    %v1424 = vadd.s32 %v1416, %v1391
    %v1425 = vadd.s32 %v1416, %v1392
    %v1426 = vadd.s32 %v1416, %v1393
    %v1427 = vadd.s32 %v1416, %v1394
    %v1428 = vadd.s32 %v1416, %v1395
    %v1429 = vadd.s32 %v1416, %v1396
    %v1430 = vadd.s32 %v1416, %v1397
    %v1431 = vadd.s32 %v1416, %v1398
    %v1432 = vadd.s32 %v1416, %v1399
    %v1433 = vadd.s32 %v1416, %v1400
    %v1434 = vadd.s32 %v1416, %v1401
    %v1435 = vadd.s32 %v1416, %v1402
    %v1436 = vadd.s32 %v1416, %v1403
    %v1437 = vadd.s32 %v1416, %v1404
    %v1438 = vadd.s32 %v1416, %v1405
    %v1439 = vadd.s32 %v1416, %v1406
    %v1440 = vadd.s32 %v1416, %v1407
    %v1441 = vadd.s32 %v1416, %v1408
    %v1442 = vadd.s32 %v1416, %v1409
    %v1443 = vadd.s32 %v1416, %v1410
    %v1444 = vadd.s32 %v1416, %v1411
    %v1445 = vadd.s32 %v1416, %v1412
    %v1446 = vadd.s32 %v1416, %v1413
    %v1447 = vadd.s32 %v1416, %v1414
    %v1448 = vadd.s32 %v1416, %v1415
    %vm1449 = vcmp.lt.s32.totalorder %v1417, 16
    %vm1450 = vcmp.lt.s32.totalorder %v1418, 16
    %vm1451 = vcmp.lt.s32.totalorder %v1419, 16
    %vm1452 = vcmp.lt.s32.totalorder %v1420, 16
    %vm1453 = vcmp.lt.s32.totalorder %v1421, 16
    %vm1454 = vcmp.lt.s32.totalorder %v1422, 16
    %vm1455 = vcmp.lt.s32.totalorder %v1423, 16
    %vm1456 = vcmp.lt.s32.totalorder %v1424, 16
    %vm1457 = vcmp.lt.s32.totalorder %v1425, 16
    %vm1458 = vcmp.lt.s32.totalorder %v1426, 16
    %vm1459 = vcmp.lt.s32.totalorder %v1427, 16
    %vm1460 = vcmp.lt.s32.totalorder %v1428, 16
    %vm1461 = vcmp.lt.s32.totalorder %v1429, 16
    %vm1462 = vcmp.lt.s32.totalorder %v1430, 16
    %vm1463 = vcmp.lt.s32.totalorder %v1431, 16
    %vm1464 = vcmp.lt.s32.totalorder %v1432, 16
    %vm1465 = vcmp.lt.s32.totalorder %v1433, 16
    %vm1466 = vcmp.lt.s32.totalorder %v1434, 16
    %vm1467 = vcmp.lt.s32.totalorder %v1435, 16
    %vm1468 = vcmp.lt.s32.totalorder %v1436, 16
    %vm1469 = vcmp.lt.s32.totalorder %v1437, 16
    %vm1470 = vcmp.lt.s32.totalorder %v1438, 16
    %vm1471 = vcmp.lt.s32.totalorder %v1439, 16
    %vm1472 = vcmp.lt.s32.totalorder %v1440, 16
    %vm1473 = vcmp.lt.s32.totalorder %v1441, 16
    %vm1474 = vcmp.lt.s32.totalorder %v1442, 16
    %vm1475 = vcmp.lt.s32.totalorder %v1443, 16
    %vm1476 = vcmp.lt.s32.totalorder %v1444, 16
    %vm1477 = vcmp.lt.s32.totalorder %v1445, 16
    %vm1478 = vcmp.lt.s32.totalorder %v1446, 16
    %vm1479 = vcmp.lt.s32.totalorder %v1447, 16
    %vm1480 = vcmp.lt.s32.totalorder %v1448, 16
    %v1481 = vsel %vm1449, 1, 0
    %v1482 = vsel %vm1450, 1, 0
    %v1483 = vsel %vm1451, 1, 0
    %v1484 = vsel %vm1452, 1, 0
    %v1485 = vsel %vm1453, 1, 0
    %v1486 = vsel %vm1454, 1, 0
    %v1487 = vsel %vm1455, 1, 0
    %v1488 = vsel %vm1456, 1, 0
    %v1489 = vsel %vm1457, 1, 0
    %v1490 = vsel %vm1458, 1, 0
    %v1491 = vsel %vm1459, 1, 0
    %v1492 = vsel %vm1460, 1, 0
    %v1493 = vsel %vm1461, 1, 0
    %v1494 = vsel %vm1462, 1, 0
    %v1495 = vsel %vm1463, 1, 0
    %v1496 = vsel %vm1464, 1, 0
    %v1497 = vsel %vm1465, 1, 0
    %v1498 = vsel %vm1466, 1, 0
    %v1499 = vsel %vm1467, 1, 0
    %v1500 = vsel %vm1468, 1, 0
    %v1501 = vsel %vm1469, 1, 0
    %v1502 = vsel %vm1470, 1, 0
    %v1503 = vsel %vm1471, 1, 0
    %v1504 = vsel %vm1472, 1, 0
    %v1505 = vsel %vm1473, 1, 0
    %v1506 = vsel %vm1474, 1, 0
    %v1507 = vsel %vm1475, 1, 0
    %v1508 = vsel %vm1476, 1, 0
    %v1509 = vsel %vm1477, 1, 0
    %v1510 = vsel %vm1478, 1, 0
    %v1511 = vsel %vm1479, 1, 0
    %v1512 = vsel %vm1480, 1, 0
    %v1513 = vcvt.s32.f32 %v1481
    %v1514 = vcvt.s32.f32 %v1482
    %v1515 = vcvt.s32.f32 %v1483
    %v1516 = vcvt.s32.f32 %v1484
    %v1517 = vcvt.s32.f32 %v1485
    %v1518 = vcvt.s32.f32 %v1486
    %v1519 = vcvt.s32.f32 %v1487
    %v1520 = vcvt.s32.f32 %v1488
    %v1521 = vcvt.s32.f32 %v1489
    %v1522 = vcvt.s32.f32 %v1490
    %v1523 = vcvt.s32.f32 %v1491
    %v1524 = vcvt.s32.f32 %v1492
    %v1525 = vcvt.s32.f32 %v1493
    %v1526 = vcvt.s32.f32 %v1494
    %v1527 = vcvt.s32.f32 %v1495
    %v1528 = vcvt.s32.f32 %v1496
    %v1529 = vcvt.s32.f32 %v1497
    %v1530 = vcvt.s32.f32 %v1498
    %v1531 = vcvt.s32.f32 %v1499
    %v1532 = vcvt.s32.f32 %v1500
    %v1533 = vcvt.s32.f32 %v1501
    %v1534 = vcvt.s32.f32 %v1502
    %v1535 = vcvt.s32.f32 %v1503
    %v1536 = vcvt.s32.f32 %v1504
    %v1537 = vcvt.s32.f32 %v1505
    %v1538 = vcvt.s32.f32 %v1506
    %v1539 = vcvt.s32.f32 %v1507
    %v1540 = vcvt.s32.f32 %v1508
    %v1541 = vcvt.s32.f32 %v1509
    %v1542 = vcvt.s32.f32 %v1510
    %v1543 = vcvt.s32.f32 %v1511
    %v1544 = vcvt.s32.f32 %v1512
    %vm1545 = vcmask 7168
    %1546 = vst.msk [vmem:[%s3] sm:$0xff] %vm1545, %v742
    %1547 = vst.msk [vmem:[%s3 + $0x8] sm:$0xff] %vm1545, %v745
    %1548 = vst.msk [vmem:[%s3 + $0x10] sm:$0xff] %vm1545, %v748
    %1549 = vst.msk [vmem:[%s3 + $0x18] sm:$0xff] %vm1545, %v751
    %1550 = vst.msk [vmem:[%s3 + $0x20] sm:$0xff] %vm1545, %v754
    %1551 = vst.msk [vmem:[%s3 + $0x28] sm:$0xff] %vm1545, %v757
    %1552 = vst.msk [vmem:[%s3 + $0x30] sm:$0xff] %vm1545, %v760
    %1553 = vst.msk [vmem:[%s3 + $0x38] sm:$0xff] %vm1545, %v763
    %1554 = vst.msk [vmem:[%s3 + $0x40] sm:$0xff] %vm1545, %v766
    %1555 = vst.msk [vmem:[%s3 + $0x48] sm:$0xff] %vm1545, %v769
    %1556 = vst.msk [vmem:[%s3 + $0x50] sm:$0xff] %vm1545, %v772
    %1557 = vst.msk [vmem:[%s3 + $0x58] sm:$0xff] %vm1545, %v775
    %1558 = vst.msk [vmem:[%s3 + $0x60] sm:$0xff] %vm1545, %v778
    %1559 = vst.msk [vmem:[%s3 + $0x68] sm:$0xff] %vm1545, %v781
    %1560 = vst.msk [vmem:[%s3 + $0x70] sm:$0xff] %vm1545, %v784
    %1561 = vst.msk [vmem:[%s3 + $0x78] sm:$0xff] %vm1545, %v787
    %1562 = vst.msk [vmem:[%s3 + $0x80] sm:$0xff] %vm1545, %v790
    %1563 = vst.msk [vmem:[%s3 + $0x88] sm:$0xff] %vm1545, %v793
    %1564 = vst.msk [vmem:[%s3 + $0x90] sm:$0xff] %vm1545, %v796
    %1565 = vst.msk [vmem:[%s3 + $0x98] sm:$0xff] %vm1545, %v799
    %1566 = vst.msk [vmem:[%s3 + $0xa0] sm:$0xff] %vm1545, %v802
    %1567 = vst.msk [vmem:[%s3 + $0xa8] sm:$0xff] %vm1545, %v805
    %1568 = vst.msk [vmem:[%s3 + $0xb0] sm:$0xff] %vm1545, %v808
    %1569 = vst.msk [vmem:[%s3 + $0xb8] sm:$0xff] %vm1545, %v811
    %1570 = vst.msk [vmem:[%s3 + $0xc0] sm:$0xff] %vm1545, %v814
    %1571 = vst.msk [vmem:[%s3 + $0xc8] sm:$0xff] %vm1545, %v817
    %1572 = vst.msk [vmem:[%s3 + $0xd0] sm:$0xff] %vm1545, %v820
    %1573 = vst.msk [vmem:[%s3 + $0xd8] sm:$0xff] %vm1545, %v823
    %1574 = vst.msk [vmem:[%s3 + $0xe0] sm:$0xff] %vm1545, %v826
    %1575 = vst.msk [vmem:[%s3 + $0xe8] sm:$0xff] %vm1545, %v829
    %1576 = vst.msk [vmem:[%s3 + $0xf0] sm:$0xff] %vm1545, %v832
    %1577 = vst.msk [vmem:[%s3 + $0xf8] sm:$0xff] %vm1545, %v835
    %1578 = vst.msk [vmem:[%s4] sm:$0xff] %vm1545, %v916
    %1579 = vst.msk [vmem:[%s4 + $0x8] sm:$0xff] %vm1545, %v931
    %1580 = vst.msk [vmem:[%s4 + $0x10] sm:$0xff] %vm1545, %v946
    %1581 = vst.msk [vmem:[%s4 + $0x18] sm:$0xff] %vm1545, %v961
    %1582 = vst.msk [vmem:[%s4 + $0x20] sm:$0xff] %vm1545, %v976
    %1583 = vst.msk [vmem:[%s4 + $0x28] sm:$0xff] %vm1545, %v991
    %1584 = vst.msk [vmem:[%s4 + $0x30] sm:$0xff] %vm1545, %v1006
    %1585 = vst.msk [vmem:[%s4 + $0x38] sm:$0xff] %vm1545, %v1021
    %1586 = vst.msk [vmem:[%s4 + $0x40] sm:$0xff] %vm1545, %v1036
    %1587 = vst.msk [vmem:[%s4 + $0x48] sm:$0xff] %vm1545, %v1051
    %1588 = vst.msk [vmem:[%s4 + $0x50] sm:$0xff] %vm1545, %v1066
    %1589 = vst.msk [vmem:[%s4 + $0x58] sm:$0xff] %vm1545, %v1081
    %1590 = vst.msk [vmem:[%s4 + $0x60] sm:$0xff] %vm1545, %v1096
    %1591 = vst.msk [vmem:[%s4 + $0x68] sm:$0xff] %vm1545, %v1111
    %1592 = vst.msk [vmem:[%s4 + $0x70] sm:$0xff] %vm1545, %v1126
    %1593 = vst.msk [vmem:[%s4 + $0x78] sm:$0xff] %vm1545, %v1141
    %1594 = vst.msk [vmem:[%s4 + $0x80] sm:$0xff] %vm1545, %v1156
    %1595 = vst.msk [vmem:[%s4 + $0x88] sm:$0xff] %vm1545, %v1171
    %1596 = vst.msk [vmem:[%s4 + $0x90] sm:$0xff] %vm1545, %v1186
    %1597 = vst.msk [vmem:[%s4 + $0x98] sm:$0xff] %vm1545, %v1201
    %1598 = vst.msk [vmem:[%s4 + $0xa0] sm:$0xff] %vm1545, %v1216
    %1599 = vst.msk [vmem:[%s4 + $0xa8] sm:$0xff] %vm1545, %v1231
    %1600 = vst.msk [vmem:[%s4 + $0xb0] sm:$0xff] %vm1545, %v1246
    %1601 = vst.msk [vmem:[%s4 + $0xb8] sm:$0xff] %vm1545, %v1261
    %1602 = vst.msk [vmem:[%s4 + $0xc0] sm:$0xff] %vm1545, %v1276
    %1603 = vst.msk [vmem:[%s4 + $0xc8] sm:$0xff] %vm1545, %v1291
    %1604 = vst.msk [vmem:[%s4 + $0xd0] sm:$0xff] %vm1545, %v1306
    %1605 = vst.msk [vmem:[%s4 + $0xd8] sm:$0xff] %vm1545, %v1321
    %1606 = vst.msk [vmem:[%s4 + $0xe0] sm:$0xff] %vm1545, %v1336
    %1607 = vst.msk [vmem:[%s4 + $0xe8] sm:$0xff] %vm1545, %v1351
    %1608 = vst.msk [vmem:[%s4 + $0xf0] sm:$0xff] %vm1545, %v1366
    %1609 = vst.msk [vmem:[%s4 + $0xf8] sm:$0xff] %vm1545, %v1381
    %v1610 = vld [vmem:[%s5] sm:$0x1]
    %vm1611 = vcmp.eq.s32.totalorder %v837, %v916
    %vm1612 = vcmp.eq.s32.totalorder %v837, %v931
    %vm1613 = vcmp.eq.s32.totalorder %v837, %v946
    %vm1614 = vcmp.eq.s32.totalorder %v837, %v961
    %vm1615 = vcmp.eq.s32.totalorder %v837, %v976
    %vm1616 = vcmp.eq.s32.totalorder %v837, %v991
    %vm1617 = vcmp.eq.s32.totalorder %v837, %v1006
    %vm1618 = vcmp.eq.s32.totalorder %v837, %v1021
    %vm1619 = vcmp.eq.s32.totalorder %v837, %v1036
    %vm1620 = vcmp.eq.s32.totalorder %v837, %v1051
    %vm1621 = vcmp.eq.s32.totalorder %v837, %v1066
    %vm1622 = vcmp.eq.s32.totalorder %v837, %v1081
    %vm1623 = vcmp.eq.s32.totalorder %v837, %v1096
    %vm1624 = vcmp.eq.s32.totalorder %v837, %v1111
    %vm1625 = vcmp.eq.s32.totalorder %v837, %v1126
    %vm1626 = vcmp.eq.s32.totalorder %v837, %v1141
    %vm1627 = vcmp.eq.s32.totalorder %v837, %v1156
    %vm1628 = vcmp.eq.s32.totalorder %v837, %v1171
    %vm1629 = vcmp.eq.s32.totalorder %v837, %v1186
    %vm1630 = vcmp.eq.s32.totalorder %v837, %v1201
    %vm1631 = vcmp.eq.s32.totalorder %v837, %v1216
    %vm1632 = vcmp.eq.s32.totalorder %v837, %v1231
    %vm1633 = vcmp.eq.s32.totalorder %v837, %v1246
    %vm1634 = vcmp.eq.s32.totalorder %v837, %v1261
    %vm1635 = vcmp.eq.s32.totalorder %v837, %v1276
    %vm1636 = vcmp.eq.s32.totalorder %v837, %v1291
    %vm1637 = vcmp.eq.s32.totalorder %v837, %v1306
    %vm1638 = vcmp.eq.s32.totalorder %v837, %v1321
    %vm1639 = vcmp.eq.s32.totalorder %v837, %v1336
    %vm1640 = vcmp.eq.s32.totalorder %v837, %v1351
    %vm1641 = vcmp.eq.s32.totalorder %v837, %v1366
    %vm1642 = vcmp.eq.s32.totalorder %v837, %v1381
    %v1643 = vsel %vm1611, 1, 0
    %v1644 = vsel %vm1612, 1, 0
    %v1645 = vsel %vm1613, 1, 0
    %v1646 = vsel %vm1614, 1, 0
    %v1647 = vsel %vm1615, 1, 0
    %v1648 = vsel %vm1616, 1, 0
    %v1649 = vsel %vm1617, 1, 0
    %v1650 = vsel %vm1618, 1, 0
    %v1651 = vsel %vm1619, 1, 0
    %v1652 = vsel %vm1620, 1, 0
    %v1653 = vsel %vm1621, 1, 0
    %v1654 = vsel %vm1622, 1, 0
    %v1655 = vsel %vm1623, 1, 0
    %v1656 = vsel %vm1624, 1, 0
    %v1657 = vsel %vm1625, 1, 0
    %v1658 = vsel %vm1626, 1, 0
    %v1659 = vsel %vm1627, 1, 0
    %v1660 = vsel %vm1628, 1, 0
    %v1661 = vsel %vm1629, 1, 0
    %v1662 = vsel %vm1630, 1, 0
    %v1663 = vsel %vm1631, 1, 0
    %v1664 = vsel %vm1632, 1, 0
    %v1665 = vsel %vm1633, 1, 0
    %v1666 = vsel %vm1634, 1, 0
    %v1667 = vsel %vm1635, 1, 0
    %v1668 = vsel %vm1636, 1, 0
    %v1669 = vsel %vm1637, 1, 0
    %v1670 = vsel %vm1638, 1, 0
    %v1671 = vsel %vm1639, 1, 0
    %v1672 = vsel %vm1640, 1, 0
    %v1673 = vsel %vm1641, 1, 0
    %v1674 = vsel %vm1642, 1, 0
    %v1675 = vcvt.s32.f32 %v1643
    %v1676 = vcvt.s32.f32 %v1644
    %v1677 = vcvt.s32.f32 %v1645
    %v1678 = vcvt.s32.f32 %v1646
    %v1679 = vcvt.s32.f32 %v1647
    %v1680 = vcvt.s32.f32 %v1648
    %v1681 = vcvt.s32.f32 %v1649
    %v1682 = vcvt.s32.f32 %v1650
    %v1683 = vcvt.s32.f32 %v1651
    %v1684 = vcvt.s32.f32 %v1652
    %v1685 = vcvt.s32.f32 %v1653
    %v1686 = vcvt.s32.f32 %v1654
    %v1687 = vcvt.s32.f32 %v1655
    %v1688 = vcvt.s32.f32 %v1656
    %v1689 = vcvt.s32.f32 %v1657
    %v1690 = vcvt.s32.f32 %v1658
    %v1691 = vcvt.s32.f32 %v1659
    %v1692 = vcvt.s32.f32 %v1660
    %v1693 = vcvt.s32.f32 %v1661
    %v1694 = vcvt.s32.f32 %v1662
    %v1695 = vcvt.s32.f32 %v1663
    %v1696 = vcvt.s32.f32 %v1664
    %v1697 = vcvt.s32.f32 %v1665
    %v1698 = vcvt.s32.f32 %v1666
    %v1699 = vcvt.s32.f32 %v1667
    %v1700 = vcvt.s32.f32 %v1668
    %v1701 = vcvt.s32.f32 %v1669
    %v1702 = vcvt.s32.f32 %v1670
    %v1703 = vcvt.s32.f32 %v1671
    %v1704 = vcvt.s32.f32 %v1672
    %v1705 = vcvt.s32.f32 %v1673
    %v1706 = vcvt.s32.f32 %v1674
    %v1707 = vmul.f32 %v1675, %v1513
    %v1708 = vmul.f32 %v1676, %v1514
    %v1709 = vmul.f32 %v1677, %v1515
    %v1710 = vmul.f32 %v1678, %v1516
    %v1711 = vmul.f32 %v1679, %v1517
    %v1712 = vmul.f32 %v1680, %v1518
    %v1713 = vmul.f32 %v1681, %v1519
    %v1714 = vmul.f32 %v1682, %v1520
    %v1715 = vmul.f32 %v1683, %v1521
    %v1716 = vmul.f32 %v1684, %v1522
    %v1717 = vmul.f32 %v1685, %v1523
    %v1718 = vmul.f32 %v1686, %v1524
    %v1719 = vmul.f32 %v1687, %v1525
    %v1720 = vmul.f32 %v1688, %v1526
    %v1721 = vmul.f32 %v1689, %v1527
    %v1722 = vmul.f32 %v1690, %v1528
    %v1723 = vmul.f32 %v1691, %v1529
    %v1724 = vmul.f32 %v1692, %v1530
    %v1725 = vmul.f32 %v1693, %v1531
    %v1726 = vmul.f32 %v1694, %v1532
    %v1727 = vmul.f32 %v1695, %v1533
    %v1728 = vmul.f32 %v1696, %v1534
    %v1729 = vmul.f32 %v1697, %v1535
    %v1730 = vmul.f32 %v1698, %v1536
    %v1731 = vmul.f32 %v1699, %v1537
    %v1732 = vmul.f32 %v1700, %v1538
    %v1733 = vmul.f32 %v1701, %v1539
    %v1734 = vmul.f32 %v1702, %v1540
    %v1735 = vmul.f32 %v1703, %v1541
    %v1736 = vmul.f32 %v1704, %v1542
    %v1737 = vmul.f32 %v1705, %v1543
    %v1738 = vmul.f32 %v1706, %v1544
    %v1739 = vsel %vm387, %v1707, 0.0
    %v1740 = vsel %vm387, %v1708, 0.0
    %v1741 = vadd.f32 %v1739, %v1740
    %v1742 = vsel %vm387, %v1709, 0.0
    %v1743 = vadd.f32 %v1741, %v1742
    %v1744 = vsel %vm387, %v1710, 0.0
    %v1745 = vadd.f32 %v1743, %v1744
    %v1746 = vsel %vm387, %v1711, 0.0
    %v1747 = vadd.f32 %v1745, %v1746
    %v1748 = vsel %vm387, %v1712, 0.0
    %v1749 = vadd.f32 %v1747, %v1748
    %v1750 = vsel %vm387, %v1713, 0.0
    %v1751 = vadd.f32 %v1749, %v1750
    %v1752 = vsel %vm387, %v1714, 0.0
    %v1753 = vadd.f32 %v1751, %v1752
    %v1754 = vsel %vm387, %v1715, 0.0
    %v1755 = vadd.f32 %v1753, %v1754
    %v1756 = vsel %vm387, %v1716, 0.0
    %v1757 = vadd.f32 %v1755, %v1756
    %v1758 = vsel %vm387, %v1717, 0.0
    %v1759 = vadd.f32 %v1757, %v1758
    %v1760 = vsel %vm387, %v1718, 0.0
    %v1761 = vadd.f32 %v1759, %v1760
    %v1762 = vsel %vm387, %v1719, 0.0
    %v1763 = vadd.f32 %v1761, %v1762
    %v1764 = vsel %vm387, %v1720, 0.0
    %v1765 = vadd.f32 %v1763, %v1764
    %v1766 = vsel %vm387, %v1721, 0.0
    %v1767 = vadd.f32 %v1765, %v1766
    %v1768 = vsel %vm387, %v1722, 0.0
    %v1769 = vadd.f32 %v1767, %v1768
    %v1770 = vsel %vm387, %v1723, 0.0
    %v1771 = vadd.f32 %v1769, %v1770
    %v1772 = vsel %vm387, %v1724, 0.0
    %v1773 = vadd.f32 %v1771, %v1772
    %v1774 = vsel %vm387, %v1725, 0.0
    %v1775 = vadd.f32 %v1773, %v1774
    %v1776 = vsel %vm387, %v1726, 0.0
    %v1777 = vadd.f32 %v1775, %v1776
    %v1778 = vsel %vm387, %v1727, 0.0
    %v1779 = vadd.f32 %v1777, %v1778
    %v1780 = vsel %vm387, %v1728, 0.0
    %v1781 = vadd.f32 %v1779, %v1780
    %v1782 = vsel %vm387, %v1729, 0.0
    %v1783 = vadd.f32 %v1781, %v1782
    %v1784 = vsel %vm387, %v1730, 0.0
    %v1785 = vadd.f32 %v1783, %v1784
    %v1786 = vsel %vm387, %v1731, 0.0
    %v1787 = vadd.f32 %v1785, %v1786
    %v1788 = vsel %vm387, %v1732, 0.0
    %v1789 = vadd.f32 %v1787, %v1788
    %v1790 = vsel %vm387, %v1733, 0.0
    %v1791 = vadd.f32 %v1789, %v1790
    %v1792 = vsel %vm387, %v1734, 0.0
    %v1793 = vadd.f32 %v1791, %v1792
    %v1794 = vsel %vm387, %v1735, 0.0
    %v1795 = vadd.f32 %v1793, %v1794
    %v1796 = vsel %vm387, %v1736, 0.0
    %v1797 = vadd.f32 %v1795, %v1796
    %v1798 = vsel %vm387, %v1737, 0.0
    %v1799 = vadd.f32 %v1797, %v1798
    %v1800 = vsel %vm387, %v1738, 0.0
    %v1801 = vadd.f32 %v1799, %v1800
    %v1802 = vrot.slane %v1801, 4
    %v1803 = vadd.f32 %v1801, %v1802
    %v1804 = vrot.slane %v1803, 2
    %v1805 = vadd.f32 %v1803, %v1804
    %v1806 = vrot.slane %v1805, 1
    %v1807 = vadd.f32 %v1805, %v1806
    %v1808 = vadd.f32 %v1610, %v1807
    %vm1809 = vcmask 24576
    %1810 = vst.msk [vmem:[%s5] sm:$0x1] %vm1809, %v1808
    %v1811 = vld [vmem:[#allocation2] sm:$0x1]
    %v1812 = vmul.f32 %v677, %v1513
    %v1813 = vmul.f32 %v679, %v1514
    %v1814 = vmul.f32 %v681, %v1515
    %v1815 = vmul.f32 %v683, %v1516
    %v1816 = vmul.f32 %v685, %v1517
    %v1817 = vmul.f32 %v687, %v1518
    %v1818 = vmul.f32 %v689, %v1519
    %v1819 = vmul.f32 %v691, %v1520
    %v1820 = vmul.f32 %v693, %v1521
    %v1821 = vmul.f32 %v695, %v1522
    %v1822 = vmul.f32 %v697, %v1523
    %v1823 = vmul.f32 %v699, %v1524
    %v1824 = vmul.f32 %v701, %v1525
    %v1825 = vmul.f32 %v703, %v1526
    %v1826 = vmul.f32 %v705, %v1527
    %v1827 = vmul.f32 %v707, %v1528
    %v1828 = vmul.f32 %v709, %v1529
    %v1829 = vmul.f32 %v711, %v1530
    %v1830 = vmul.f32 %v713, %v1531
    %v1831 = vmul.f32 %v715, %v1532
    %v1832 = vmul.f32 %v717, %v1533
    %v1833 = vmul.f32 %v719, %v1534
    %v1834 = vmul.f32 %v721, %v1535
    %v1835 = vmul.f32 %v723, %v1536
    %v1836 = vmul.f32 %v725, %v1537
    %v1837 = vmul.f32 %v727, %v1538
    %v1838 = vmul.f32 %v729, %v1539
    %v1839 = vmul.f32 %v731, %v1540
    %v1840 = vmul.f32 %v733, %v1541
    %v1841 = vmul.f32 %v735, %v1542
    %v1842 = vmul.f32 %v737, %v1543
    %v1843 = vmul.f32 %v739, %v1544
    %v1844 = vsel %vm387, %v1812, 0.0
    %v1845 = vsel %vm387, %v1813, 0.0
    %v1846 = vadd.f32 %v1844, %v1845
    %v1847 = vsel %vm387, %v1814, 0.0
    %v1848 = vadd.f32 %v1846, %v1847
    %v1849 = vsel %vm387, %v1815, 0.0
    %v1850 = vadd.f32 %v1848, %v1849
    %v1851 = vsel %vm387, %v1816, 0.0
    %v1852 = vadd.f32 %v1850, %v1851
    %v1853 = vsel %vm387, %v1817, 0.0
    %v1854 = vadd.f32 %v1852, %v1853
    %v1855 = vsel %vm387, %v1818, 0.0
    %v1856 = vadd.f32 %v1854, %v1855
    %v1857 = vsel %vm387, %v1819, 0.0
    %v1858 = vadd.f32 %v1856, %v1857
    %v1859 = vsel %vm387, %v1820, 0.0
    %v1860 = vadd.f32 %v1858, %v1859
    %v1861 = vsel %vm387, %v1821, 0.0
    %v1862 = vadd.f32 %v1860, %v1861
    %v1863 = vsel %vm387, %v1822, 0.0
    %v1864 = vadd.f32 %v1862, %v1863
    %v1865 = vsel %vm387, %v1823, 0.0
    %v1866 = vadd.f32 %v1864, %v1865
    %v1867 = vsel %vm387, %v1824, 0.0
    %v1868 = vadd.f32 %v1866, %v1867
    %v1869 = vsel %vm387, %v1825, 0.0
    %v1870 = vadd.f32 %v1868, %v1869
    %v1871 = vsel %vm387, %v1826, 0.0
    %v1872 = vadd.f32 %v1870, %v1871
    %v1873 = vsel %vm387, %v1827, 0.0
    %v1874 = vadd.f32 %v1872, %v1873
    %v1875 = vsel %vm387, %v1828, 0.0
    %v1876 = vadd.f32 %v1874, %v1875
    %v1877 = vsel %vm387, %v1829, 0.0
    %v1878 = vadd.f32 %v1876, %v1877
    %v1879 = vsel %vm387, %v1830, 0.0
    %v1880 = vadd.f32 %v1878, %v1879
    %v1881 = vsel %vm387, %v1831, 0.0
    %v1882 = vadd.f32 %v1880, %v1881
    %v1883 = vsel %vm387, %v1832, 0.0
    %v1884 = vadd.f32 %v1882, %v1883
    %v1885 = vsel %vm387, %v1833, 0.0
    %v1886 = vadd.f32 %v1884, %v1885
    %v1887 = vsel %vm387, %v1834, 0.0
    %v1888 = vadd.f32 %v1886, %v1887
    %v1889 = vsel %vm387, %v1835, 0.0
    %v1890 = vadd.f32 %v1888, %v1889
    %v1891 = vsel %vm387, %v1836, 0.0
    %v1892 = vadd.f32 %v1890, %v1891
    %v1893 = vsel %vm387, %v1837, 0.0
    %v1894 = vadd.f32 %v1892, %v1893
    %v1895 = vsel %vm387, %v1838, 0.0
    %v1896 = vadd.f32 %v1894, %v1895
    %v1897 = vsel %vm387, %v1839, 0.0
    %v1898 = vadd.f32 %v1896, %v1897
    %v1899 = vsel %vm387, %v1840, 0.0
    %v1900 = vadd.f32 %v1898, %v1899
    %v1901 = vsel %vm387, %v1841, 0.0
    %v1902 = vadd.f32 %v1900, %v1901
    %v1903 = vsel %vm387, %v1842, 0.0
    %v1904 = vadd.f32 %v1902, %v1903
    %v1905 = vsel %vm387, %v1843, 0.0
    %v1906 = vadd.f32 %v1904, %v1905
    %v1907 = vrot.slane %v1906, 4
    %v1908 = vadd.f32 %v1906, %v1907
    %v1909 = vrot.slane %v1908, 2
    %v1910 = vadd.f32 %v1908, %v1909
    %v1911 = vrot.slane %v1910, 1
    %v1912 = vadd.f32 %v1910, %v1911
    %v1913 = vadd.f32 %v1811, %v1912
    %1914 = vst.msk [vmem:[#allocation2] sm:$0x1] %vm1809, %v1913
    // Predicated region
    $region18: #{switch_feed_forward.2} parent=1 // pred_check
      _
    $region19: #{switch_feed_forward.2} parent=1 // pred_check_branch
      %1916 = sbr.rel (0) target = $region21
    $region20: #{switch_feed_forward.2} parent=1 // pred_region
      _
    $region21: #{switch_feed_forward.2} parent=1 // pred_fallthru
      _
    // Predicated region
    $region22: #{switch_feed_forward.2} parent=1 // pred_check
      _
    $region23: #{switch_feed_forward.2} parent=1 // pred_check_branch
      %1918 = sbr.rel (0) target = $region25
    $region24: #{switch_feed_forward.2} parent=1 // pred_region
      _
    $region25: #{switch_feed_forward.2} parent=1 // pred_fallthru
      _
    // Predicated region
    $region26: #{switch_feed_forward.2} parent=1 // pred_check
      _
    $region27: #{switch_feed_forward.2} parent=1 // pred_check_branch
      %1920 = sbr.rel (0) target = $region29
    $region28: #{switch_feed_forward.2} parent=1 // pred_region
      _
    $region29: #{switch_feed_forward.2} parent=1 // pred_fallthru
      _
    // Predicated region
    $region30: #{switch_feed_forward.2} parent=1 // pred_check
      _
    $region31: #{switch_feed_forward.2} parent=1 // pred_check_branch
      %1922 = sbr.rel (0) target = $region33
    $region32: #{switch_feed_forward.2} parent=1 // pred_region
      %s1924 = ssub.s32 16, 16
      %1925 = vsyncadd [#allocation3], %s1924
      %s1927 = sshll.u32 [#allocation2], 4
      %s1928 = int_to_ptr.vmem [resolvable:$true] %s1927
      %1930 = dma.vmem_to_hbm [thread:$0]  %s1928, 16, %s6, [#allocation3]
    $region33: #{switch_feed_forward.2} parent=1 // pred_fallthru
      _
    // Predicated region
    $region34: #{switch_feed_forward.2} parent=1 // pred_check
      _
    $region35: #{switch_feed_forward.2} parent=1 // pred_check_branch
      %1932 = sbr.rel (0) target = $region37
    $region36: #{switch_feed_forward.2} parent=1 // pred_region
      _
    $region37: #{switch_feed_forward.2} parent=1 // pred_fallthru
      _
    // Predicated region
    $region38: #{switch_feed_forward.2} parent=1 // pred_check
      _
    $region39: #{switch_feed_forward.2} parent=1 // pred_check_branch
      %1934 = sbr.rel (0) target = $region41
    $region40: #{switch_feed_forward.2} parent=1 // pred_region
      _
    $region41: #{switch_feed_forward.2} parent=1 // pred_fallthru
      _
    // Predicated region
    $region42: #{switch_feed_forward.2} parent=1 // pred_check
      _
    $region43: #{switch_feed_forward.2} parent=1 // pred_check_branch
      %1936 = sbr.rel (0) target = $region45
    $region44: #{switch_feed_forward.2} parent=1 // pred_region
      _
    $region45: #{switch_feed_forward.2} parent=1 // pred_fallthru
      _
    // Predicated region
    $region46: #{switch_feed_forward.2} parent=1 // pred_check
      _
    $region47: #{switch_feed_forward.2} parent=1 // pred_check_branch
      %1938 = sbr.rel (0) target = $region49
    $region48: #{switch_feed_forward.2} parent=1 // pred_region
      %1939 = dma.done [#allocation3], 16
    $region49: #{switch_feed_forward.2} parent=1 // pred_fallthru
      _
    %1940 = vsyncpa [#allocation3], 1

// kernel: switch_feed_forward.3
$region0: #{switch_feed_forward.3}
  #allocation0 [shape = 'u32[]', space=smem, size = 0x4, offset = 0x4, fixed_abs, tag = 'smem constant byte address 0x4 - core index']
  #allocation1 [shape = 'u32[144,128]{1,0:T(1,128)}', space=vmem, size = 0x12000, scoped, tag = 'internal scratch']
  #allocation2 [shape = 's32[1]{0}', space=sflag, size = 0x4, scoped, tag = 'scoped memory for switch_feed_forward.3']
  #allocation3 [shape = 'u8[512]{0}', space=smem, size = 0x200, scoped, tag = 'prefetched SMEM operand 0']
  %s0 = inlined_call_operand.vmem [shape: s32[5], index: 0, kind: input, shape index: {}]
  %s1 = inlined_call_operand.vmem [shape: bf16[640,128], index: 1, kind: input, shape index: {}]
  %s2 = inlined_call_operand.vmem [shape: f32[640,1], index: 2, kind: input, shape index: {}]
  %s3 = inlined_call_operand.vmem [shape: bf16[4,128,256], index: 3, kind: input, shape index: {}]
  %s4 = inlined_call_operand.vmem [shape: f32[4,1,256], index: 4, kind: input, shape index: {}]
  %s5 = inlined_call_operand.vmem [shape: bf16[4,256,128], index: 5, kind: input, shape index: {}]
  %s6 = inlined_call_operand.vmem [shape: f32[4,1,128], index: 6, kind: input, shape index: {}]
  %s7 = inlined_call_operand.vmem [shape: f32[640,128], index: 7, kind: output, shape index: {}]
  %s8 = sld [smem:[#allocation0]]
  $region65: #{switch_feed_forward.3} parent=0
    _
  %s10 = ssub.s32 1, %s8
  %s11 = scalar_select 0, %s10, %s8
  %s12 = sshll.u32 %s0, 4
  %s13 = int_to_ptr.vmem [resolvable:$true] %s12
  %15 = dma.vmem_to_smem %s13, 16, [#allocation3], [#allocation2]
  %16 = dma.done [#allocation2], 16
  %17 = sfence
  loop: start=0, step=1, limit=7
  $region2: #{switch_feed_forward.3} parent=0 // loop_pre_header
    _
  $region3: #{switch_feed_forward.3} parent=0 // loop_header
    %s19 = sphi 0, %s23
    %p20 = scmp.ge.s32.totalorder %s19, 7
    %s26 = sphi 0, %s38
    %s27 = sphi 0, %s34
    %s28 = sphi 0, %s26
    %s29 = sphi 0, %s27
    %s30 = sphi 0, %s28
    %s31 = sphi 0, %s29
    %s41 = sphi 0, %s43
    %s44 = sphi 0, %s41
    %s45 = sphi 0, %s44
    %s61 = sphi 0, %s45
    %s67 = sphi 0, %s69
    %s70 = sphi 0, %s67
    %s71 = sphi 0, %s70
    %s87 = sphi 0, %s71
    %s97 = sphi 0, %s99
    %s100 = sphi 0, %s97
    %s101 = sphi 0, %s100
    %s117 = sphi 0, %s101
    %s127 = sphi 0, %s129
    %s130 = sphi 0, %s127
    %s131 = sphi 0, %s130
    %s147 = sphi 0, %s131
    %s157 = sphi 0, %s159
    %s160 = sphi 0, %s157
    %s161 = sphi 0, %s160
    %s177 = sphi 0, %s161
    %s185 = sphi 0, %s187
    %s188 = sphi 0, %s185
    %s189 = sphi 0, %s188
    %s205 = sphi 0, %s189
    %s211 = sphi 0, %s213
    %s214 = sphi 0, %s211
    %s215 = sphi 0, %s214
    %s231 = sphi 0, %s215
  $region4: #{switch_feed_forward.3} parent=0 // loop_header_branch
    %22 = sbr.rel (%p20) target = $region8
  $region5: #{switch_feed_forward.3} parent=0 // loop_body
    %s24 = ssub.s32 %s19, 1
    %s25 = ssub.s32 %s19, 2
    %s32 = sadd.s32 1, %s27
    %p33 = scmp.ge.s32.totalorder %s32, 1
    %s34 = scalar_select %p33, 0, %s32
    %s35 = sadd.s32 1, %s26
    %s36 = scalar_select %p33, %s35, %s26
    %p37 = scmp.ge.s32.totalorder %s36, 5
    %s38 = scalar_select %p37, 0, %s36
    %s39 = ssub.s32 %s26, %s38
    %p40 = scmp.eq.s32.totalorder %s39, 0
    %s42 = sadd.s32 %s41, 1
    %s43 = scalar_select %p40, %s41, %s42
    %p46 = pneg %p40
    %p47 = scmp.eq.s32.totalorder %s19, 4
    %p48 = por %p46, %p47
    %p49 = scmp.ne.s32.totalorder %s41, %s44
    %p50 = scmp.eq.s32.totalorder %s19, 0
    %p51 = por %p49, %p50
    %p52 = scmp.ne.s32.totalorder %s41, %s44
    %p53 = scmp.eq.s32.totalorder %s24, 4
    %p54 = por %p52, %p53
    %p55 = scmp.ne.s32.totalorder %s44, %s45
    %p56 = scmp.eq.s32.totalorder %s24, 0
    %p57 = por %p55, %p56
    %p58 = scmp.ne.s32.totalorder %s44, %s45
    %p59 = scmp.eq.s32.totalorder %s25, 4
    %p60 = por %p58, %p59
    %p62 = scmp.ne.s32.totalorder %s45, %s61
    %p63 = scmp.eq.s32.totalorder %s25, 0
    %p64 = por %p62, %p63
    %s65 = ssub.s32 %s26, %s38
    %p66 = scmp.eq.s32.totalorder %s65, 0
    %s68 = sadd.s32 %s67, 1
    %s69 = scalar_select %p66, %s67, %s68
    %p72 = pneg %p66
    %p73 = scmp.eq.s32.totalorder %s19, 4
    %p74 = por %p72, %p73
    %p75 = scmp.ne.s32.totalorder %s67, %s70
    %p76 = scmp.eq.s32.totalorder %s19, 0
    %p77 = por %p75, %p76
    %p78 = scmp.ne.s32.totalorder %s67, %s70
    %p79 = scmp.eq.s32.totalorder %s24, 4
    %p80 = por %p78, %p79
    %p81 = scmp.ne.s32.totalorder %s70, %s71
    %p82 = scmp.eq.s32.totalorder %s24, 0
    %p83 = por %p81, %p82
    %p84 = scmp.ne.s32.totalorder %s70, %s71
    %p85 = scmp.eq.s32.totalorder %s25, 4
    %p86 = por %p84, %p85
    %p88 = scmp.ne.s32.totalorder %s71, %s87
    %p89 = scmp.eq.s32.totalorder %s25, 0
    %p90 = por %p88, %p89
    %s91 = sld [smem:[#allocation3 + %s26]]
    %s92 = sld [smem:[#allocation3 + %s38]]
    %s93 = ssub.s32 %s91, %s92
    %s94 = ssub.s32 %s27, %s34
    %s95 = sor.u32 %s93, %s94
    %p96 = scmp.eq.s32.totalorder %s95, 0
    %s98 = sadd.s32 %s97, 1
    %s99 = scalar_select %p96, %s97, %s98
    %p102 = pneg %p96
    %p103 = scmp.eq.s32.totalorder %s19, 4
    %p104 = por %p102, %p103
    %p105 = scmp.ne.s32.totalorder %s97, %s100
    %p106 = scmp.eq.s32.totalorder %s19, 0
    %p107 = por %p105, %p106
    %p108 = scmp.ne.s32.totalorder %s97, %s100
    %p109 = scmp.eq.s32.totalorder %s24, 4
    %p110 = por %p108, %p109
    %p111 = scmp.ne.s32.totalorder %s100, %s101
    %p112 = scmp.eq.s32.totalorder %s24, 0
    %p113 = por %p111, %p112
    %p114 = scmp.ne.s32.totalorder %s100, %s101
    %p115 = scmp.eq.s32.totalorder %s25, 4
    %p116 = por %p114, %p115
    %p118 = scmp.ne.s32.totalorder %s101, %s117
    %p119 = scmp.eq.s32.totalorder %s25, 0
    %p120 = por %p118, %p119
    %s121 = sld [smem:[#allocation3 + %s26]]
    %s122 = sld [smem:[#allocation3 + %s38]]
    %s123 = ssub.s32 %s121, %s122
    %s124 = ssub.s32 %s27, %s34
    %s125 = sor.u32 %s123, %s124
    %p126 = scmp.eq.s32.totalorder %s125, 0
    %s128 = sadd.s32 %s127, 1
    %s129 = scalar_select %p126, %s127, %s128
    %p132 = pneg %p126
    %p133 = scmp.eq.s32.totalorder %s19, 4
    %p134 = por %p132, %p133
    %p135 = scmp.ne.s32.totalorder %s127, %s130
    %p136 = scmp.eq.s32.totalorder %s19, 0
    %p137 = por %p135, %p136
    %p138 = scmp.ne.s32.totalorder %s127, %s130
    %p139 = scmp.eq.s32.totalorder %s24, 4
    %p140 = por %p138, %p139
    %p141 = scmp.ne.s32.totalorder %s130, %s131
    %p142 = scmp.eq.s32.totalorder %s24, 0
    %p143 = por %p141, %p142
    %p144 = scmp.ne.s32.totalorder %s130, %s131
    %p145 = scmp.eq.s32.totalorder %s25, 4
    %p146 = por %p144, %p145
    %p148 = scmp.ne.s32.totalorder %s131, %s147
    %p149 = scmp.eq.s32.totalorder %s25, 0
    %p150 = por %p148, %p149
    %s151 = sld [smem:[#allocation3 + %s26]]
    %s152 = sld [smem:[#allocation3 + %s38]]
    %s153 = ssub.s32 %s151, %s152
    %s154 = ssub.s32 %s27, %s34
    %s155 = sor.u32 %s153, %s154
    %p156 = scmp.eq.s32.totalorder %s155, 0
    %s158 = sadd.s32 %s157, 1
    %s159 = scalar_select %p156, %s157, %s158
    %p162 = pneg %p156
    %p163 = scmp.eq.s32.totalorder %s19, 4
    %p164 = por %p162, %p163
    %p165 = scmp.ne.s32.totalorder %s157, %s160
    %p166 = scmp.eq.s32.totalorder %s19, 0
    %p167 = por %p165, %p166
    %p168 = scmp.ne.s32.totalorder %s157, %s160
    %p169 = scmp.eq.s32.totalorder %s24, 4
    %p170 = por %p168, %p169
    %p171 = scmp.ne.s32.totalorder %s160, %s161
    %p172 = scmp.eq.s32.totalorder %s24, 0
    %p173 = por %p171, %p172
    %p174 = scmp.ne.s32.totalorder %s160, %s161
    %p175 = scmp.eq.s32.totalorder %s25, 4
    %p176 = por %p174, %p175
    %p178 = scmp.ne.s32.totalorder %s161, %s177
    %p179 = scmp.eq.s32.totalorder %s25, 0
    %p180 = por %p178, %p179
    %s181 = sld [smem:[#allocation3 + %s26]]
    %s182 = sld [smem:[#allocation3 + %s38]]
    %s183 = ssub.s32 %s181, %s182
    %p184 = scmp.eq.s32.totalorder %s183, 0
    %s186 = sadd.s32 %s185, 1
    %s187 = scalar_select %p184, %s185, %s186
    %p190 = pneg %p184
    %p191 = scmp.eq.s32.totalorder %s19, 4
    %p192 = por %p190, %p191
    %p193 = scmp.ne.s32.totalorder %s185, %s188
    %p194 = scmp.eq.s32.totalorder %s19, 0
    %p195 = por %p193, %p194
    %p196 = scmp.ne.s32.totalorder %s185, %s188
    %p197 = scmp.eq.s32.totalorder %s24, 4
    %p198 = por %p196, %p197
    %p199 = scmp.ne.s32.totalorder %s188, %s189
    %p200 = scmp.eq.s32.totalorder %s24, 0
    %p201 = por %p199, %p200
    %p202 = scmp.ne.s32.totalorder %s188, %s189
    %p203 = scmp.eq.s32.totalorder %s25, 4
    %p204 = por %p202, %p203
    %p206 = scmp.ne.s32.totalorder %s189, %s205
    %p207 = scmp.eq.s32.totalorder %s25, 0
    %p208 = por %p206, %p207
    %s209 = ssub.s32 %s26, %s38
    %p210 = scmp.eq.s32.totalorder %s209, 0
    %s212 = sadd.s32 %s211, 1
    %s213 = scalar_select %p210, %s211, %s212
    %p216 = pneg %p210
    %p217 = scmp.eq.s32.totalorder %s19, 4
    %p218 = por %p216, %p217
    %p219 = scmp.ne.s32.totalorder %s211, %s214
    %p220 = scmp.eq.s32.totalorder %s19, 0
    %p221 = por %p219, %p220
    %p222 = scmp.ne.s32.totalorder %s211, %s214
    %p223 = scmp.eq.s32.totalorder %s24, 4
    %p224 = por %p222, %p223
    %p225 = scmp.ne.s32.totalorder %s214, %s215
    %p226 = scmp.eq.s32.totalorder %s24, 0
    %p227 = por %p225, %p226
    %p228 = scmp.ne.s32.totalorder %s214, %s215
    %p229 = scmp.eq.s32.totalorder %s25, 4
    %p230 = por %p228, %p229
    %p232 = scmp.ne.s32.totalorder %s215, %s231
    %p233 = scmp.eq.s32.totalorder %s25, 0
    %p234 = por %p232, %p233
    %p235 = scmp.le.s32.totalorder 1, %s19
    %p236 = scmp.lt.s32.totalorder %s19, 6
    %p237 = pnand %p235, %p236
    %p238 = pneg %p237
    // Predicated region
    $region9: #{switch_feed_forward.3} parent=5 // pred_check
      _
    $region10: #{switch_feed_forward.3} parent=5 // pred_check_branch
      %240 = sbr.rel (%p237) target = $region12
    $region11: #{switch_feed_forward.3} parent=5 // pred_region
      %s241 = ssub.s32 %s19, 1
    $region12: #{switch_feed_forward.3} parent=5 // pred_fallthru
      _
    %p242 = scmp.lt.s32.totalorder %s19, 5
    // Predicated region
    $region13: #{switch_feed_forward.3} parent=5 // pred_check
      %p243 = pneg %p242
    $region14: #{switch_feed_forward.3} parent=5 // pred_check_branch
      %245 = sbr.rel (%p243) target = $region16
    $region15: #{switch_feed_forward.3} parent=5 // pred_region
      // Predicated region
      $region17: #{switch_feed_forward.3} parent=15 // pred_check
        %p246 = pneg %p51
      $region18: #{switch_feed_forward.3} parent=15 // pred_check_branch
        %248 = sbr.rel (%p246) target = $region20
      $region19: #{switch_feed_forward.3} parent=15 // pred_region
        %s249 = smul.u32 16, %s26
        %p250 = scmp.lt.s32.totalorder %s249, 79
        %s251 = scalar_select %p250, %s249, 79
        %s252 = smul.addr %s251, 4
        %s253 = scalar_lea.vmem %s1, %s252
        %s254 = smul.u32 16, %s26
      $region20: #{switch_feed_forward.3} parent=15 // pred_fallthru
        _
      // Predicated region
      $region21: #{switch_feed_forward.3} parent=15 // pred_check
        %p255 = pneg %p77
      $region22: #{switch_feed_forward.3} parent=15 // pred_check_branch
        %257 = sbr.rel (%p255) target = $region24
      $region23: #{switch_feed_forward.3} parent=15 // pred_region
        %s258 = smul.u32 16, %s26
        %p259 = scmp.lt.s32.totalorder %s258, 79
        %s260 = scalar_select %p259, %s258, 79
        %s261 = smul.addr %s260, 8
        %s262 = scalar_lea.vmem %s2, %s261
        %s263 = smul.u32 16, %s26
      $region24: #{switch_feed_forward.3} parent=15 // pred_fallthru
        _
      // Predicated region
      $region25: #{switch_feed_forward.3} parent=15 // pred_check
        %p264 = pneg %p107
      $region26: #{switch_feed_forward.3} parent=15 // pred_check_branch
        %266 = sbr.rel (%p264) target = $region28
      $region27: #{switch_feed_forward.3} parent=15 // pred_region
        %s267 = sld [smem:[#allocation3 + %s26]]
        %s268 = smul.u32 2, %s27
        %p269 = scmp.lt.s32.totalorder %s267, 3
        %s270 = scalar_select %p269, %s267, 3
        %p271 = scmp.lt.s32.totalorder %s268, 1
        %s272 = scalar_select %p271, %s268, 1
        %s273 = smul.addr %s270, 32
        %s274 = sadd.s32 %s272, %s273
        %s275 = smul.addr %s274, 4
        %s276 = scalar_lea.vmem %s3, %s275
        %s277 = sld [smem:[#allocation3 + %s26]]
        %s278 = smul.u32 2, %s27
      $region28: #{switch_feed_forward.3} parent=15 // pred_fallthru
        _
      // Predicated region
      $region29: #{switch_feed_forward.3} parent=15 // pred_check
        %p279 = pneg %p137
      $region30: #{switch_feed_forward.3} parent=15 // pred_check_branch
        %281 = sbr.rel (%p279) target = $region32
      $region31: #{switch_feed_forward.3} parent=15 // pred_region
        %s282 = sld [smem:[#allocation3 + %s26]]
        %s283 = smul.u32 2, %s27
        %p284 = scmp.lt.s32.totalorder %s282, 3
        %s285 = scalar_select %p284, %s282, 3
        %p286 = scmp.lt.s32.totalorder %s283, 1
        %s287 = scalar_select %p286, %s283, 1
        %s288 = smul.addr %s285, 2
        %s289 = sadd.s32 %s287, %s288
        %s290 = scalar_lea.vmem %s4, %s289
        %s291 = sld [smem:[#allocation3 + %s26]]
        %s292 = smul.u32 2, %s27
      $region32: #{switch_feed_forward.3} parent=15 // pred_fallthru
        _
      // Predicated region
      $region33: #{switch_feed_forward.3} parent=15 // pred_check
        %p293 = pneg %p167
      $region34: #{switch_feed_forward.3} parent=15 // pred_check_branch
        %295 = sbr.rel (%p293) target = $region36
      $region35: #{switch_feed_forward.3} parent=15 // pred_region
        %s296 = sld [smem:[#allocation3 + %s26]]
        %s297 = smul.u32 32, %s27
        %p298 = scmp.lt.s32.totalorder %s296, 3
        %s299 = scalar_select %p298, %s296, 3
        %p300 = scmp.lt.s32.totalorder %s297, 31
        %s301 = scalar_select %p300, %s297, 31
        %s302 = smul.addr %s299, 32
        %s303 = sadd.s32 %s301, %s302
        %s304 = smul.addr %s303, 4
        %s305 = scalar_lea.vmem %s5, %s304
        %s306 = sld [smem:[#allocation3 + %s26]]
        %s307 = smul.u32 32, %s27
      $region36: #{switch_feed_forward.3} parent=15 // pred_fallthru
        _
      // Predicated region
      $region37: #{switch_feed_forward.3} parent=15 // pred_check
        %p308 = pneg %p195
      $region38: #{switch_feed_forward.3} parent=15 // pred_check_branch
        %310 = sbr.rel (%p308) target = $region40
      $region39: #{switch_feed_forward.3} parent=15 // pred_region
        %s311 = sld [smem:[#allocation3 + %s26]]
        %p312 = scmp.lt.s32.totalorder %s311, 3
        %s313 = scalar_select %p312, %s311, 3
        %s314 = scalar_lea.vmem %s6, %s313
        %s315 = sld [smem:[#allocation3 + %s26]]
      $region40: #{switch_feed_forward.3} parent=15 // pred_fallthru
        _
    $region16: #{switch_feed_forward.3} parent=5 // pred_fallthru
      _
    %p316 = scmp.le.s32.totalorder 1, %s19
    %p317 = scmp.lt.s32.totalorder %s19, 6
    %p318 = pnand %p316, %p317
    %p319 = pneg %p318
    // Predicated region
    $region41: #{switch_feed_forward.3} parent=5 // pred_check
      _
    $region42: #{switch_feed_forward.3} parent=5 // pred_check_branch
      %321 = sbr.rel (%p318) target = $region44
    $region43: #{switch_feed_forward.3} parent=5 // pred_region
      %s322 = ssub.s32 %s19, 1
      %s323 = smul.u32 16, %s28
      %p324 = scmp.lt.s32.totalorder %s323, 79
      %s325 = scalar_select %p324, %s323, 79
      %s326 = smul.addr %s325, 4
      %s327 = scalar_lea.vmem %s1, %s326
      %p328 = pneg %p57
      %p329 = pneg %p54
      %s330 = smul.u32 16, %s28
      %p331 = scmp.lt.s32.totalorder %s330, 79
      %s332 = scalar_select %p331, %s330, 79
      %s333 = smul.addr %s332, 8
      %s334 = scalar_lea.vmem %s2, %s333
      %p335 = pneg %p83
      %p336 = pneg %p80
      %s337 = sld [smem:[#allocation3 + %s28]]
      %s338 = smul.u32 2, %s29
      %p339 = scmp.lt.s32.totalorder %s337, 3
      %s340 = scalar_select %p339, %s337, 3
      %p341 = scmp.lt.s32.totalorder %s338, 1
      %s342 = scalar_select %p341, %s338, 1
      %s343 = smul.addr %s340, 32
      %s344 = sadd.s32 %s342, %s343
      %s345 = smul.addr %s344, 4
      %s346 = scalar_lea.vmem %s3, %s345
      %p347 = pneg %p113
      %p348 = pneg %p110
      %s349 = sld [smem:[#allocation3 + %s28]]
      %s350 = smul.u32 2, %s29
      %p351 = scmp.lt.s32.totalorder %s349, 3
      %s352 = scalar_select %p351, %s349, 3
      %p353 = scmp.lt.s32.totalorder %s350, 1
      %s354 = scalar_select %p353, %s350, 1
      %s355 = smul.addr %s352, 2
      %s356 = sadd.s32 %s354, %s355
      %s357 = scalar_lea.vmem %s4, %s356
      %p358 = pneg %p143
      %p359 = pneg %p140
      %s360 = sld [smem:[#allocation3 + %s28]]
      %s361 = smul.u32 32, %s29
      %p362 = scmp.lt.s32.totalorder %s360, 3
      %s363 = scalar_select %p362, %s360, 3
      %p364 = scmp.lt.s32.totalorder %s361, 31
      %s365 = scalar_select %p364, %s361, 31
      %s366 = smul.addr %s363, 32
      %s367 = sadd.s32 %s365, %s366
      %s368 = smul.addr %s367, 4
      %s369 = scalar_lea.vmem %s5, %s368
      %p370 = pneg %p173
      %p371 = pneg %p170
      %s372 = sld [smem:[#allocation3 + %s28]]
      %p373 = scmp.lt.s32.totalorder %s372, 3
      %s374 = scalar_select %p373, %s372, 3
      %s375 = scalar_lea.vmem %s6, %s374
      %p376 = pneg %p201
      %p377 = pneg %p198
      %p378 = pneg %p227
      %p379 = pneg %p224
      %s380 = smul.u32 16, %s28
      %p381 = scmp.lt.s32.totalorder %s380, 79
      %s382 = scalar_select %p381, %s380, 79
      %s383 = smul.addr %s382, 8
      %s384 = scalar_lea.vmem %s7, %s383
      %s385 = smul.u32 16, %s28
      %p386 = scmp.lt.s32.totalorder %s385, 79
      %s387 = scalar_select %p386, %s385, 79
      %s388 = smul.addr %s387, 4
      %s389 = scalar_lea.vmem %s1, %s388
      %s390 = smul.u32 16, %s28
      %s391 = smul.u32 16, %s28
      %p392 = scmp.lt.s32.totalorder %s391, 79
      %s393 = scalar_select %p392, %s391, 79
      %s394 = smul.addr %s393, 8
      %s395 = scalar_lea.vmem %s2, %s394
      %s396 = smul.u32 16, %s28
      %s397 = sld [smem:[#allocation3 + %s28]]
      %s398 = smul.u32 2, %s29
      %p399 = scmp.lt.s32.totalorder %s397, 3
      %s400 = scalar_select %p399, %s397, 3
      %p401 = scmp.lt.s32.totalorder %s398, 1
      %s402 = scalar_select %p401, %s398, 1
      %s403 = smul.addr %s400, 32
      %s404 = sadd.s32 %s402, %s403
      %s405 = smul.addr %s404, 4
      %s406 = scalar_lea.vmem %s3, %s405
      %s407 = sld [smem:[#allocation3 + %s28]]
      %s408 = smul.u32 2, %s29
      %s409 = sld [smem:[#allocation3 + %s28]]
      %s410 = smul.u32 2, %s29
      %p411 = scmp.lt.s32.totalorder %s409, 3
      %s412 = scalar_select %p411, %s409, 3
      %p413 = scmp.lt.s32.totalorder %s410, 1
      %s414 = scalar_select %p413, %s410, 1
      %s415 = smul.addr %s412, 2
      %s416 = sadd.s32 %s414, %s415
      %s417 = scalar_lea.vmem %s4, %s416
      %s418 = sld [smem:[#allocation3 + %s28]]
      %s419 = smul.u32 2, %s29
      %s420 = sld [smem:[#allocation3 + %s28]]
      %s421 = smul.u32 32, %s29
      %p422 = scmp.lt.s32.totalorder %s420, 3
      %s423 = scalar_select %p422, %s420, 3
      %p424 = scmp.lt.s32.totalorder %s421, 31
      %s425 = scalar_select %p424, %s421, 31
      %s426 = smul.addr %s423, 32
      %s427 = sadd.s32 %s425, %s426
      %s428 = smul.addr %s427, 4
      %s429 = scalar_lea.vmem %s5, %s428
      %s430 = sld [smem:[#allocation3 + %s28]]
      %s431 = smul.u32 32, %s29
      %s432 = sld [smem:[#allocation3 + %s28]]
      %p433 = scmp.lt.s32.totalorder %s432, 3
      %s434 = scalar_select %p433, %s432, 3
      %s435 = scalar_lea.vmem %s6, %s434
      %s436 = sld [smem:[#allocation3 + %s28]]
      %s437 = smul.u32 16, %s28
      %p438 = scmp.lt.s32.totalorder %s437, 79
      %s439 = scalar_select %p438, %s437, 79
      %s440 = smul.addr %s439, 8
      %s441 = scalar_lea.vmem %s7, %s440
      %s442 = smul.u32 16, %s28
      %p444 = scmp.eq.s32.totalorder %s29, 0
      // Predicated region
      $region45: #{switch_feed_forward.3} parent=43 // pred_check
        %p445 = pneg %p444
      $region46: #{switch_feed_forward.3} parent=43 // pred_check_branch
        %447 = sbr.rel (%p445) target = $region48
      $region47: #{switch_feed_forward.3} parent=43 // pred_region
        %448 = vst [vmem:[%s441] sm:$0xff] 0.0
        %449 = vst [vmem:[%s441 + $0x8] sm:$0xff] 0.0
        %450 = vst [vmem:[%s441 + $0x10] sm:$0xff] 0.0
        %451 = vst [vmem:[%s441 + $0x18] sm:$0xff] 0.0
        %452 = vst [vmem:[%s441 + $0x20] sm:$0xff] 0.0
        %453 = vst [vmem:[%s441 + $0x28] sm:$0xff] 0.0
        %454 = vst [vmem:[%s441 + $0x30] sm:$0xff] 0.0
        %455 = vst [vmem:[%s441 + $0x38] sm:$0xff] 0.0
        %456 = vst [vmem:[%s441 + $0x40] sm:$0xff] 0.0
        %457 = vst [vmem:[%s441 + $0x48] sm:$0xff] 0.0
        %458 = vst [vmem:[%s441 + $0x50] sm:$0xff] 0.0
        %459 = vst [vmem:[%s441 + $0x58] sm:$0xff] 0.0
        %460 = vst [vmem:[%s441 + $0x60] sm:$0xff] 0.0
        %461 = vst [vmem:[%s441 + $0x68] sm:$0xff] 0.0
        %462 = vst [vmem:[%s441 + $0x70] sm:$0xff] 0.0
        %463 = vst [vmem:[%s441 + $0x78] sm:$0xff] 0.0
      $region48: #{switch_feed_forward.3} parent=43 // pred_fallthru
        _
      %v464 = vld [vmem:[%s389] sm:$0xf]
      %v465 = vld [vmem:[%s389 + $0x4] sm:$0xf]
      %v466 = vld [vmem:[%s389 + $0x8] sm:$0xf]
      %v467 = vld [vmem:[%s389 + $0xc] sm:$0xf]
      %v468 = vld [vmem:[%s389 + $0x10] sm:$0xf]
      %v469 = vld [vmem:[%s389 + $0x14] sm:$0xf]
      %v470 = vld [vmem:[%s389 + $0x18] sm:$0xf]
      %v471 = vld [vmem:[%s389 + $0x1c] sm:$0xf]
      %v472 = vld [vmem:[%s389 + $0x20] sm:$0xf]
      %v473 = vld [vmem:[%s389 + $0x24] sm:$0xf]
      %v474 = vld [vmem:[%s389 + $0x28] sm:$0xf]
      %v475 = vld [vmem:[%s389 + $0x2c] sm:$0xf]
      %v476 = vld [vmem:[%s389 + $0x30] sm:$0xf]
      %v477 = vld [vmem:[%s389 + $0x34] sm:$0xf]
      %v478 = vld [vmem:[%s389 + $0x38] sm:$0xf]
      %v479 = vld [vmem:[%s389 + $0x3c] sm:$0xf]
      %v480 = vld [vmem:[%s406] sm:$0xff]
      %v481 = vld [vmem:[%s406 + $0x8] sm:$0xff]
      %v482 = vld [vmem:[%s406 + $0x10] sm:$0xff]
      %v483 = vld [vmem:[%s406 + $0x18] sm:$0xff]
      %v484 = vld [vmem:[%s406 + $0x20] sm:$0xff]
      %v485 = vld [vmem:[%s406 + $0x28] sm:$0xff]
      %v486 = vld [vmem:[%s406 + $0x30] sm:$0xff]
      %v487 = vld [vmem:[%s406 + $0x38] sm:$0xff]
      %v488 = vld [vmem:[%s406 + $0x40] sm:$0xff]
      %v489 = vld [vmem:[%s406 + $0x48] sm:$0xff]
      %v490 = vld [vmem:[%s406 + $0x50] sm:$0xff]
      %v491 = vld [vmem:[%s406 + $0x58] sm:$0xff]
      %v492 = vld [vmem:[%s406 + $0x60] sm:$0xff]
      %v493 = vld [vmem:[%s406 + $0x68] sm:$0xff]
      %v494 = vld [vmem:[%s406 + $0x70] sm:$0xff]
      %v495 = vld [vmem:[%s406 + $0x78] sm:$0xff]
      %v496 = vld [vmem:[%s417] sm:$0x3]
      %v498 = vlaneseq
      %v499 = vshrl.u32 %v498, 7
      %v500 = vsub.s32 0, %v499
      %v501 = vrot.slane %v496, %v500
      %v502 = vlaneseq
      %v503 = vshrl.u32 %v502, 7
      %v504 = vsub.s32 1, %v503
      %v505 = vrot.slane %v496, %v504
      %v524 = vunpack.c.l.b16 %v464
      %v525 = vunpack.c.l.b16 %v465
      %v526 = vunpack.c.l.b16 %v466
      %v527 = vunpack.c.l.b16 %v467
      %v528 = vunpack.c.l.b16 %v468
      %v529 = vunpack.c.l.b16 %v469
      %v530 = vunpack.c.l.b16 %v470
      %v531 = vunpack.c.l.b16 %v471
      %v532 = vunpack.c.l.b16 %v472
      %v533 = vunpack.c.l.b16 %v473
      %v534 = vunpack.c.l.b16 %v474
      %v535 = vunpack.c.l.b16 %v475
      %v536 = vunpack.c.l.b16 %v476
      %v537 = vunpack.c.l.b16 %v477
      %v538 = vunpack.c.l.b16 %v478
      %v539 = vunpack.c.l.b16 %v479
      %v540 = vpack.c.b16 %v525, %v524
      %v541 = vpack.c.b16 %v527, %v526
      %v542 = vpack.c.b16 %v529, %v528
      %v543 = vpack.c.b16 %v531, %v530
      %v544 = vpack.c.b16 %v533, %v532
      %v545 = vpack.c.b16 %v535, %v534
      %v546 = vpack.c.b16 %v537, %v536
      %v547 = vpack.c.b16 %v539, %v538
      %v572 = vunpack.c.l.b16 %v480
      %v573 = vunpack.c.h.b16 %v480
      %v574 = vunpack.c.l.b16 %v481
      %v575 = vunpack.c.h.b16 %v481
      %v576 = vunpack.c.l.b16 %v482
      %v577 = vunpack.c.h.b16 %v482
      %v578 = vunpack.c.l.b16 %v483
      %v579 = vunpack.c.h.b16 %v483
      %v580 = vunpack.c.l.b16 %v484
      %v581 = vunpack.c.h.b16 %v484
      %v582 = vunpack.c.l.b16 %v485
      %v583 = vunpack.c.h.b16 %v485
      %v584 = vunpack.c.l.b16 %v486
      %v585 = vunpack.c.h.b16 %v486
      %v586 = vunpack.c.l.b16 %v487
      %v587 = vunpack.c.h.b16 %v487
      %v588 = vunpack.c.l.b16 %v488
      %v589 = vunpack.c.h.b16 %v488
      %v590 = vunpack.c.l.b16 %v489
      %v591 = vunpack.c.h.b16 %v489
      %v592 = vunpack.c.l.b16 %v490
      %v593 = vunpack.c.h.b16 %v490
      %v594 = vunpack.c.l.b16 %v491
      %v595 = vunpack.c.h.b16 %v491
      %v596 = vunpack.c.l.b16 %v492
      %v597 = vunpack.c.h.b16 %v492
      %v598 = vunpack.c.l.b16 %v493
      %v599 = vunpack.c.h.b16 %v493
      %v600 = vunpack.c.l.b16 %v494
      %v601 = vunpack.c.h.b16 %v494
      %v602 = vunpack.c.l.b16 %v495
      %v603 = vunpack.c.h.b16 %v495
      %v604 = vpack.c.b16 %v574, %v572
      %v605 = vpack.c.b16 %v575, %v573
      %v606 = vpack.c.b16 %v578, %v576
      %v607 = vpack.c.b16 %v579, %v577
      %v608 = vpack.c.b16 %v582, %v580
      %v609 = vpack.c.b16 %v583, %v581
      %v610 = vpack.c.b16 %v586, %v584
      %v611 = vpack.c.b16 %v587, %v585
      %v612 = vpack.c.b16 %v590, %v588
      %v613 = vpack.c.b16 %v591, %v589
      %v614 = vpack.c.b16 %v594, %v592
      %v615 = vpack.c.b16 %v595, %v593
      %v616 = vpack.c.b16 %v598, %v596
      %v617 = vpack.c.b16 %v599, %v597
      %v618 = vpack.c.b16 %v602, %v600
      %v619 = vpack.c.b16 %v603, %v601
      %636 = vmatprep.subr.bf16.mxu0 %v619
      %637 = vmatpush1.bf16.msra.mxu0 %v618
      %638 = vmatprep.subr.bf16.mxu0 %v617
      %639 = vmatpush1.bf16.msra.mxu0 %v616
      %640 = vmatprep.subr.bf16.mxu0 %v615
      %641 = vmatpush1.bf16.msra.mxu0 %v614
      %642 = vmatprep.subr.bf16.mxu0 %v613
      %643 = vmatpush1.bf16.msra.mxu0 %v612
      %644 = vmatprep.subr.bf16.mxu0 %v611
      %645 = vmatpush1.bf16.msra.mxu0 %v610
      %646 = vmatprep.subr.bf16.mxu0 %v609
      %647 = vmatpush1.bf16.msra.mxu0 %v608
      %648 = vmatprep.subr.bf16.mxu0 %v607
      %649 = vmatpush1.bf16.msra.mxu0 %v606
      %650 = vmatprep.subr.bf16.mxu0 %v605
      %651 = vmatpush1.bf16.msra.mxu0 %v604
      %652 = vmatprep.subr.bf16.mxu0 0
      %653 = vmatpush2.bf16.msra.mxu0 0
      %654 = vmatprep.subr.bf16.mxu0 0
      %655 = vmatpush2.bf16.msra.mxu0 0
      %656 = vmatprep.subr.bf16.mxu0 0
      %657 = vmatpush2.bf16.msra.mxu0 0
      %658 = vmatprep.subr.bf16.mxu0 0
      %659 = vmatpush2.bf16.msra.mxu0 0
      %660 = vmatprep.subr.bf16.mxu0 0
      %661 = vmatpush2.bf16.msra.mxu0 0
      %662 = vmatprep.subr.bf16.mxu0 0
      %663 = vmatpush2.bf16.msra.mxu0 0
      %664 = vmatprep.subr.bf16.mxu0 0
      %665 = vmatpush2.bf16.msra.mxu0 0
      %666 = vmatprep.subr.bf16.mxu0 0
      %667 = vmatpush2.bf16.msra.mxu0 0
      %668 = vmatprep.mubr.bf16.mxu0 0
      %669 = vmatmul.mubr.bf16.gmra.mxu0 %v540
      %v670 = vpop.f32.mrf.mxu0
      %v671 = vadd.f32 %v501, %v670
      %v672 = vpop.f32.mrf.mxu0
      %v673 = vadd.f32 %v505, %v672
      %v674 = vpop.f32.mrf.mxu0
      %v675 = vadd.f32 %v501, %v674
      %v676 = vpop.f32.mrf.mxu0
      %v677 = vadd.f32 %v505, %v676
      %678 = vmatprep.mubr.bf16.mxu0 0
      %679 = vmatmul.mubr.bf16.gmra.mxu0 %v541
      %v680 = vpop.f32.mrf.mxu0
      %v681 = vadd.f32 %v501, %v680
      %v682 = vpop.f32.mrf.mxu0
      %v683 = vadd.f32 %v505, %v682
      %v684 = vpop.f32.mrf.mxu0
      %v685 = vadd.f32 %v501, %v684
      %v686 = vpop.f32.mrf.mxu0
      %v687 = vadd.f32 %v505, %v686
      %688 = vmatprep.mubr.bf16.mxu0 0
      %689 = vmatmul.mubr.bf16.gmra.mxu0 %v542
      %v690 = vpop.f32.mrf.mxu0
      %v691 = vadd.f32 %v501, %v690
      %v692 = vpop.f32.mrf.mxu0
      %v693 = vadd.f32 %v505, %v692
      %v694 = vpop.f32.mrf.mxu0
      %v695 = vadd.f32 %v501, %v694
      %v696 = vpop.f32.mrf.mxu0
      %v697 = vadd.f32 %v505, %v696
      %698 = vmatprep.mubr.bf16.mxu0 0
      %699 = vmatmul.mubr.bf16.gmra.mxu0 %v543
      %v700 = vpop.f32.mrf.mxu0
      %v701 = vadd.f32 %v501, %v700
      %v702 = vpop.f32.mrf.mxu0
      %v703 = vadd.f32 %v505, %v702
      %v704 = vpop.f32.mrf.mxu0
      %v705 = vadd.f32 %v501, %v704
      %v706 = vpop.f32.mrf.mxu0
      %v707 = vadd.f32 %v505, %v706
      %708 = vmatprep.mubr.bf16.mxu0 0
      %709 = vmatmul.mubr.bf16.gmra.mxu0 %v544
      %v710 = vpop.f32.mrf.mxu0
      %v711 = vadd.f32 %v501, %v710
      %v712 = vpop.f32.mrf.mxu0
      %v713 = vadd.f32 %v505, %v712
      %v714 = vpop.f32.mrf.mxu0
      %v715 = vadd.f32 %v501, %v714
      %v716 = vpop.f32.mrf.mxu0
      %v717 = vadd.f32 %v505, %v716
      %718 = vmatprep.mubr.bf16.mxu0 0
      %719 = vmatmul.mubr.bf16.gmra.mxu0 %v545
      %v720 = vpop.f32.mrf.mxu0
      %v721 = vadd.f32 %v501, %v720
      %v722 = vpop.f32.mrf.mxu0
      %v723 = vadd.f32 %v505, %v722
      %v724 = vpop.f32.mrf.mxu0
      %v725 = vadd.f32 %v501, %v724
      %v726 = vpop.f32.mrf.mxu0
      %v727 = vadd.f32 %v505, %v726
      %728 = vmatprep.mubr.bf16.mxu0 0
      %729 = vmatmul.mubr.bf16.gmra.mxu0 %v546
      %v730 = vpop.f32.mrf.mxu0
      %v731 = vadd.f32 %v501, %v730
      %v732 = vpop.f32.mrf.mxu0
      %v733 = vadd.f32 %v505, %v732
      %v734 = vpop.f32.mrf.mxu0
      %v735 = vadd.f32 %v501, %v734
      %v736 = vpop.f32.mrf.mxu0
      %v737 = vadd.f32 %v505, %v736
      %738 = vmatprep.mubr.bf16.mxu0 0
      %739 = vmatmul.mubr.bf16.gmra.mxu0 %v547
      %v740 = vpop.f32.mrf.mxu0
      %v741 = vadd.f32 %v501, %v740
      %v742 = vpop.f32.mrf.mxu0
      %v743 = vadd.f32 %v505, %v742
      %v744 = vpop.f32.mrf.mxu0
      %v745 = vadd.f32 %v501, %v744
      %v746 = vpop.f32.mrf.mxu0
      %v747 = vadd.f32 %v505, %v746
      %748 = vdwg.mxu0
      %v749 = vmax.f32 %v671, 0.0
      %v750 = vmax.f32 %v673, 0.0
      %v751 = vmax.f32 %v675, 0.0
      %v752 = vmax.f32 %v677, 0.0
      %v753 = vmax.f32 %v681, 0.0
      %v754 = vmax.f32 %v683, 0.0
      %v755 = vmax.f32 %v685, 0.0
      %v756 = vmax.f32 %v687, 0.0
      %v757 = vmax.f32 %v691, 0.0
      %v758 = vmax.f32 %v693, 0.0
      %v759 = vmax.f32 %v695, 0.0
      %v760 = vmax.f32 %v697, 0.0
      %v761 = vmax.f32 %v701, 0.0
      %v762 = vmax.f32 %v703, 0.0
      %v763 = vmax.f32 %v705, 0.0
      %v764 = vmax.f32 %v707, 0.0
      %v765 = vmax.f32 %v711, 0.0
      %v766 = vmax.f32 %v713, 0.0
      %v767 = vmax.f32 %v715, 0.0
      %v768 = vmax.f32 %v717, 0.0
      %v769 = vmax.f32 %v721, 0.0
      %v770 = vmax.f32 %v723, 0.0
      %v771 = vmax.f32 %v725, 0.0
      %v772 = vmax.f32 %v727, 0.0
      %v773 = vmax.f32 %v731, 0.0
      %v774 = vmax.f32 %v733, 0.0
      %v775 = vmax.f32 %v735, 0.0
      %v776 = vmax.f32 %v737, 0.0
      %v777 = vmax.f32 %v741, 0.0
      %v778 = vmax.f32 %v743, 0.0
      %v779 = vmax.f32 %v745, 0.0
      %v780 = vmax.f32 %v747, 0.0
      %v781 = vld [vmem:[%s441] sm:$0xff]
      %v782 = vld [vmem:[%s441 + $0x8] sm:$0xff]
      %v783 = vld [vmem:[%s441 + $0x10] sm:$0xff]
      %v784 = vld [vmem:[%s441 + $0x18] sm:$0xff]
      %v785 = vld [vmem:[%s441 + $0x20] sm:$0xff]
      %v786 = vld [vmem:[%s441 + $0x28] sm:$0xff]
      %v787 = vld [vmem:[%s441 + $0x30] sm:$0xff]
      %v788 = vld [vmem:[%s441 + $0x38] sm:$0xff]
      %v789 = vld [vmem:[%s441 + $0x40] sm:$0xff]
      %v790 = vld [vmem:[%s441 + $0x48] sm:$0xff]
      %v791 = vld [vmem:[%s441 + $0x50] sm:$0xff]
      %v792 = vld [vmem:[%s441 + $0x58] sm:$0xff]
      %v793 = vld [vmem:[%s441 + $0x60] sm:$0xff]
      %v794 = vld [vmem:[%s441 + $0x68] sm:$0xff]
      %v795 = vld [vmem:[%s441 + $0x70] sm:$0xff]
      %v796 = vld [vmem:[%s441 + $0x78] sm:$0xff]
      %v797 = vpack.c.bf16 %v751, %v749
      %v798 = vpack.c.bf16 %v752, %v750
      %v799 = vpack.c.bf16 %v755, %v753
      %v800 = vpack.c.bf16 %v756, %v754
      %v801 = vpack.c.bf16 %v759, %v757
      %v802 = vpack.c.bf16 %v760, %v758
      %v803 = vpack.c.bf16 %v763, %v761
      %v804 = vpack.c.bf16 %v764, %v762
      %v805 = vpack.c.bf16 %v767, %v765
      %v806 = vpack.c.bf16 %v768, %v766
      %v807 = vpack.c.bf16 %v771, %v769
      %v808 = vpack.c.bf16 %v772, %v770
      %v809 = vpack.c.bf16 %v775, %v773
      %v810 = vpack.c.bf16 %v776, %v774
      %v811 = vpack.c.bf16 %v779, %v777
      %v812 = vpack.c.bf16 %v780, %v778
      %v813 = vld [vmem:[%s429] sm:$0xf]
      %v814 = vld [vmem:[%s429 + $0x4] sm:$0xf]
      %v815 = vld [vmem:[%s429 + $0x8] sm:$0xf]
      %v816 = vld [vmem:[%s429 + $0xc] sm:$0xf]
      %v817 = vld [vmem:[%s429 + $0x10] sm:$0xf]
      %v818 = vld [vmem:[%s429 + $0x14] sm:$0xf]
      %v819 = vld [vmem:[%s429 + $0x18] sm:$0xf]
      %v820 = vld [vmem:[%s429 + $0x1c] sm:$0xf]
      %v821 = vld [vmem:[%s429 + $0x20] sm:$0xf]
      %v822 = vld [vmem:[%s429 + $0x24] sm:$0xf]
      %v823 = vld [vmem:[%s429 + $0x28] sm:$0xf]
      %v824 = vld [vmem:[%s429 + $0x2c] sm:$0xf]
      %v825 = vld [vmem:[%s429 + $0x30] sm:$0xf]
      %v826 = vld [vmem:[%s429 + $0x34] sm:$0xf]
      %v827 = vld [vmem:[%s429 + $0x38] sm:$0xf]
      %v828 = vld [vmem:[%s429 + $0x3c] sm:$0xf]
      %v829 = vld [vmem:[%s429 + $0x40] sm:$0xf]
      %v830 = vld [vmem:[%s429 + $0x44] sm:$0xf]
      %v831 = vld [vmem:[%s429 + $0x48] sm:$0xf]
      %v832 = vld [vmem:[%s429 + $0x4c] sm:$0xf]
      %v833 = vld [vmem:[%s429 + $0x50] sm:$0xf]
      %v834 = vld [vmem:[%s429 + $0x54] sm:$0xf]
      %v835 = vld [vmem:[%s429 + $0x58] sm:$0xf]
      %v836 = vld [vmem:[%s429 + $0x5c] sm:$0xf]
      %v837 = vld [vmem:[%s429 + $0x60] sm:$0xf]
      %v838 = vld [vmem:[%s429 + $0x64] sm:$0xf]
      %v839 = vld [vmem:[%s429 + $0x68] sm:$0xf]
      %v840 = vld [vmem:[%s429 + $0x6c] sm:$0xf]
      %v841 = vld [vmem:[%s429 + $0x70] sm:$0xf]
      %v842 = vld [vmem:[%s429 + $0x74] sm:$0xf]
      %v843 = vld [vmem:[%s429 + $0x78] sm:$0xf]
      %v844 = vld [vmem:[%s429 + $0x7c] sm:$0xf]
      %v877 = vunpack.c.l.b16 %v813
      %v878 = vunpack.c.l.b16 %v814
      %v879 = vunpack.c.l.b16 %v815
      %v880 = vunpack.c.l.b16 %v816
      %v881 = vunpack.c.l.b16 %v817
      %v882 = vunpack.c.l.b16 %v818
      %v883 = vunpack.c.l.b16 %v819
      %v884 = vunpack.c.l.b16 %v820
      %v885 = vunpack.c.l.b16 %v821
      %v886 = vunpack.c.l.b16 %v822
      %v887 = vunpack.c.l.b16 %v823
      %v888 = vunpack.c.l.b16 %v824
      %v889 = vunpack.c.l.b16 %v825
      %v890 = vunpack.c.l.b16 %v826
      %v891 = vunpack.c.l.b16 %v827
      %v892 = vunpack.c.l.b16 %v828
      %v893 = vunpack.c.l.b16 %v829
      %v894 = vunpack.c.l.b16 %v830
      %v895 = vunpack.c.l.b16 %v831
      %v896 = vunpack.c.l.b16 %v832
      %v897 = vunpack.c.l.b16 %v833
      %v898 = vunpack.c.l.b16 %v834
      %v899 = vunpack.c.l.b16 %v835
      %v900 = vunpack.c.l.b16 %v836
      %v901 = vunpack.c.l.b16 %v837
      %v902 = vunpack.c.l.b16 %v838
      %v903 = vunpack.c.l.b16 %v839
      %v904 = vunpack.c.l.b16 %v840
      %v905 = vunpack.c.l.b16 %v841
      %v906 = vunpack.c.l.b16 %v842
      %v907 = vunpack.c.l.b16 %v843
      %v908 = vunpack.c.l.b16 %v844
      %v909 = vpack.c.b16 %v878, %v877
      %v910 = vpack.c.b16 %v880, %v879
      %v911 = vpack.c.b16 %v882, %v881
      %v912 = vpack.c.b16 %v884, %v883
      %v913 = vpack.c.b16 %v886, %v885
      %v914 = vpack.c.b16 %v888, %v887
      %v915 = vpack.c.b16 %v890, %v889
      %v916 = vpack.c.b16 %v892, %v891
      %v917 = vpack.c.b16 %v894, %v893
      %v918 = vpack.c.b16 %v896, %v895
      %v919 = vpack.c.b16 %v898, %v897
      %v920 = vpack.c.b16 %v900, %v899
      %v921 = vpack.c.b16 %v902, %v901
      %v922 = vpack.c.b16 %v904, %v903
      %v923 = vpack.c.b16 %v906, %v905
      %v924 = vpack.c.b16 %v908, %v907
      %941 = vmatprep.subr.bf16.mxu0 0
      %942 = vmatpush1.bf16.msra.mxu0 %v916
      %943 = vmatprep.subr.bf16.mxu0 0
      %944 = vmatpush1.bf16.msra.mxu0 %v915
      %945 = vmatprep.subr.bf16.mxu0 0
      %946 = vmatpush1.bf16.msra.mxu0 %v914
      %947 = vmatprep.subr.bf16.mxu0 0
      %948 = vmatpush1.bf16.msra.mxu0 %v913
      %949 = vmatprep.subr.bf16.mxu0 0
      %950 = vmatpush1.bf16.msra.mxu0 %v912
      %951 = vmatprep.subr.bf16.mxu0 0
      %952 = vmatpush1.bf16.msra.mxu0 %v911
      %953 = vmatprep.subr.bf16.mxu0 0
      %954 = vmatpush1.bf16.msra.mxu0 %v910
      %955 = vmatprep.subr.bf16.mxu0 0
      %956 = vmatpush1.bf16.msra.mxu0 %v909
      %957 = vmatprep.subr.bf16.mxu0 0
      %958 = vmatpush2.bf16.msra.mxu0 %v924
      %959 = vmatprep.subr.bf16.mxu0 0
      %960 = vmatpush2.bf16.msra.mxu0 %v923
      %961 = vmatprep.subr.bf16.mxu0 0
      %962 = vmatpush2.bf16.msra.mxu0 %v922
      %963 = vmatprep.subr.bf16.mxu0 0
      %964 = vmatpush2.bf16.msra.mxu0 %v921
      %965 = vmatprep.subr.bf16.mxu0 0
      %966 = vmatpush2.bf16.msra.mxu0 %v920
      %967 = vmatprep.subr.bf16.mxu0 0
      %968 = vmatpush2.bf16.msra.mxu0 %v919
      %969 = vmatprep.subr.bf16.mxu0 0
      %970 = vmatpush2.bf16.msra.mxu0 %v918
      %971 = vmatprep.subr.bf16.mxu0 0
      %972 = vmatpush2.bf16.msra.mxu0 %v917
      %973 = vmatprep.mubr.bf16.mxu0 %v798
      %974 = vmatmul.mubr.bf16.gmra.mxu0 %v797
      %v975 = vpop.f32.mrf.mxu0
      %v976 = vadd.f32 0.0, %v975
      %v977 = vpop.f32.mrf.mxu0
      %v978 = vpop.f32.mrf.mxu0
      %v979 = vadd.f32 0.0, %v978
      %v980 = vpop.f32.mrf.mxu0
      %981 = vmatprep.mubr.bf16.mxu0 %v800
      %982 = vmatmul.mubr.bf16.gmra.mxu0 %v799
      %v983 = vpop.f32.mrf.mxu0
      %v984 = vadd.f32 0.0, %v983
      %v985 = vpop.f32.mrf.mxu0
      %v986 = vpop.f32.mrf.mxu0
      %v987 = vadd.f32 0.0, %v986
      %v988 = vpop.f32.mrf.mxu0
      %989 = vmatprep.mubr.bf16.mxu0 %v802
      %990 = vmatmul.mubr.bf16.gmra.mxu0 %v801
      %v991 = vpop.f32.mrf.mxu0
      %v992 = vadd.f32 0.0, %v991
      %v993 = vpop.f32.mrf.mxu0
      %v994 = vpop.f32.mrf.mxu0
      %v995 = vadd.f32 0.0, %v994
      %v996 = vpop.f32.mrf.mxu0
      %997 = vmatprep.mubr.bf16.mxu0 %v804
      %998 = vmatmul.mubr.bf16.gmra.mxu0 %v803
      %v999 = vpop.f32.mrf.mxu0
      %v1000 = vadd.f32 0.0, %v999
      %v1001 = vpop.f32.mrf.mxu0
      %v1002 = vpop.f32.mrf.mxu0
      %v1003 = vadd.f32 0.0, %v1002
      %v1004 = vpop.f32.mrf.mxu0
      %1005 = vmatprep.mubr.bf16.mxu0 %v806
      %1006 = vmatmul.mubr.bf16.gmra.mxu0 %v805
      %v1007 = vpop.f32.mrf.mxu0
      %v1008 = vadd.f32 0.0, %v1007
      %v1009 = vpop.f32.mrf.mxu0
      %v1010 = vpop.f32.mrf.mxu0
      %v1011 = vadd.f32 0.0, %v1010
      %v1012 = vpop.f32.mrf.mxu0
      %1013 = vmatprep.mubr.bf16.mxu0 %v808
      %1014 = vmatmul.mubr.bf16.gmra.mxu0 %v807
      %v1015 = vpop.f32.mrf.mxu0
      %v1016 = vadd.f32 0.0, %v1015
      %v1017 = vpop.f32.mrf.mxu0
      %v1018 = vpop.f32.mrf.mxu0
      %v1019 = vadd.f32 0.0, %v1018
      %v1020 = vpop.f32.mrf.mxu0
      %1021 = vmatprep.mubr.bf16.mxu0 %v810
      %1022 = vmatmul.mubr.bf16.gmra.mxu0 %v809
      %v1023 = vpop.f32.mrf.mxu0
      %v1024 = vadd.f32 0.0, %v1023
      %v1025 = vpop.f32.mrf.mxu0
      %v1026 = vpop.f32.mrf.mxu0
      %v1027 = vadd.f32 0.0, %v1026
      %v1028 = vpop.f32.mrf.mxu0
      %1029 = vmatprep.mubr.bf16.mxu0 %v812
      %1030 = vmatmul.mubr.bf16.gmra.mxu0 %v811
      %v1031 = vpop.f32.mrf.mxu0
      %v1032 = vadd.f32 0.0, %v1031
      %v1033 = vpop.f32.mrf.mxu0
      %v1034 = vpop.f32.mrf.mxu0
      %v1035 = vadd.f32 0.0, %v1034
      %v1036 = vpop.f32.mrf.mxu0
      %1037 = vdwg.mxu0
      %v1038 = vadd.f32 %v781, %v976
      %v1039 = vadd.f32 %v782, %v979
      %v1040 = vadd.f32 %v783, %v984
      %v1041 = vadd.f32 %v784, %v987
      %v1042 = vadd.f32 %v785, %v992
      %v1043 = vadd.f32 %v786, %v995
      %v1044 = vadd.f32 %v787, %v1000
      %v1045 = vadd.f32 %v788, %v1003
      %v1046 = vadd.f32 %v789, %v1008
      %v1047 = vadd.f32 %v790, %v1011
      %v1048 = vadd.f32 %v791, %v1016
      %v1049 = vadd.f32 %v792, %v1019
      %v1050 = vadd.f32 %v793, %v1024
      %v1051 = vadd.f32 %v794, %v1027
      %v1052 = vadd.f32 %v795, %v1032
      %v1053 = vadd.f32 %v796, %v1035
      %1054 = vst [vmem:[%s441] sm:$0xff] %v1038
      %1055 = vst [vmem:[%s441 + $0x8] sm:$0xff] %v1039
      %1056 = vst [vmem:[%s441 + $0x10] sm:$0xff] %v1040
      %1057 = vst [vmem:[%s441 + $0x18] sm:$0xff] %v1041
      %1058 = vst [vmem:[%s441 + $0x20] sm:$0xff] %v1042
      %1059 = vst [vmem:[%s441 + $0x28] sm:$0xff] %v1043
      %1060 = vst [vmem:[%s441 + $0x30] sm:$0xff] %v1044
      %1061 = vst [vmem:[%s441 + $0x38] sm:$0xff] %v1045
      %1062 = vst [vmem:[%s441 + $0x40] sm:$0xff] %v1046
      %1063 = vst [vmem:[%s441 + $0x48] sm:$0xff] %v1047
      %1064 = vst [vmem:[%s441 + $0x50] sm:$0xff] %v1048
      %1065 = vst [vmem:[%s441 + $0x58] sm:$0xff] %v1049
      %1066 = vst [vmem:[%s441 + $0x60] sm:$0xff] %v1050
      %1067 = vst [vmem:[%s441 + $0x68] sm:$0xff] %v1051
      %1068 = vst [vmem:[%s441 + $0x70] sm:$0xff] %v1052
      %1069 = vst [vmem:[%s441 + $0x78] sm:$0xff] %v1053
      // Predicated region
      $region49: #{switch_feed_forward.3} parent=43 // pred_check
        %p1070 = pneg %p444
      $region50: #{switch_feed_forward.3} parent=43 // pred_check_branch
        %1072 = sbr.rel (%p1070) target = $region52
      $region51: #{switch_feed_forward.3} parent=43 // pred_region
        %v1073 = vld [vmem:[%s441] sm:$0xff]
        %v1074 = vld [vmem:[%s441 + $0x8] sm:$0xff]
        %v1075 = vld [vmem:[%s441 + $0x10] sm:$0xff]
        %v1076 = vld [vmem:[%s441 + $0x18] sm:$0xff]
        %v1077 = vld [vmem:[%s441 + $0x20] sm:$0xff]
        %v1078 = vld [vmem:[%s441 + $0x28] sm:$0xff]
        %v1079 = vld [vmem:[%s441 + $0x30] sm:$0xff]
        %v1080 = vld [vmem:[%s441 + $0x38] sm:$0xff]
        %v1081 = vld [vmem:[%s441 + $0x40] sm:$0xff]
        %v1082 = vld [vmem:[%s441 + $0x48] sm:$0xff]
        %v1083 = vld [vmem:[%s441 + $0x50] sm:$0xff]
        %v1084 = vld [vmem:[%s441 + $0x58] sm:$0xff]
        %v1085 = vld [vmem:[%s441 + $0x60] sm:$0xff]
        %v1086 = vld [vmem:[%s441 + $0x68] sm:$0xff]
        %v1087 = vld [vmem:[%s441 + $0x70] sm:$0xff]
        %v1088 = vld [vmem:[%s441 + $0x78] sm:$0xff]
        %v1089 = vld [vmem:[%s435] sm:$0x1]
        %v1091 = vlaneseq
        %v1092 = vshrl.u32 %v1091, 7
        %v1093 = vsub.s32 0, %v1092
        %v1094 = vrot.slane %v1089, %v1093
        %v1096 = vadd.f32 %v1073, %v1094
        %v1097 = vadd.f32 %v1074, %v1094
        %v1098 = vadd.f32 %v1075, %v1094
        %v1099 = vadd.f32 %v1076, %v1094
        %v1100 = vadd.f32 %v1077, %v1094
        %v1101 = vadd.f32 %v1078, %v1094
        %v1102 = vadd.f32 %v1079, %v1094
        %v1103 = vadd.f32 %v1080, %v1094
        %v1104 = vadd.f32 %v1081, %v1094
        %v1105 = vadd.f32 %v1082, %v1094
        %v1106 = vadd.f32 %v1083, %v1094
        %v1107 = vadd.f32 %v1084, %v1094
        %v1108 = vadd.f32 %v1085, %v1094
        %v1109 = vadd.f32 %v1086, %v1094
        %v1110 = vadd.f32 %v1087, %v1094
        %v1111 = vadd.f32 %v1088, %v1094
        %v1112 = vld [vmem:[%s395] sm:$0xff]
        %v1113 = vld [vmem:[%s395 + $0x8] sm:$0xff]
        %v1114 = vld [vmem:[%s395 + $0x10] sm:$0xff]
        %v1115 = vld [vmem:[%s395 + $0x18] sm:$0xff]
        %v1116 = vld [vmem:[%s395 + $0x20] sm:$0xff]
        %v1117 = vld [vmem:[%s395 + $0x28] sm:$0xff]
        %v1118 = vld [vmem:[%s395 + $0x30] sm:$0xff]
        %v1119 = vld [vmem:[%s395 + $0x38] sm:$0xff]
        %v1120 = vld [vmem:[%s395 + $0x40] sm:$0xff]
        %v1121 = vld [vmem:[%s395 + $0x48] sm:$0xff]
        %v1122 = vld [vmem:[%s395 + $0x50] sm:$0xff]
        %v1123 = vld [vmem:[%s395 + $0x58] sm:$0xff]
        %v1124 = vld [vmem:[%s395 + $0x60] sm:$0xff]
        %v1125 = vld [vmem:[%s395 + $0x68] sm:$0xff]
        %v1126 = vld [vmem:[%s395 + $0x70] sm:$0xff]
        %v1127 = vld [vmem:[%s395 + $0x78] sm:$0xff]
        %1129 = vset.pattern.permute.xlu0 0
        %1130 = vperm.xlu0 %1129, %v1112
        %v1131 = vpop.permute.xlu0 %1130
        %1134 = vset.pattern.permute.xlu0 0
        %1135 = vperm.xlu0 %1134, %v1113
        %v1136 = vpop.permute.xlu0 %1135
        %1139 = vset.pattern.permute.xlu0 0
        %1140 = vperm.xlu0 %1139, %v1114
        %v1141 = vpop.permute.xlu0 %1140
        %1144 = vset.pattern.permute.xlu0 0
        %1145 = vperm.xlu0 %1144, %v1115
        %v1146 = vpop.permute.xlu0 %1145
        %1149 = vset.pattern.permute.xlu0 0
        %1150 = vperm.xlu0 %1149, %v1116
        %v1151 = vpop.permute.xlu0 %1150
        %1154 = vset.pattern.permute.xlu0 0
        %1155 = vperm.xlu0 %1154, %v1117
        %v1156 = vpop.permute.xlu0 %1155
        %1159 = vset.pattern.permute.xlu0 0
        %1160 = vperm.xlu0 %1159, %v1118
        %v1161 = vpop.permute.xlu0 %1160
        %1164 = vset.pattern.permute.xlu0 0
        %1165 = vperm.xlu0 %1164, %v1119
        %v1166 = vpop.permute.xlu0 %1165
        %1169 = vset.pattern.permute.xlu0 0
        %1170 = vperm.xlu0 %1169, %v1120
        %v1171 = vpop.permute.xlu0 %1170
        %1174 = vset.pattern.permute.xlu0 0
        %1175 = vperm.xlu0 %1174, %v1121
        %v1176 = vpop.permute.xlu0 %1175
        %1179 = vset.pattern.permute.xlu0 0
        %1180 = vperm.xlu0 %1179, %v1122
        %v1181 = vpop.permute.xlu0 %1180
        %1184 = vset.pattern.permute.xlu0 0
        %1185 = vperm.xlu0 %1184, %v1123
        %v1186 = vpop.permute.xlu0 %1185
        %1189 = vset.pattern.permute.xlu0 0
        %1190 = vperm.xlu0 %1189, %v1124
        %v1191 = vpop.permute.xlu0 %1190
        %1194 = vset.pattern.permute.xlu0 0
        %1195 = vperm.xlu0 %1194, %v1125
        %v1196 = vpop.permute.xlu0 %1195
        %1199 = vset.pattern.permute.xlu0 0
        %1200 = vperm.xlu0 %1199, %v1126
        %v1201 = vpop.permute.xlu0 %1200
        %1204 = vset.pattern.permute.xlu0 0
        %1205 = vperm.xlu0 %1204, %v1127
        %v1206 = vpop.permute.xlu0 %1205
        %v1208 = vmul.f32 %v1096, %v1131
        %v1209 = vmul.f32 %v1097, %v1136
        %v1210 = vmul.f32 %v1098, %v1141
        %v1211 = vmul.f32 %v1099, %v1146
        %v1212 = vmul.f32 %v1100, %v1151
        %v1213 = vmul.f32 %v1101, %v1156
        %v1214 = vmul.f32 %v1102, %v1161
        %v1215 = vmul.f32 %v1103, %v1166
        %v1216 = vmul.f32 %v1104, %v1171
        %v1217 = vmul.f32 %v1105, %v1176
        %v1218 = vmul.f32 %v1106, %v1181
        %v1219 = vmul.f32 %v1107, %v1186
        %v1220 = vmul.f32 %v1108, %v1191
        %v1221 = vmul.f32 %v1109, %v1196
        %v1222 = vmul.f32 %v1110, %v1201
        %v1223 = vmul.f32 %v1111, %v1206
        %1224 = vst [vmem:[%s441] sm:$0xff] %v1208
        %1225 = vst [vmem:[%s441 + $0x8] sm:$0xff] %v1209
        %1226 = vst [vmem:[%s441 + $0x10] sm:$0xff] %v1210
        %1227 = vst [vmem:[%s441 + $0x18] sm:$0xff] %v1211
        %1228 = vst [vmem:[%s441 + $0x20] sm:$0xff] %v1212
        %1229 = vst [vmem:[%s441 + $0x28] sm:$0xff] %v1213
        %1230 = vst [vmem:[%s441 + $0x30] sm:$0xff] %v1214
        %1231 = vst [vmem:[%s441 + $0x38] sm:$0xff] %v1215
        %1232 = vst [vmem:[%s441 + $0x40] sm:$0xff] %v1216
        %1233 = vst [vmem:[%s441 + $0x48] sm:$0xff] %v1217
        %1234 = vst [vmem:[%s441 + $0x50] sm:$0xff] %v1218
        %1235 = vst [vmem:[%s441 + $0x58] sm:$0xff] %v1219
        %1236 = vst [vmem:[%s441 + $0x60] sm:$0xff] %v1220
        %1237 = vst [vmem:[%s441 + $0x68] sm:$0xff] %v1221
        %1238 = vst [vmem:[%s441 + $0x70] sm:$0xff] %v1222
        %1239 = vst [vmem:[%s441 + $0x78] sm:$0xff] %v1223
      $region52: #{switch_feed_forward.3} parent=43 // pred_fallthru
        _
      %s1240 = smul.u32 16, %s28
      %p1241 = scmp.lt.s32.totalorder %s1240, 79
      %s1242 = scalar_select %p1241, %s1240, 79
      %s1243 = smul.addr %s1242, 8
      %s1244 = scalar_lea.vmem %s7, %s1243
      // Predicated region
      $region53: #{switch_feed_forward.3} parent=43 // pred_check
        %p1245 = pneg %p224
      $region54: #{switch_feed_forward.3} parent=43 // pred_check_branch
        %1247 = sbr.rel (%p1245) target = $region56
      $region55: #{switch_feed_forward.3} parent=43 // pred_region
        %s1248 = smul.u32 16, %s28
      $region56: #{switch_feed_forward.3} parent=43 // pred_fallthru
        _
    $region44: #{switch_feed_forward.3} parent=5 // pred_fallthru
      _
    %p1249 = scmp.le.s32.totalorder 2, %s19
    // Predicated region
    $region57: #{switch_feed_forward.3} parent=5 // pred_check
      %p1250 = pneg %p1249
    $region58: #{switch_feed_forward.3} parent=5 // pred_check_branch
      %1252 = sbr.rel (%p1250) target = $region60
    $region59: #{switch_feed_forward.3} parent=5 // pred_region
      %s1253 = ssub.s32 %s19, 2
      // Predicated region
      $region61: #{switch_feed_forward.3} parent=59 // pred_check
        %p1254 = pneg %p230
      $region62: #{switch_feed_forward.3} parent=59 // pred_check_branch
        %1256 = sbr.rel (%p1254) target = $region64
      $region63: #{switch_feed_forward.3} parent=59 // pred_region
        %s1257 = smul.u32 16, %s30
        %p1258 = scmp.lt.s32.totalorder %s1257, 79
        %s1259 = scalar_select %p1258, %s1257, 79
        %s1260 = smul.addr %s1259, 8
        %s1261 = scalar_lea.vmem %s7, %s1260
      $region64: #{switch_feed_forward.3} parent=59 // pred_fallthru
        _
    $region60: #{switch_feed_forward.3} parent=5 // pred_fallthru
      _
  $region6: #{switch_feed_forward.3} parent=0 // loop_footer
    %s23 = sadd.s32 1, %s19
  $region7: #{switch_feed_forward.3} parent=0 // loop_footer_branch
    %18 = sbr.rel target = $region3
  $region8: #{switch_feed_forward.3} parent=0 // loop_exit
    _

</llo_original>
